<compile_context>
chip_gen: v5e
topology: v5e:2x2
jax: 0.10.0
libtpu: 0.0.40
codegen_flags: <defaults>
</compile_context>

<pallas_src>
import functools

import jax
import jax.numpy as jnp
import numpy as np
from jax import lax
from jax.experimental import pallas as pl
from jax.experimental.pallas import tpu as pltpu


def _round_up(x, m):
    return ((x + m - 1) // m) * m


def _choose_tile(n_rows, target):
    """Largest multiple of 8 that divides n_rows and is <= target (None if impossible)."""
    if n_rows % 8 != 0:
        return None
    t = min(target, n_rows)
    t -= t % 8
    t = max(t, 8)
    while n_rows % t != 0:
        t -= 8
    return t


def _patch_expand_kernel(x_ref, w_ref, b_ref, bt_ref, s_ref, stg_ref, o_ref, *, eps):
    # ConvTranspose3d(k=2,s=2) for P packed voxels per row: bf16 MXU matmul, f32 acc.
    y = jnp.dot(x_ref[...], w_ref[...], preferred_element_type=jnp.float32)  # (tn, P*8*Cout)
    y = y + b_ref[...]                                                       # conv bias pre-stats
    tn = y.shape[0]

    # Segmented LayerNorm stats: one stacked matmul [y ; y*y] @ (S / Cout) -> [mean ; E[y^2]].
    stacked = jnp.concatenate([y, y * y], axis=0)                             # (2*tn, W)
    moments = jnp.dot(stacked, s_ref[...], preferred_element_type=jnp.float32)  # (2*tn, 8P)
    mean = moments[:tn]
    ex2 = moments[tn:]
    var = jnp.maximum(ex2 - mean * mean, 0.0)   # clamp: one-pass var can cancel negative
    inv_std = lax.rsqrt(var + eps)              # EUP

    # Broadcast-back, gamma folded into ST: one stacked matmul [inv_std ; mean*inv_std] @ STg.
    stacked2 = jnp.concatenate([inv_std, mean * inv_std], axis=0)             # (2*tn, 8P)
    bc = jnp.dot(stacked2, stg_ref[...], preferred_element_type=jnp.float32)  # (2*tn, W)
    scale = bc[:tn]
    shift = bc[tn:]

    # out = (y - mean) * inv_std * gamma + beta  (bf16 writeback — halves HBM write bytes)
    o_ref[...] = (y * scale - shift + bt_ref[...]).astype(o_ref.dtype)


def patch_expanding_block(x, w, b_conv, gamma, beta, *, eps=1e-5, tile_rows=1024,
                          compute_dtype=jnp.bfloat16, out_dtype=jnp.float32):
    """x: (B, Cin, D, H, W); w: (Cin, Cout, 2, 2, 2); returns (B, Cout, 2D, 2H, 2W)."""
    B, Cin, D, H, W = x.shape
    Cout = w.shape[1]
    C8 = 8 * Cout
    N = B * D * H * W

    # Voxel-packing factor so the output slab is lane-dense (last dim >= 128 lanes).
    P = 1
    while P * C8 < 128:
        P *= 2
    while P > 1 and N % P != 0:
        P //= 2
    Win, Wout, nseg = P * Cin, P * C8, 8 * P
    N2 = N // P

    # ---- wrapper-side layout plumbing (module contract is NCDHW); bf16 cast fused in ----
    x_rows = jnp.transpose(x, (0, 2, 3, 4, 1)).reshape(N2, Win).astype(compute_dtype)
    # (Cin, Cout, kd, kh, kw) -> (Cin, kd, kh, kw, Cout) -> (Cin, 8*Cout); block-diag for P voxels
    w_packed = jnp.transpose(w, (0, 2, 3, 4, 1)).reshape(Cin, C8).astype(jnp.float32)
    w2 = jnp.kron(jnp.eye(P, dtype=jnp.float32), w_packed).astype(compute_dtype)  # (Win, Wout)

    # per-lane parameter rows (value at lane j = (seg*Cout + co) is param[co])
    b_row = jnp.tile(b_conv.astype(jnp.float32).reshape(1, Cout), (1, nseg))
    bt_row = jnp.tile(beta.astype(jnp.float32).reshape(1, Cout), (1, nseg))
    g_row = jnp.tile(gamma.astype(jnp.float32).reshape(1, Cout), (1, nseg))

    # segment-indicator matrices; fold 1/Cout into S and gamma into S^T
    seg_ids = jnp.arange(Wout, dtype=jnp.int32) // Cout
    S = (seg_ids[:, None] == jnp.arange(nseg, dtype=jnp.int32)[None, :]).astype(jnp.float32)
    S_scaled = S * (1.0 / float(Cout))            # (Wout, nseg)
    STg = jnp.transpose(S) * g_row                # (nseg, Wout)

    # ---- tile sizing: large 8-aligned divisor of N2 (no pad/slice passes when possible) ----
    tile = _choose_tile(N2, tile_rows)
    if tile is None:  # ragged fallback (rare): pad rows, slice after
        tile = min(_round_up(max(tile_rows, 8), 8), _round_up(N2, 8))
        n_pad = _round_up(N2, tile)
        x_rows = jnp.pad(x_rows, ((0, n_pad - N2), (0, 0)))
    else:
        n_pad = N2
    grid = (n_pad // tile,)

    # ---- VMEM budget: generation-aware cap (~48 MiB on v7x, ~96 MiB on v5e/v6e) ----
    try:
        info = pltpu.get_tpu_info()
        vmem_cap = int(getattr(info, "vmem_capacity_bytes", 64 << 20) or (64 << 20))
    except Exception:  # pragma: no cover - defensive
        vmem_cap = 64 << 20
    cap = (3 * vmem_cap) // 4
    bpe = jnp.dtype(compute_dtype).itemsize
    vmem_est = (2 * tile * Win * bpe            # double-buffered bf16 input tiles
                + 2 * tile * Wout * bpe         # double-buffered bf16 output tiles
                + 2 * Win * Wout * bpe          # resident weight
                + 2 * (2 * Wout + 2 * Wout * nseg) * 4   # param rows + S/STg
                + 6 * tile * Wout * 4)          # in-kernel f32 intermediates
    vmem_limit = int(min(max(vmem_est + (16 << 20), 32 << 20), cap))

    kernel = functools.partial(_patch_expand_kernel, eps=eps)
    y = pl.pallas_call(
        kernel,
        out_shape=jax.ShapeDtypeStruct((n_pad, Wout), compute_dtype),  # bf16 writeback
        grid_spec=pltpu.PrefetchScalarGridSpec(
            num_scalar_prefetch=0,
            grid=grid,
            in_specs=[
                pl.BlockSpec((tile, Win), lambda i: (i, 0)),
                pl.BlockSpec((Win, Wout), lambda i: (0, 0)),
                pl.BlockSpec((1, Wout), lambda i: (0, 0)),
                pl.BlockSpec((1, Wout), lambda i: (0, 0)),
                pl.BlockSpec((Wout, nseg), lambda i: (0, 0)),
                pl.BlockSpec((nseg, Wout), lambda i: (0, 0)),
            ],
            out_specs=pl.BlockSpec((tile, Wout), lambda i: (i, 0)),
        ),
        compiler_params=pltpu.CompilerParams(
            dimension_semantics=("parallel",),
            vmem_limit_bytes=vmem_limit,
        ),
    )(x_rows, w2, b_row, bt_row, S_scaled, STg)

    # scatter back to NCDHW: (N2, P*8*Cout) == (N, 8*Cout) -> (B,Cout,2D,2H,2W).
    # Transpose runs on the bf16 slab; the f32 upcast is fused into the same pass.
    if n_pad != N2:
        y = y[:N2]
    y = y.reshape(B, D, H, W, 2, 2, 2, Cout)
    y = jnp.transpose(y, (0, 7, 1, 4, 2, 5, 3, 6)).astype(out_dtype)  # b,co,d,kd,h,kh,w,kw
    y = y.reshape(B, Cout, 2 * D, 2 * H, 2 * W)
    return y


def _reference_numpy(x, w, b_conv, gamma, beta, eps=1e-5):
    """Independent NumPy reference for ConvTranspose3d(k=2,s=2) + channel LayerNorm."""
    x = np.asarray(x, np.float32)
    w = np.asarray(w, np.float32)
    B, Cin, D, H, W = x.shape
    Cout = w.shape[1]
    out = np.zeros((B, Cout, 2 * D, 2 * H, 2 * W), np.float32)
    for kd in range(2):
        for kh in range(2):
            for kw in range(2):
                contrib = np.einsum("bcdhw,co->bodhw", x, w[:, :, kd, kh, kw])
                out[:, :, kd::2, kh::2, kw::2] = contrib
    out = out + np.asarray(b_conv, np.float32).reshape(1, Cout, 1, 1, 1)
    xc = np.transpose(out, (0, 2, 3, 4, 1))  # b d h w c
    mean = xc.mean(-1, keepdims=True)
    var = xc.var(-1, keepdims=True)
    xc = (xc - mean) / np.sqrt(var + eps)
    xc = xc * np.asarray(gamma, np.float32) + np.asarray(beta, np.float32)
    return np.transpose(xc, (0, 4, 1, 2, 3))


if __name__ == "__main__":
    embed_dim = 16
    Cin, Cout = embed_dim, embed_dim // 2
    B, D, H, W = 2, 16, 16, 16   # N = 8192 voxels -> packed rows 4096 -> 4 even grid steps

    key = jax.random.PRNGKey(0)
    kx, kw, kb, kg, kbt = jax.random.split(key, 5)
    x = jax.random.normal(kx, (B, Cin, D, H, W), dtype=jnp.float32)
    # deterministic synthetic parameters (shapes per nn.ConvTranspose3d / nn.LayerNorm)
    w = 0.1 * jax.random.normal(kw, (Cin, Cout, 2, 2, 2), dtype=jnp.float32)
    b_conv = 0.1 * jax.random.normal(kb, (Cout,), dtype=jnp.float32)
    gamma = 1.0 + 0.1 * jax.random.normal(kg, (Cout,), dtype=jnp.float32)
    beta = 0.1 * jax.random.normal(kbt, (Cout,), dtype=jnp.float32)

    out = patch_expanding_block(x, w, b_conv, gamma, beta)
    out = jax.block_until_ready(out)

    # Reference on bf16-rounded operands (kernel uses bf16 operands + f32 accumulation,
    # bf16 writeback); tolerance covers the bf16 output rounding.
    x_r = np.asarray(x.astype(jnp.bfloat16).astype(jnp.float32))
    w_r = np.asarray(w.astype(jnp.bfloat16).astype(jnp.float32))
    ref = _reference_numpy(x_r, w_r, b_conv, gamma, beta)
    np.testing.assert_allclose(np.asarray(out), ref, rtol=2e-2, atol=2e-2)

    print("KERNEL_OK")
</pallas_src>

<mosaic_0001>
module attributes {stable_mosaic.version = 11 : i64} {
  func.func @_patch_expand_kernel(%arg0: i32, %arg1: memref<1024x32xbf16, #tpu.memory_space<vmem>>, %arg2: memref<32x128xbf16, #tpu.memory_space<vmem>>, %arg3: memref<1x128xf32, #tpu.memory_space<vmem>>, %arg4: memref<1x128xf32, #tpu.memory_space<vmem>>, %arg5: memref<128x16xf32, #tpu.memory_space<vmem>>, %arg6: memref<16x128xf32, #tpu.memory_space<vmem>>, %arg7: memref<1024x128xbf16, #tpu.memory_space<vmem>>) attributes {dimension_semantics = [#tpu.dimension_semantics<parallel>], iteration_bounds = array<i64: 4>, scalar_prefetch = 0 : i64, scratch_operands = 0 : i64, tpu.core_type = #tpu.core_type<tc>, window_params = [{transform_indices = @transform_0, window_bounds = array<i64: 1024, 32>}, {pipeline_mode = #tpu.pipeline_mode<synchronous>, transform_indices = @transform_1, window_bounds = array<i64: 32, 128>}, {pipeline_mode = #tpu.pipeline_mode<synchronous>, transform_indices = @transform_2, window_bounds = array<i64: 1, 128>}, {pipeline_mode = #tpu.pipeline_mode<synchronous>, transform_indices = @transform_3, window_bounds = array<i64: 1, 128>}, {pipeline_mode = #tpu.pipeline_mode<synchronous>, transform_indices = @transform_4, window_bounds = array<i64: 128, 16>}, {pipeline_mode = #tpu.pipeline_mode<synchronous>, transform_indices = @transform_5, window_bounds = array<i64: 16, 128>}, {transform_indices = @transform_6, window_bounds = array<i64: 1024, 128>}]} {
    %c0 = arith.constant 0 : index
    %c0_0 = arith.constant 0 : index
    %0 = vector.load %arg1[%c0, %c0_0] : memref<1024x32xbf16, #tpu.memory_space<vmem>>, vector<1024x32xbf16>
    %c0_1 = arith.constant 0 : index
    %c0_2 = arith.constant 0 : index
    %1 = vector.load %arg2[%c0_1, %c0_2] : memref<32x128xbf16, #tpu.memory_space<vmem>>, vector<32x128xbf16>
    %cst = arith.constant dense<0.000000e+00> : vector<1024x128xf32>
    %2 = tpu.matmul %0, %1, %cst {dimension_numbers = #tpu.dot_dimension_numbers<[1], [0], [0], [1], [0, 0, 1, 1], [], []>} : vector<1024x32xbf16>, vector<32x128xbf16>, vector<1024x128xf32> -> vector<1024x128xf32>
    %c0_3 = arith.constant 0 : index
    %c0_4 = arith.constant 0 : index
    %3 = vector.load %arg3[%c0_3, %c0_4] : memref<1x128xf32, #tpu.memory_space<vmem>>, vector<1x128xf32>
    %4 = vector.broadcast %3 : vector<1x128xf32> to vector<1024x128xf32>
    %5 = arith.addf %2, %4 : vector<1024x128xf32>
    %6 = arith.mulf %5, %5 : vector<1024x128xf32>
    %7 = tpu.concatenate %5, %6 in 0 : vector<1024x128xf32>, vector<1024x128xf32> -> vector<2048x128xf32>
    %c0_5 = arith.constant 0 : index
    %c0_6 = arith.constant 0 : index
    %8 = vector.load %arg5[%c0_5, %c0_6] : memref<128x16xf32, #tpu.memory_space<vmem>>, vector<128x16xf32>
    %cst_7 = arith.constant dense<0.000000e+00> : vector<2048x16xf32>
    %9 = tpu.matmul %7, %8, %cst_7 {dimension_numbers = #tpu.dot_dimension_numbers<[1], [0], [0], [1], [0, 0, 1, 1], [], []>} : vector<2048x128xf32>, vector<128x16xf32>, vector<2048x16xf32> -> vector<2048x16xf32>
    %10 = vector.extract_strided_slice %9 {offsets = [0, 0], sizes = [1024, 16], strides = [1, 1]} : vector<2048x16xf32> to vector<1024x16xf32>
    %11 = vector.extract_strided_slice %9 {offsets = [1024, 0], sizes = [1024, 16], strides = [1, 1]} : vector<2048x16xf32> to vector<1024x16xf32>
    %12 = arith.mulf %10, %10 : vector<1024x16xf32>
    %13 = arith.subf %11, %12 : vector<1024x16xf32>
    %cst_8 = arith.constant 0.000000e+00 : f32
    %14 = vector.broadcast %cst_8 : f32 to vector<1024x16xf32>
    %15 = arith.maximumf %13, %14 : vector<1024x16xf32>
    %cst_9 = arith.constant 9.99999974E-6 : f32
    %16 = vector.broadcast %cst_9 : f32 to vector<1024x16xf32>
    %17 = arith.addf %15, %16 : vector<1024x16xf32>
    %18 = math.rsqrt %17 : vector<1024x16xf32>
    %19 = arith.mulf %10, %18 : vector<1024x16xf32>
    %20 = tpu.concatenate %18, %19 in 0 : vector<1024x16xf32>, vector<1024x16xf32> -> vector<2048x16xf32>
    %c0_10 = arith.constant 0 : index
    %c0_11 = arith.constant 0 : index
    %21 = vector.load %arg6[%c0_10, %c0_11] : memref<16x128xf32, #tpu.memory_space<vmem>>, vector<16x128xf32>
    %cst_12 = arith.constant dense<0.000000e+00> : vector<2048x128xf32>
    %22 = tpu.matmul %20, %21, %cst_12 {dimension_numbers = #tpu.dot_dimension_numbers<[1], [0], [0], [1], [0, 0, 1, 1], [], []>} : vector<2048x16xf32>, vector<16x128xf32>, vector<2048x128xf32> -> vector<2048x128xf32>
    %23 = vector.extract_strided_slice %22 {offsets = [0, 0], sizes = [1024, 128], strides = [1, 1]} : vector<2048x128xf32> to vector<1024x128xf32>
    %24 = vector.extract_strided_slice %22 {offsets = [1024, 0], sizes = [1024, 128], strides = [1, 1]} : vector<2048x128xf32> to vector<1024x128xf32>
    %25 = arith.mulf %5, %23 : vector<1024x128xf32>
    %26 = arith.subf %25, %24 : vector<1024x128xf32>
    %c0_13 = arith.constant 0 : index
    %c0_14 = arith.constant 0 : index
    %27 = vector.load %arg4[%c0_13, %c0_14] : memref<1x128xf32, #tpu.memory_space<vmem>>, vector<1x128xf32>
    %28 = vector.broadcast %27 : vector<1x128xf32> to vector<1024x128xf32>
    %29 = arith.addf %26, %28 : vector<1024x128xf32>
    %30 = arith.truncf %29 : vector<1024x128xf32> to vector<1024x128xbf16>
    %c0_15 = arith.constant 0 : index
    %c0_16 = arith.constant 0 : index
    %31 = vector.load %arg7[%c0_15, %c0_16] : memref<1024x128xbf16, #tpu.memory_space<vmem>>, vector<1024x128xbf16>
    tpu.vector_store %arg7[%c0_15, %c0_16], %30 {strides = array<i32>} : memref<1024x128xbf16, #tpu.memory_space<vmem>>, vector<1024x128xbf16>,
    return
  }
  func.func @transform_0(%arg0: i32) -> (i32, i32) {
    %c0_i32 = arith.constant 0 : i32
    %c0_i32_0 = arith.constant 0 : i32
    return %arg0, %c0_i32 : i32, i32
  }
  func.func @transform_1(%arg0: i32) -> (i32, i32) {
    %c0_i32 = arith.constant 0 : i32
    %c0_i32_0 = arith.constant 0 : i32
    %c0_i32_1 = arith.constant 0 : i32
    return %c0_i32, %c0_i32_0 : i32, i32
  }
  func.func @transform_2(%arg0: i32) -> (i32, i32) {
    %c0_i32 = arith.constant 0 : i32
    %c0_i32_0 = arith.constant 0 : i32
    %c0_i32_1 = arith.constant 0 : i32
    return %c0_i32, %c0_i32_0 : i32, i32
  }
  func.func @transform_3(%arg0: i32) -> (i32, i32) {
    %c0_i32 = arith.constant 0 : i32
    %c0_i32_0 = arith.constant 0 : i32
    %c0_i32_1 = arith.constant 0 : i32
    return %c0_i32, %c0_i32_0 : i32, i32
  }
  func.func @transform_4(%arg0: i32) -> (i32, i32) {
    %c0_i32 = arith.constant 0 : i32
    %c0_i32_0 = arith.constant 0 : i32
    %c0_i32_1 = arith.constant 0 : i32
    return %c0_i32, %c0_i32_0 : i32, i32
  }
  func.func @transform_5(%arg0: i32) -> (i32, i32) {
    %c0_i32 = arith.constant 0 : i32
    %c0_i32_0 = arith.constant 0 : i32
    %c0_i32_1 = arith.constant 0 : i32
    return %c0_i32, %c0_i32_0 : i32, i32
  }
  func.func @transform_6(%arg0: i32) -> (i32, i32) {
    %c0_i32 = arith.constant 0 : i32
    %c0_i32_0 = arith.constant 0 : i32
    return %arg0, %c0_i32 : i32, i32
  }
}

</mosaic_0001>

<llo_original>
// kernel: tpu_custom_call.1
$region0: #{tpu_custom_call.1}
  #allocation0 [shape = 'u32[]', space=smem, size = 0x4, offset = 0x4, fixed_abs, tag = 'smem constant byte address 0x4 - core index']
  #allocation1 [shape = 'u32[72,128]{1,0:T(1,128)}', space=vmem, size = 0x9000, scoped, tag = 'internal scratch']
  %s0 = inlined_call_operand.vmem [shape: bf16[4096,32], index: 0, kind: input, shape index: {}]
  %s1 = inlined_call_operand.vmem [shape: bf16[32,128], index: 1, kind: input, shape index: {}]
  %s2 = inlined_call_operand.vmem [shape: f32[1,128], index: 2, kind: input, shape index: {}]
  %s3 = inlined_call_operand.vmem [shape: f32[1,128], index: 3, kind: input, shape index: {}]
  %s4 = inlined_call_operand.vmem [shape: f32[128,16], index: 4, kind: input, shape index: {}]
  %s5 = inlined_call_operand.vmem [shape: f32[16,128], index: 5, kind: input, shape index: {}]
  %s6 = inlined_call_operand.hbm [shape: bf16[4096,128], index: 6, kind: output, shape index: {}]
  %s7 = sld [smem:[#allocation0]]
  $region57: #{tpu_custom_call.1} parent=0
    _
  %s9 = ssub.s32 1, %s7
  %s10 = scalar_select 0, %s9, %s7
  $region1: #{tpu_custom_call.1} parent=0
    #allocation2 [shape = 'u8[524288]{0}', space=vmem, size = 0x80000, scoped, tag = 'output window, operand 0']
    #allocation3 [shape = 's32[2]{0}', space=sflag, size = 0x8, scoped, tag = 'scoped memory for tpu_custom_call.1']
    %11 = vsyncpa [#allocation3], 0
    %s12 = scalar_lea.sflag [#allocation3], 1
    %13 = vsyncpa %s12, 0
    loop: start=0, step=1, limit=6
    $region2: #{tpu_custom_call.1} parent=1 // loop_pre_header
      _
    $region3: #{tpu_custom_call.1} parent=1 // loop_header
      %s15 = sphi 0, %s19
      %p16 = scmp.ge.s32.totalorder %s15, 6
      %s25 = sphi 0, %s27
      %s28 = sphi 0, %s25
      %s29 = sphi 0, %s28
      %s45 = sphi 0, %s29
      %s49 = sphi 0, %s49
      %s51 = sphi 0, %s49
      %s52 = sphi 0, %s51
      %s66 = sphi 0, %s52
      %s70 = sphi 0, %s70
      %s72 = sphi 0, %s70
      %s73 = sphi 0, %s72
      %s87 = sphi 0, %s73
      %s91 = sphi 0, %s91
      %s93 = sphi 0, %s91
      %s94 = sphi 0, %s93
      %s108 = sphi 0, %s94
      %s112 = sphi 0, %s112
      %s114 = sphi 0, %s112
      %s115 = sphi 0, %s114
      %s129 = sphi 0, %s115
      %s133 = sphi 0, %s133
      %s135 = sphi 0, %s133
      %s136 = sphi 0, %s135
      %s150 = sphi 0, %s136
      %s156 = sphi 0, %s158
      %s159 = sphi 0, %s156
      %s160 = sphi 0, %s159
      %s176 = sphi 0, %s160
    $region4: #{tpu_custom_call.1} parent=1 // loop_header_branch
      %18 = sbr.rel (%p16) target = $region8
    $region5: #{tpu_custom_call.1} parent=1 // loop_body
      %s20 = ssub.s32 %s15, 1
      %s21 = ssub.s32 %s15, 2
      %s22 = sadd.s32 %s15, 1
      %s23 = ssub.s32 %s15, %s22
      %p24 = scmp.eq.s32.totalorder %s23, 0
      %s26 = sadd.s32 %s25, 1
      %s27 = scalar_select %p24, %s25, %s26
      %p30 = pneg %p24
      %p31 = scmp.eq.s32.totalorder %s15, 3
      %p32 = por %p30, %p31
      %p33 = scmp.ne.s32.totalorder %s25, %s28
      %p34 = scmp.eq.s32.totalorder %s15, 0
      %p35 = por %p33, %p34
      %p36 = scmp.ne.s32.totalorder %s25, %s28
      %p37 = scmp.eq.s32.totalorder %s20, 3
      %p38 = por %p36, %p37
      %p39 = scmp.ne.s32.totalorder %s28, %s29
      %p40 = scmp.eq.s32.totalorder %s20, 0
      %p41 = por %p39, %p40
      %p42 = scmp.ne.s32.totalorder %s28, %s29
      %p43 = scmp.eq.s32.totalorder %s21, 3
      %p44 = por %p42, %p43
      %p46 = scmp.ne.s32.totalorder %s29, %s45
      %p47 = scmp.eq.s32.totalorder %s21, 0
      %p48 = por %p46, %p47
      %s50 = sadd.s32 %s49, 1
      %p53 = scmp.eq.s32.totalorder %s15, 3
      %p54 = scmp.ne.s32.totalorder %s49, %s51
      %p55 = scmp.eq.s32.totalorder %s15, 0
      %p56 = por %p54, %p55
      %p57 = scmp.ne.s32.totalorder %s49, %s51
      %p58 = scmp.eq.s32.totalorder %s20, 3
      %p59 = por %p57, %p58
      %p60 = scmp.ne.s32.totalorder %s51, %s52
      %p61 = scmp.eq.s32.totalorder %s20, 0
      %p62 = por %p60, %p61
      %p63 = scmp.ne.s32.totalorder %s51, %s52
      %p64 = scmp.eq.s32.totalorder %s21, 3
      %p65 = por %p63, %p64
      %p67 = scmp.ne.s32.totalorder %s52, %s66
      %p68 = scmp.eq.s32.totalorder %s21, 0
      %p69 = por %p67, %p68
      %s71 = sadd.s32 %s70, 1
      %p74 = scmp.eq.s32.totalorder %s15, 3
      %p75 = scmp.ne.s32.totalorder %s70, %s72
      %p76 = scmp.eq.s32.totalorder %s15, 0
      %p77 = por %p75, %p76
      %p78 = scmp.ne.s32.totalorder %s70, %s72
      %p79 = scmp.eq.s32.totalorder %s20, 3
      %p80 = por %p78, %p79
      %p81 = scmp.ne.s32.totalorder %s72, %s73
      %p82 = scmp.eq.s32.totalorder %s20, 0
      %p83 = por %p81, %p82
      %p84 = scmp.ne.s32.totalorder %s72, %s73
      %p85 = scmp.eq.s32.totalorder %s21, 3
      %p86 = por %p84, %p85
      %p88 = scmp.ne.s32.totalorder %s73, %s87
      %p89 = scmp.eq.s32.totalorder %s21, 0
      %p90 = por %p88, %p89
      %s92 = sadd.s32 %s91, 1
      %p95 = scmp.eq.s32.totalorder %s15, 3
      %p96 = scmp.ne.s32.totalorder %s91, %s93
      %p97 = scmp.eq.s32.totalorder %s15, 0
      %p98 = por %p96, %p97
      %p99 = scmp.ne.s32.totalorder %s91, %s93
      %p100 = scmp.eq.s32.totalorder %s20, 3
      %p101 = por %p99, %p100
      %p102 = scmp.ne.s32.totalorder %s93, %s94
      %p103 = scmp.eq.s32.totalorder %s20, 0
      %p104 = por %p102, %p103
      %p105 = scmp.ne.s32.totalorder %s93, %s94
      %p106 = scmp.eq.s32.totalorder %s21, 3
      %p107 = por %p105, %p106
      %p109 = scmp.ne.s32.totalorder %s94, %s108
      %p110 = scmp.eq.s32.totalorder %s21, 0
      %p111 = por %p109, %p110
      %s113 = sadd.s32 %s112, 1
      %p116 = scmp.eq.s32.totalorder %s15, 3
      %p117 = scmp.ne.s32.totalorder %s112, %s114
      %p118 = scmp.eq.s32.totalorder %s15, 0
      %p119 = por %p117, %p118
      %p120 = scmp.ne.s32.totalorder %s112, %s114
      %p121 = scmp.eq.s32.totalorder %s20, 3
      %p122 = por %p120, %p121
      %p123 = scmp.ne.s32.totalorder %s114, %s115
      %p124 = scmp.eq.s32.totalorder %s20, 0
      %p125 = por %p123, %p124
      %p126 = scmp.ne.s32.totalorder %s114, %s115
      %p127 = scmp.eq.s32.totalorder %s21, 3
      %p128 = por %p126, %p127
      %p130 = scmp.ne.s32.totalorder %s115, %s129
      %p131 = scmp.eq.s32.totalorder %s21, 0
      %p132 = por %p130, %p131
      %s134 = sadd.s32 %s133, 1
      %p137 = scmp.eq.s32.totalorder %s15, 3
      %p138 = scmp.ne.s32.totalorder %s133, %s135
      %p139 = scmp.eq.s32.totalorder %s15, 0
      %p140 = por %p138, %p139
      %p141 = scmp.ne.s32.totalorder %s133, %s135
      %p142 = scmp.eq.s32.totalorder %s20, 3
      %p143 = por %p141, %p142
      %p144 = scmp.ne.s32.totalorder %s135, %s136
      %p145 = scmp.eq.s32.totalorder %s20, 0
      %p146 = por %p144, %p145
      %p147 = scmp.ne.s32.totalorder %s135, %s136
      %p148 = scmp.eq.s32.totalorder %s21, 3
      %p149 = por %p147, %p148
      %p151 = scmp.ne.s32.totalorder %s136, %s150
      %p152 = scmp.eq.s32.totalorder %s21, 0
      %p153 = por %p151, %p152
      %s154 = ssub.s32 %s15, %s22
      %p155 = scmp.eq.s32.totalorder %s154, 0
      %s157 = sadd.s32 %s156, 1
      %s158 = scalar_select %p155, %s156, %s157
      %p161 = pneg %p155
      %p162 = scmp.eq.s32.totalorder %s15, 3
      %p163 = por %p161, %p162
      %p164 = scmp.ne.s32.totalorder %s156, %s159
      %p165 = scmp.eq.s32.totalorder %s15, 0
      %p166 = por %p164, %p165
      %p167 = scmp.ne.s32.totalorder %s156, %s159
      %p168 = scmp.eq.s32.totalorder %s20, 3
      %p169 = por %p167, %p168
      %p170 = scmp.ne.s32.totalorder %s159, %s160
      %p171 = scmp.eq.s32.totalorder %s20, 0
      %p172 = por %p170, %p171
      %p173 = scmp.ne.s32.totalorder %s159, %s160
      %p174 = scmp.eq.s32.totalorder %s21, 3
      %p175 = por %p173, %p174
      %p177 = scmp.ne.s32.totalorder %s160, %s176
      %p178 = scmp.eq.s32.totalorder %s21, 0
      %p179 = por %p177, %p178
      %p180 = scmp.le.s32.totalorder 1, %s15
      %p181 = scmp.lt.s32.totalorder %s15, 5
      %p182 = pnand %p180, %p181
      %p183 = pneg %p182
      // Predicated region
      $region9: #{tpu_custom_call.1} parent=5 // pred_check
        _
      $region10: #{tpu_custom_call.1} parent=5 // pred_check_branch
        %185 = sbr.rel (%p182) target = $region12
      $region11: #{tpu_custom_call.1} parent=5 // pred_region
        %s186 = ssub.s32 %s15, 1
        // Predicated region
        $region13: #{tpu_custom_call.1} parent=11 // pred_check
          %p187 = pneg %p62
        $region14: #{tpu_custom_call.1} parent=11 // pred_check_branch
          %189 = sbr.rel (%p187) target = $region16
        $region15: #{tpu_custom_call.1} parent=11 // pred_region
          _
        $region16: #{tpu_custom_call.1} parent=11 // pred_fallthru
          _
        // Predicated region
        $region17: #{tpu_custom_call.1} parent=11 // pred_check
          %p190 = pneg %p83
        $region18: #{tpu_custom_call.1} parent=11 // pred_check_branch
          %192 = sbr.rel (%p190) target = $region20
        $region19: #{tpu_custom_call.1} parent=11 // pred_region
          _
        $region20: #{tpu_custom_call.1} parent=11 // pred_fallthru
          _
        // Predicated region
        $region21: #{tpu_custom_call.1} parent=11 // pred_check
          %p193 = pneg %p104
        $region22: #{tpu_custom_call.1} parent=11 // pred_check_branch
          %195 = sbr.rel (%p193) target = $region24
        $region23: #{tpu_custom_call.1} parent=11 // pred_region
          _
        $region24: #{tpu_custom_call.1} parent=11 // pred_fallthru
          _
        // Predicated region
        $region25: #{tpu_custom_call.1} parent=11 // pred_check
          %p196 = pneg %p125
        $region26: #{tpu_custom_call.1} parent=11 // pred_check_branch
          %198 = sbr.rel (%p196) target = $region28
        $region27: #{tpu_custom_call.1} parent=11 // pred_region
          _
        $region28: #{tpu_custom_call.1} parent=11 // pred_fallthru
          _
        // Predicated region
        $region29: #{tpu_custom_call.1} parent=11 // pred_check
          %p199 = pneg %p146
        $region30: #{tpu_custom_call.1} parent=11 // pred_check_branch
          %201 = sbr.rel (%p199) target = $region32
        $region31: #{tpu_custom_call.1} parent=11 // pred_region
          _
        $region32: #{tpu_custom_call.1} parent=11 // pred_fallthru
          _
      $region12: #{tpu_custom_call.1} parent=5 // pred_fallthru
        _
      %p202 = scmp.lt.s32.totalorder %s15, 4
      // Predicated region
      $region33: #{tpu_custom_call.1} parent=5 // pred_check
        %p203 = pneg %p202
      $region34: #{tpu_custom_call.1} parent=5 // pred_check_branch
        %205 = sbr.rel (%p203) target = $region36
      $region35: #{tpu_custom_call.1} parent=5 // pred_region
        // Predicated region
        $region37: #{tpu_custom_call.1} parent=35 // pred_check
          %p206 = pneg %p35
        $region38: #{tpu_custom_call.1} parent=35 // pred_check_branch
          %208 = sbr.rel (%p206) target = $region40
        $region39: #{tpu_custom_call.1} parent=35 // pred_region
          %s209 = smul.u32 128, %s15
          %p210 = scmp.lt.s32.totalorder %s209, 511
          %s211 = scalar_select %p210, %s209, 511
          %s212 = smul.addr %s211, 4
          %s213 = scalar_lea.vmem %s0, %s212
          %s214 = smul.u32 128, %s15
        $region40: #{tpu_custom_call.1} parent=35 // pred_fallthru
          _
      $region36: #{tpu_custom_call.1} parent=5 // pred_fallthru
        _
      %p215 = scmp.le.s32.totalorder 1, %s15
      %p216 = scmp.lt.s32.totalorder %s15, 5
      %p217 = pnand %p215, %p216
      %p218 = pneg %p217
      // Predicated region
      $region41: #{tpu_custom_call.1} parent=5 // pred_check
        _
      $region42: #{tpu_custom_call.1} parent=5 // pred_check_branch
        %220 = sbr.rel (%p217) target = $region44
      $region43: #{tpu_custom_call.1} parent=5 // pred_region
        %s221 = ssub.s32 %s15, 1
        %s222 = smul.u32 128, %s20
        %p223 = scmp.lt.s32.totalorder %s222, 511
        %s224 = scalar_select %p223, %s222, 511
        %s225 = smul.addr %s224, 4
        %s226 = scalar_lea.vmem %s0, %s225
        %p227 = pneg %p41
        %p228 = pneg %p38
        %p229 = pneg %p62
        %p230 = pneg %p59
        %p231 = pneg %p83
        %p232 = pneg %p80
        %p233 = pneg %p104
        %p234 = pneg %p101
        %p235 = pneg %p125
        %p236 = pneg %p122
        %p237 = pneg %p146
        %p238 = pneg %p143
        %p239 = pneg %p172
        %p240 = pneg %p169
        %s241 = sand.u32 %s159, 1
        %s242 = scalar_lea.sflag [#allocation3], %s241
        %s243 = sand.u32 %s159, 1
        %s244 = smul.addr %s243, 512
        %s245 = scalar_lea.vmem [#allocation2], %s244
        %s246 = smul.u32 128, %s20
        %p247 = scmp.lt.s32.totalorder %s246, 511
        %s248 = scalar_select %p247, %s246, 511
        %s249 = smul.addr %s248, 4
        %s250 = scalar_lea.vmem %s0, %s249
        %s251 = smul.u32 128, %s20
        %s252 = smul.u32 128, %s20
        %v254 = vld [vmem:[%s250] sm:$0xf]
        %v255 = vld [vmem:[%s250 + $0x4] sm:$0xf]
        %v256 = vld [vmem:[%s250 + $0x8] sm:$0xf]
        %v257 = vld [vmem:[%s250 + $0xc] sm:$0xf]
        %v258 = vld [vmem:[%s250 + $0x10] sm:$0xf]
        %v259 = vld [vmem:[%s250 + $0x14] sm:$0xf]
        %v260 = vld [vmem:[%s250 + $0x18] sm:$0xf]
        %v261 = vld [vmem:[%s250 + $0x1c] sm:$0xf]
        %v262 = vld [vmem:[%s250 + $0x20] sm:$0xf]
        %v263 = vld [vmem:[%s250 + $0x24] sm:$0xf]
        %v264 = vld [vmem:[%s250 + $0x28] sm:$0xf]
        %v265 = vld [vmem:[%s250 + $0x2c] sm:$0xf]
        %v266 = vld [vmem:[%s250 + $0x30] sm:$0xf]
        %v267 = vld [vmem:[%s250 + $0x34] sm:$0xf]
        %v268 = vld [vmem:[%s250 + $0x38] sm:$0xf]
        %v269 = vld [vmem:[%s250 + $0x3c] sm:$0xf]
        %v270 = vld [vmem:[%s250 + $0x40] sm:$0xf]
        %v271 = vld [vmem:[%s250 + $0x44] sm:$0xf]
        %v272 = vld [vmem:[%s250 + $0x48] sm:$0xf]
        %v273 = vld [vmem:[%s250 + $0x4c] sm:$0xf]
        %v274 = vld [vmem:[%s250 + $0x50] sm:$0xf]
        %v275 = vld [vmem:[%s250 + $0x54] sm:$0xf]
        %v276 = vld [vmem:[%s250 + $0x58] sm:$0xf]
        %v277 = vld [vmem:[%s250 + $0x5c] sm:$0xf]
        %v278 = vld [vmem:[%s250 + $0x60] sm:$0xf]
        %v279 = vld [vmem:[%s250 + $0x64] sm:$0xf]
        %v280 = vld [vmem:[%s250 + $0x68] sm:$0xf]
        %v281 = vld [vmem:[%s250 + $0x6c] sm:$0xf]
        %v282 = vld [vmem:[%s250 + $0x70] sm:$0xf]
        %v283 = vld [vmem:[%s250 + $0x74] sm:$0xf]
        %v284 = vld [vmem:[%s250 + $0x78] sm:$0xf]
        %v285 = vld [vmem:[%s250 + $0x7c] sm:$0xf]
        %v286 = vld [vmem:[%s250 + $0x80] sm:$0xf]
        %v287 = vld [vmem:[%s250 + $0x84] sm:$0xf]
        %v288 = vld [vmem:[%s250 + $0x88] sm:$0xf]
        %v289 = vld [vmem:[%s250 + $0x8c] sm:$0xf]
        %v290 = vld [vmem:[%s250 + $0x90] sm:$0xf]
        %v291 = vld [vmem:[%s250 + $0x94] sm:$0xf]
        %v292 = vld [vmem:[%s250 + $0x98] sm:$0xf]
        %v293 = vld [vmem:[%s250 + $0x9c] sm:$0xf]
        %v294 = vld [vmem:[%s250 + $0xa0] sm:$0xf]
        %v295 = vld [vmem:[%s250 + $0xa4] sm:$0xf]
        %v296 = vld [vmem:[%s250 + $0xa8] sm:$0xf]
        %v297 = vld [vmem:[%s250 + $0xac] sm:$0xf]
        %v298 = vld [vmem:[%s250 + $0xb0] sm:$0xf]
        %v299 = vld [vmem:[%s250 + $0xb4] sm:$0xf]
        %v300 = vld [vmem:[%s250 + $0xb8] sm:$0xf]
        %v301 = vld [vmem:[%s250 + $0xbc] sm:$0xf]
        %v302 = vld [vmem:[%s250 + $0xc0] sm:$0xf]
        %v303 = vld [vmem:[%s250 + $0xc4] sm:$0xf]
        %v304 = vld [vmem:[%s250 + $0xc8] sm:$0xf]
        %v305 = vld [vmem:[%s250 + $0xcc] sm:$0xf]
        %v306 = vld [vmem:[%s250 + $0xd0] sm:$0xf]
        %v307 = vld [vmem:[%s250 + $0xd4] sm:$0xf]
        %v308 = vld [vmem:[%s250 + $0xd8] sm:$0xf]
        %v309 = vld [vmem:[%s250 + $0xdc] sm:$0xf]
        %v310 = vld [vmem:[%s250 + $0xe0] sm:$0xf]
        %v311 = vld [vmem:[%s250 + $0xe4] sm:$0xf]
        %v312 = vld [vmem:[%s250 + $0xe8] sm:$0xf]
        %v313 = vld [vmem:[%s250 + $0xec] sm:$0xf]
        %v314 = vld [vmem:[%s250 + $0xf0] sm:$0xf]
        %v315 = vld [vmem:[%s250 + $0xf4] sm:$0xf]
        %v316 = vld [vmem:[%s250 + $0xf8] sm:$0xf]
        %v317 = vld [vmem:[%s250 + $0xfc] sm:$0xf]
        %v318 = vld [vmem:[%s250 + $0x100] sm:$0xf]
        %v319 = vld [vmem:[%s250 + $0x104] sm:$0xf]
        %v320 = vld [vmem:[%s250 + $0x108] sm:$0xf]
        %v321 = vld [vmem:[%s250 + $0x10c] sm:$0xf]
        %v322 = vld [vmem:[%s250 + $0x110] sm:$0xf]
        %v323 = vld [vmem:[%s250 + $0x114] sm:$0xf]
        %v324 = vld [vmem:[%s250 + $0x118] sm:$0xf]
        %v325 = vld [vmem:[%s250 + $0x11c] sm:$0xf]
        %v326 = vld [vmem:[%s250 + $0x120] sm:$0xf]
        %v327 = vld [vmem:[%s250 + $0x124] sm:$0xf]
        %v328 = vld [vmem:[%s250 + $0x128] sm:$0xf]
        %v329 = vld [vmem:[%s250 + $0x12c] sm:$0xf]
        %v330 = vld [vmem:[%s250 + $0x130] sm:$0xf]
        %v331 = vld [vmem:[%s250 + $0x134] sm:$0xf]
        %v332 = vld [vmem:[%s250 + $0x138] sm:$0xf]
        %v333 = vld [vmem:[%s250 + $0x13c] sm:$0xf]
        %v334 = vld [vmem:[%s250 + $0x140] sm:$0xf]
        %v335 = vld [vmem:[%s250 + $0x144] sm:$0xf]
        %v336 = vld [vmem:[%s250 + $0x148] sm:$0xf]
        %v337 = vld [vmem:[%s250 + $0x14c] sm:$0xf]
        %v338 = vld [vmem:[%s250 + $0x150] sm:$0xf]
        %v339 = vld [vmem:[%s250 + $0x154] sm:$0xf]
        %v340 = vld [vmem:[%s250 + $0x158] sm:$0xf]
        %v341 = vld [vmem:[%s250 + $0x15c] sm:$0xf]
        %v342 = vld [vmem:[%s250 + $0x160] sm:$0xf]
        %v343 = vld [vmem:[%s250 + $0x164] sm:$0xf]
        %v344 = vld [vmem:[%s250 + $0x168] sm:$0xf]
        %v345 = vld [vmem:[%s250 + $0x16c] sm:$0xf]
        %v346 = vld [vmem:[%s250 + $0x170] sm:$0xf]
        %v347 = vld [vmem:[%s250 + $0x174] sm:$0xf]
        %v348 = vld [vmem:[%s250 + $0x178] sm:$0xf]
        %v349 = vld [vmem:[%s250 + $0x17c] sm:$0xf]
        %v350 = vld [vmem:[%s250 + $0x180] sm:$0xf]
        %v351 = vld [vmem:[%s250 + $0x184] sm:$0xf]
        %v352 = vld [vmem:[%s250 + $0x188] sm:$0xf]
        %v353 = vld [vmem:[%s250 + $0x18c] sm:$0xf]
        %v354 = vld [vmem:[%s250 + $0x190] sm:$0xf]
        %v355 = vld [vmem:[%s250 + $0x194] sm:$0xf]
        %v356 = vld [vmem:[%s250 + $0x198] sm:$0xf]
        %v357 = vld [vmem:[%s250 + $0x19c] sm:$0xf]
        %v358 = vld [vmem:[%s250 + $0x1a0] sm:$0xf]
        %v359 = vld [vmem:[%s250 + $0x1a4] sm:$0xf]
        %v360 = vld [vmem:[%s250 + $0x1a8] sm:$0xf]
        %v361 = vld [vmem:[%s250 + $0x1ac] sm:$0xf]
        %v362 = vld [vmem:[%s250 + $0x1b0] sm:$0xf]
        %v363 = vld [vmem:[%s250 + $0x1b4] sm:$0xf]
        %v364 = vld [vmem:[%s250 + $0x1b8] sm:$0xf]
        %v365 = vld [vmem:[%s250 + $0x1bc] sm:$0xf]
        %v366 = vld [vmem:[%s250 + $0x1c0] sm:$0xf]
        %v367 = vld [vmem:[%s250 + $0x1c4] sm:$0xf]
        %v368 = vld [vmem:[%s250 + $0x1c8] sm:$0xf]
        %v369 = vld [vmem:[%s250 + $0x1cc] sm:$0xf]
        %v370 = vld [vmem:[%s250 + $0x1d0] sm:$0xf]
        %v371 = vld [vmem:[%s250 + $0x1d4] sm:$0xf]
        %v372 = vld [vmem:[%s250 + $0x1d8] sm:$0xf]
        %v373 = vld [vmem:[%s250 + $0x1dc] sm:$0xf]
        %v374 = vld [vmem:[%s250 + $0x1e0] sm:$0xf]
        %v375 = vld [vmem:[%s250 + $0x1e4] sm:$0xf]
        %v376 = vld [vmem:[%s250 + $0x1e8] sm:$0xf]
        %v377 = vld [vmem:[%s250 + $0x1ec] sm:$0xf]
        %v378 = vld [vmem:[%s250 + $0x1f0] sm:$0xf]
        %v379 = vld [vmem:[%s250 + $0x1f4] sm:$0xf]
        %v380 = vld [vmem:[%s250 + $0x1f8] sm:$0xf]
        %v381 = vld [vmem:[%s250 + $0x1fc] sm:$0xf]
        %v382 = vld [vmem:[%s1] sm:$0xf]
        %v383 = vld [vmem:[%s1 + $0x4] sm:$0xf]
        %v384 = vld [vmem:[%s1 + $0x8] sm:$0xf]
        %v385 = vld [vmem:[%s1 + $0xc] sm:$0xf]
        %v386 = vld [vmem:[%s2] sm:$0x1]
        %v388 = vperm.slane %v386, 0
        %v518 = vunpack.c.l.b16 %v254
        %v519 = vunpack.c.l.b16 %v255
        %v520 = vunpack.c.l.b16 %v256
        %v521 = vunpack.c.l.b16 %v257
        %v522 = vunpack.c.l.b16 %v258
        %v523 = vunpack.c.l.b16 %v259
        %v524 = vunpack.c.l.b16 %v260
        %v525 = vunpack.c.l.b16 %v261
        %v526 = vunpack.c.l.b16 %v262
        %v527 = vunpack.c.l.b16 %v263
        %v528 = vunpack.c.l.b16 %v264
        %v529 = vunpack.c.l.b16 %v265
        %v530 = vunpack.c.l.b16 %v266
        %v531 = vunpack.c.l.b16 %v267
        %v532 = vunpack.c.l.b16 %v268
        %v533 = vunpack.c.l.b16 %v269
        %v534 = vunpack.c.l.b16 %v270
        %v535 = vunpack.c.l.b16 %v271
        %v536 = vunpack.c.l.b16 %v272
        %v537 = vunpack.c.l.b16 %v273
        %v538 = vunpack.c.l.b16 %v274
        %v539 = vunpack.c.l.b16 %v275
        %v540 = vunpack.c.l.b16 %v276
        %v541 = vunpack.c.l.b16 %v277
        %v542 = vunpack.c.l.b16 %v278
        %v543 = vunpack.c.l.b16 %v279
        %v544 = vunpack.c.l.b16 %v280
        %v545 = vunpack.c.l.b16 %v281
        %v546 = vunpack.c.l.b16 %v282
        %v547 = vunpack.c.l.b16 %v283
        %v548 = vunpack.c.l.b16 %v284
        %v549 = vunpack.c.l.b16 %v285
        %v550 = vunpack.c.l.b16 %v286
        %v551 = vunpack.c.l.b16 %v287
        %v552 = vunpack.c.l.b16 %v288
        %v553 = vunpack.c.l.b16 %v289
        %v554 = vunpack.c.l.b16 %v290
        %v555 = vunpack.c.l.b16 %v291
        %v556 = vunpack.c.l.b16 %v292
        %v557 = vunpack.c.l.b16 %v293
        %v558 = vunpack.c.l.b16 %v294
        %v559 = vunpack.c.l.b16 %v295
        %v560 = vunpack.c.l.b16 %v296
        %v561 = vunpack.c.l.b16 %v297
        %v562 = vunpack.c.l.b16 %v298
        %v563 = vunpack.c.l.b16 %v299
        %v564 = vunpack.c.l.b16 %v300
        %v565 = vunpack.c.l.b16 %v301
        %v566 = vunpack.c.l.b16 %v302
        %v567 = vunpack.c.l.b16 %v303
        %v568 = vunpack.c.l.b16 %v304
        %v569 = vunpack.c.l.b16 %v305
        %v570 = vunpack.c.l.b16 %v306
        %v571 = vunpack.c.l.b16 %v307
        %v572 = vunpack.c.l.b16 %v308
        %v573 = vunpack.c.l.b16 %v309
        %v574 = vunpack.c.l.b16 %v310
        %v575 = vunpack.c.l.b16 %v311
        %v576 = vunpack.c.l.b16 %v312
        %v577 = vunpack.c.l.b16 %v313
        %v578 = vunpack.c.l.b16 %v314
        %v579 = vunpack.c.l.b16 %v315
        %v580 = vunpack.c.l.b16 %v316
        %v581 = vunpack.c.l.b16 %v317
        %v582 = vunpack.c.l.b16 %v318
        %v583 = vunpack.c.l.b16 %v319
        %v584 = vunpack.c.l.b16 %v320
        %v585 = vunpack.c.l.b16 %v321
        %v586 = vunpack.c.l.b16 %v322
        %v587 = vunpack.c.l.b16 %v323
        %v588 = vunpack.c.l.b16 %v324
        %v589 = vunpack.c.l.b16 %v325
        %v590 = vunpack.c.l.b16 %v326
        %v591 = vunpack.c.l.b16 %v327
        %v592 = vunpack.c.l.b16 %v328
        %v593 = vunpack.c.l.b16 %v329
        %v594 = vunpack.c.l.b16 %v330
        %v595 = vunpack.c.l.b16 %v331
        %v596 = vunpack.c.l.b16 %v332
        %v597 = vunpack.c.l.b16 %v333
        %v598 = vunpack.c.l.b16 %v334
        %v599 = vunpack.c.l.b16 %v335
        %v600 = vunpack.c.l.b16 %v336
        %v601 = vunpack.c.l.b16 %v337
        %v602 = vunpack.c.l.b16 %v338
        %v603 = vunpack.c.l.b16 %v339
        %v604 = vunpack.c.l.b16 %v340
        %v605 = vunpack.c.l.b16 %v341
        %v606 = vunpack.c.l.b16 %v342
        %v607 = vunpack.c.l.b16 %v343
        %v608 = vunpack.c.l.b16 %v344
        %v609 = vunpack.c.l.b16 %v345
        %v610 = vunpack.c.l.b16 %v346
        %v611 = vunpack.c.l.b16 %v347
        %v612 = vunpack.c.l.b16 %v348
        %v613 = vunpack.c.l.b16 %v349
        %v614 = vunpack.c.l.b16 %v350
        %v615 = vunpack.c.l.b16 %v351
        %v616 = vunpack.c.l.b16 %v352
        %v617 = vunpack.c.l.b16 %v353
        %v618 = vunpack.c.l.b16 %v354
        %v619 = vunpack.c.l.b16 %v355
        %v620 = vunpack.c.l.b16 %v356
        %v621 = vunpack.c.l.b16 %v357
        %v622 = vunpack.c.l.b16 %v358
        %v623 = vunpack.c.l.b16 %v359
        %v624 = vunpack.c.l.b16 %v360
        %v625 = vunpack.c.l.b16 %v361
        %v626 = vunpack.c.l.b16 %v362
        %v627 = vunpack.c.l.b16 %v363
        %v628 = vunpack.c.l.b16 %v364
        %v629 = vunpack.c.l.b16 %v365
        %v630 = vunpack.c.l.b16 %v366
        %v631 = vunpack.c.l.b16 %v367
        %v632 = vunpack.c.l.b16 %v368
        %v633 = vunpack.c.l.b16 %v369
        %v634 = vunpack.c.l.b16 %v370
        %v635 = vunpack.c.l.b16 %v371
        %v636 = vunpack.c.l.b16 %v372
        %v637 = vunpack.c.l.b16 %v373
        %v638 = vunpack.c.l.b16 %v374
        %v639 = vunpack.c.l.b16 %v375
        %v640 = vunpack.c.l.b16 %v376
        %v641 = vunpack.c.l.b16 %v377
        %v642 = vunpack.c.l.b16 %v378
        %v643 = vunpack.c.l.b16 %v379
        %v644 = vunpack.c.l.b16 %v380
        %v645 = vunpack.c.l.b16 %v381
        %v646 = vpack.c.b16 %v519, %v518
        %v647 = vpack.c.b16 %v521, %v520
        %v648 = vpack.c.b16 %v523, %v522
        %v649 = vpack.c.b16 %v525, %v524
        %v650 = vpack.c.b16 %v527, %v526
        %v651 = vpack.c.b16 %v529, %v528
        %v652 = vpack.c.b16 %v531, %v530
        %v653 = vpack.c.b16 %v533, %v532
        %v654 = vpack.c.b16 %v535, %v534
        %v655 = vpack.c.b16 %v537, %v536
        %v656 = vpack.c.b16 %v539, %v538
        %v657 = vpack.c.b16 %v541, %v540
        %v658 = vpack.c.b16 %v543, %v542
        %v659 = vpack.c.b16 %v545, %v544
        %v660 = vpack.c.b16 %v547, %v546
        %v661 = vpack.c.b16 %v549, %v548
        %v662 = vpack.c.b16 %v551, %v550
        %v663 = vpack.c.b16 %v553, %v552
        %v664 = vpack.c.b16 %v555, %v554
        %v665 = vpack.c.b16 %v557, %v556
        %v666 = vpack.c.b16 %v559, %v558
        %v667 = vpack.c.b16 %v561, %v560
        %v668 = vpack.c.b16 %v563, %v562
        %v669 = vpack.c.b16 %v565, %v564
        %v670 = vpack.c.b16 %v567, %v566
        %v671 = vpack.c.b16 %v569, %v568
        %v672 = vpack.c.b16 %v571, %v570
        %v673 = vpack.c.b16 %v573, %v572
        %v674 = vpack.c.b16 %v575, %v574
        %v675 = vpack.c.b16 %v577, %v576
        %v676 = vpack.c.b16 %v579, %v578
        %v677 = vpack.c.b16 %v581, %v580
        %v678 = vpack.c.b16 %v583, %v582
        %v679 = vpack.c.b16 %v585, %v584
        %v680 = vpack.c.b16 %v587, %v586
        %v681 = vpack.c.b16 %v589, %v588
        %v682 = vpack.c.b16 %v591, %v590
        %v683 = vpack.c.b16 %v593, %v592
        %v684 = vpack.c.b16 %v595, %v594
        %v685 = vpack.c.b16 %v597, %v596
        %v686 = vpack.c.b16 %v599, %v598
        %v687 = vpack.c.b16 %v601, %v600
        %v688 = vpack.c.b16 %v603, %v602
        %v689 = vpack.c.b16 %v605, %v604
        %v690 = vpack.c.b16 %v607, %v606
        %v691 = vpack.c.b16 %v609, %v608
        %v692 = vpack.c.b16 %v611, %v610
        %v693 = vpack.c.b16 %v613, %v612
        %v694 = vpack.c.b16 %v615, %v614
        %v695 = vpack.c.b16 %v617, %v616
        %v696 = vpack.c.b16 %v619, %v618
        %v697 = vpack.c.b16 %v621, %v620
        %v698 = vpack.c.b16 %v623, %v622
        %v699 = vpack.c.b16 %v625, %v624
        %v700 = vpack.c.b16 %v627, %v626
        %v701 = vpack.c.b16 %v629, %v628
        %v702 = vpack.c.b16 %v631, %v630
        %v703 = vpack.c.b16 %v633, %v632
        %v704 = vpack.c.b16 %v635, %v634
        %v705 = vpack.c.b16 %v637, %v636
        %v706 = vpack.c.b16 %v639, %v638
        %v707 = vpack.c.b16 %v641, %v640
        %v708 = vpack.c.b16 %v643, %v642
        %v709 = vpack.c.b16 %v645, %v644
        %v714 = vunpack.c.l.b16 %v382
        %v715 = vunpack.c.l.b16 %v383
        %v716 = vunpack.c.l.b16 %v384
        %v717 = vunpack.c.l.b16 %v385
        %v718 = vpack.c.b16 %v715, %v714
        %v719 = vpack.c.b16 %v717, %v716
        %vm722 = vcmask 261120
        %v724 = vsel %vm722, %v646, 0
        %v727 = vsel %vm722, %v647, 0
        %v730 = vsel %vm722, %v648, 0
        %v733 = vsel %vm722, %v649, 0
        %v736 = vsel %vm722, %v650, 0
        %v739 = vsel %vm722, %v651, 0
        %v742 = vsel %vm722, %v652, 0
        %v745 = vsel %vm722, %v653, 0
        %v748 = vsel %vm722, %v654, 0
        %v751 = vsel %vm722, %v655, 0
        %v754 = vsel %vm722, %v656, 0
        %v757 = vsel %vm722, %v657, 0
        %v760 = vsel %vm722, %v658, 0
        %v763 = vsel %vm722, %v659, 0
        %v766 = vsel %vm722, %v660, 0
        %v769 = vsel %vm722, %v661, 0
        %v772 = vsel %vm722, %v662, 0
        %v775 = vsel %vm722, %v663, 0
        %v778 = vsel %vm722, %v664, 0
        %v781 = vsel %vm722, %v665, 0
        %v784 = vsel %vm722, %v666, 0
        %v787 = vsel %vm722, %v667, 0
        %v790 = vsel %vm722, %v668, 0
        %v793 = vsel %vm722, %v669, 0
        %v796 = vsel %vm722, %v670, 0
        %v799 = vsel %vm722, %v671, 0
        %v802 = vsel %vm722, %v672, 0
        %v805 = vsel %vm722, %v673, 0
        %v808 = vsel %vm722, %v674, 0
        %v811 = vsel %vm722, %v675, 0
        %v814 = vsel %vm722, %v676, 0
        %v817 = vsel %vm722, %v677, 0
        %v820 = vsel %vm722, %v678, 0
        %v823 = vsel %vm722, %v679, 0
        %v826 = vsel %vm722, %v680, 0
        %v829 = vsel %vm722, %v681, 0
        %v832 = vsel %vm722, %v682, 0
        %v835 = vsel %vm722, %v683, 0
        %v838 = vsel %vm722, %v684, 0
        %v841 = vsel %vm722, %v685, 0
        %v844 = vsel %vm722, %v686, 0
        %v847 = vsel %vm722, %v687, 0
        %v850 = vsel %vm722, %v688, 0
        %v853 = vsel %vm722, %v689, 0
        %v856 = vsel %vm722, %v690, 0
        %v859 = vsel %vm722, %v691, 0
        %v862 = vsel %vm722, %v692, 0
        %v865 = vsel %vm722, %v693, 0
        %v868 = vsel %vm722, %v694, 0
        %v871 = vsel %vm722, %v695, 0
        %v874 = vsel %vm722, %v696, 0
        %v877 = vsel %vm722, %v697, 0
        %v880 = vsel %vm722, %v698, 0
        %v883 = vsel %vm722, %v699, 0
        %v886 = vsel %vm722, %v700, 0
        %v889 = vsel %vm722, %v701, 0
        %v892 = vsel %vm722, %v702, 0
        %v895 = vsel %vm722, %v703, 0
        %v898 = vsel %vm722, %v704, 0
        %v901 = vsel %vm722, %v705, 0
        %v904 = vsel %vm722, %v706, 0
        %v907 = vsel %vm722, %v707, 0
        %v910 = vsel %vm722, %v708, 0
        %v913 = vsel %vm722, %v709, 0
        %915 = vmatpush.bf16.msra.mxu0 0
        %916 = vmatpush.bf16.msra.mxu0 0
        %917 = vmatpush.bf16.msra.mxu0 0
        %918 = vmatpush.bf16.msra.mxu0 0
        %919 = vmatpush.bf16.msra.mxu0 0
        %920 = vmatpush.bf16.msra.mxu0 0
        %921 = vmatpush.bf16.msra.mxu0 %v719
        %922 = vmatpush.bf16.msra.mxu0 %v718
        %923 = vmatmul.bf16.gmra.mxu0 %v724
        %v924 = vpop.f32.mrf.mxu0
        %v925 = vadd.f32 %v388, %v924
        %v926 = vpop.f32.mrf.mxu0
        %v927 = vadd.f32 %v388, %v926
        %928 = vmatmul.bf16.gmra.mxu0 %v727
        %v929 = vpop.f32.mrf.mxu0
        %v930 = vadd.f32 %v388, %v929
        %v931 = vpop.f32.mrf.mxu0
        %v932 = vadd.f32 %v388, %v931
        %933 = vmatmul.bf16.gmra.mxu0 %v730
        %v934 = vpop.f32.mrf.mxu0
        %v935 = vadd.f32 %v388, %v934
        %v936 = vpop.f32.mrf.mxu0
        %v937 = vadd.f32 %v388, %v936
        %938 = vmatmul.bf16.gmra.mxu0 %v733
        %v939 = vpop.f32.mrf.mxu0
        %v940 = vadd.f32 %v388, %v939
        %v941 = vpop.f32.mrf.mxu0
        %v942 = vadd.f32 %v388, %v941
        %943 = vmatmul.bf16.gmra.mxu0 %v736
        %v944 = vpop.f32.mrf.mxu0
        %v945 = vadd.f32 %v388, %v944
        %v946 = vpop.f32.mrf.mxu0
        %v947 = vadd.f32 %v388, %v946
        %948 = vmatmul.bf16.gmra.mxu0 %v739
        %v949 = vpop.f32.mrf.mxu0
        %v950 = vadd.f32 %v388, %v949
        %v951 = vpop.f32.mrf.mxu0
        %v952 = vadd.f32 %v388, %v951
        %953 = vmatmul.bf16.gmra.mxu0 %v742
        %v954 = vpop.f32.mrf.mxu0
        %v955 = vadd.f32 %v388, %v954
        %v956 = vpop.f32.mrf.mxu0
        %v957 = vadd.f32 %v388, %v956
        %958 = vmatmul.bf16.gmra.mxu0 %v745
        %v959 = vpop.f32.mrf.mxu0
        %v960 = vadd.f32 %v388, %v959
        %v961 = vpop.f32.mrf.mxu0
        %v962 = vadd.f32 %v388, %v961
        %963 = vmatmul.bf16.gmra.mxu0 %v748
        %v964 = vpop.f32.mrf.mxu0
        %v965 = vadd.f32 %v388, %v964
        %v966 = vpop.f32.mrf.mxu0
        %v967 = vadd.f32 %v388, %v966
        %968 = vmatmul.bf16.gmra.mxu0 %v751
        %v969 = vpop.f32.mrf.mxu0
        %v970 = vadd.f32 %v388, %v969
        %v971 = vpop.f32.mrf.mxu0
        %v972 = vadd.f32 %v388, %v971
        %973 = vmatmul.bf16.gmra.mxu0 %v754
        %v974 = vpop.f32.mrf.mxu0
        %v975 = vadd.f32 %v388, %v974
        %v976 = vpop.f32.mrf.mxu0
        %v977 = vadd.f32 %v388, %v976
        %978 = vmatmul.bf16.gmra.mxu0 %v757
        %v979 = vpop.f32.mrf.mxu0
        %v980 = vadd.f32 %v388, %v979
        %v981 = vpop.f32.mrf.mxu0
        %v982 = vadd.f32 %v388, %v981
        %983 = vmatmul.bf16.gmra.mxu0 %v760
        %v984 = vpop.f32.mrf.mxu0
        %v985 = vadd.f32 %v388, %v984
        %v986 = vpop.f32.mrf.mxu0
        %v987 = vadd.f32 %v388, %v986
        %988 = vmatmul.bf16.gmra.mxu0 %v763
        %v989 = vpop.f32.mrf.mxu0
        %v990 = vadd.f32 %v388, %v989
        %v991 = vpop.f32.mrf.mxu0
        %v992 = vadd.f32 %v388, %v991
        %993 = vmatmul.bf16.gmra.mxu0 %v766
        %v994 = vpop.f32.mrf.mxu0
        %v995 = vadd.f32 %v388, %v994
        %v996 = vpop.f32.mrf.mxu0
        %v997 = vadd.f32 %v388, %v996
        %998 = vmatmul.bf16.gmra.mxu0 %v769
        %v999 = vpop.f32.mrf.mxu0
        %v1000 = vadd.f32 %v388, %v999
        %v1001 = vpop.f32.mrf.mxu0
        %v1002 = vadd.f32 %v388, %v1001
        %1003 = vmatmul.bf16.gmra.mxu0 %v772
        %v1004 = vpop.f32.mrf.mxu0
        %v1005 = vadd.f32 %v388, %v1004
        %v1006 = vpop.f32.mrf.mxu0
        %v1007 = vadd.f32 %v388, %v1006
        %1008 = vmatmul.bf16.gmra.mxu0 %v775
        %v1009 = vpop.f32.mrf.mxu0
        %v1010 = vadd.f32 %v388, %v1009
        %v1011 = vpop.f32.mrf.mxu0
        %v1012 = vadd.f32 %v388, %v1011
        %1013 = vmatmul.bf16.gmra.mxu0 %v778
        %v1014 = vpop.f32.mrf.mxu0
        %v1015 = vadd.f32 %v388, %v1014
        %v1016 = vpop.f32.mrf.mxu0
        %v1017 = vadd.f32 %v388, %v1016
        %1018 = vmatmul.bf16.gmra.mxu0 %v781
        %v1019 = vpop.f32.mrf.mxu0
        %v1020 = vadd.f32 %v388, %v1019
        %v1021 = vpop.f32.mrf.mxu0
        %v1022 = vadd.f32 %v388, %v1021
        %1023 = vmatmul.bf16.gmra.mxu0 %v784
        %v1024 = vpop.f32.mrf.mxu0
        %v1025 = vadd.f32 %v388, %v1024
        %v1026 = vpop.f32.mrf.mxu0
        %v1027 = vadd.f32 %v388, %v1026
        %1028 = vmatmul.bf16.gmra.mxu0 %v787
        %v1029 = vpop.f32.mrf.mxu0
        %v1030 = vadd.f32 %v388, %v1029
        %v1031 = vpop.f32.mrf.mxu0
        %v1032 = vadd.f32 %v388, %v1031
        %1033 = vmatmul.bf16.gmra.mxu0 %v790
        %v1034 = vpop.f32.mrf.mxu0
        %v1035 = vadd.f32 %v388, %v1034
        %v1036 = vpop.f32.mrf.mxu0
        %v1037 = vadd.f32 %v388, %v1036
        %1038 = vmatmul.bf16.gmra.mxu0 %v793
        %v1039 = vpop.f32.mrf.mxu0
        %v1040 = vadd.f32 %v388, %v1039
        %v1041 = vpop.f32.mrf.mxu0
        %v1042 = vadd.f32 %v388, %v1041
        %1043 = vmatmul.bf16.gmra.mxu0 %v796
        %v1044 = vpop.f32.mrf.mxu0
        %v1045 = vadd.f32 %v388, %v1044
        %v1046 = vpop.f32.mrf.mxu0
        %v1047 = vadd.f32 %v388, %v1046
        %1048 = vmatmul.bf16.gmra.mxu0 %v799
        %v1049 = vpop.f32.mrf.mxu0
        %v1050 = vadd.f32 %v388, %v1049
        %v1051 = vpop.f32.mrf.mxu0
        %v1052 = vadd.f32 %v388, %v1051
        %1053 = vmatmul.bf16.gmra.mxu0 %v802
        %v1054 = vpop.f32.mrf.mxu0
        %v1055 = vadd.f32 %v388, %v1054
        %v1056 = vpop.f32.mrf.mxu0
        %v1057 = vadd.f32 %v388, %v1056
        %1058 = vmatmul.bf16.gmra.mxu0 %v805
        %v1059 = vpop.f32.mrf.mxu0
        %v1060 = vadd.f32 %v388, %v1059
        %v1061 = vpop.f32.mrf.mxu0
        %v1062 = vadd.f32 %v388, %v1061
        %1063 = vmatmul.bf16.gmra.mxu0 %v808
        %v1064 = vpop.f32.mrf.mxu0
        %v1065 = vadd.f32 %v388, %v1064
        %v1066 = vpop.f32.mrf.mxu0
        %v1067 = vadd.f32 %v388, %v1066
        %1068 = vmatmul.bf16.gmra.mxu0 %v811
        %v1069 = vpop.f32.mrf.mxu0
        %v1070 = vadd.f32 %v388, %v1069
        %v1071 = vpop.f32.mrf.mxu0
        %v1072 = vadd.f32 %v388, %v1071
        %1073 = vmatmul.bf16.gmra.mxu0 %v814
        %v1074 = vpop.f32.mrf.mxu0
        %v1075 = vadd.f32 %v388, %v1074
        %v1076 = vpop.f32.mrf.mxu0
        %v1077 = vadd.f32 %v388, %v1076
        %1078 = vmatmul.bf16.gmra.mxu0 %v817
        %v1079 = vpop.f32.mrf.mxu0
        %v1080 = vadd.f32 %v388, %v1079
        %v1081 = vpop.f32.mrf.mxu0
        %v1082 = vadd.f32 %v388, %v1081
        %1083 = vmatmul.bf16.gmra.mxu0 %v820
        %v1084 = vpop.f32.mrf.mxu0
        %v1085 = vadd.f32 %v388, %v1084
        %v1086 = vpop.f32.mrf.mxu0
        %v1087 = vadd.f32 %v388, %v1086
        %1088 = vmatmul.bf16.gmra.mxu0 %v823
        %v1089 = vpop.f32.mrf.mxu0
        %v1090 = vadd.f32 %v388, %v1089
        %v1091 = vpop.f32.mrf.mxu0
        %v1092 = vadd.f32 %v388, %v1091
        %1093 = vmatmul.bf16.gmra.mxu0 %v826
        %v1094 = vpop.f32.mrf.mxu0
        %v1095 = vadd.f32 %v388, %v1094
        %v1096 = vpop.f32.mrf.mxu0
        %v1097 = vadd.f32 %v388, %v1096
        %1098 = vmatmul.bf16.gmra.mxu0 %v829
        %v1099 = vpop.f32.mrf.mxu0
        %v1100 = vadd.f32 %v388, %v1099
        %v1101 = vpop.f32.mrf.mxu0
        %v1102 = vadd.f32 %v388, %v1101
        %1103 = vmatmul.bf16.gmra.mxu0 %v832
        %v1104 = vpop.f32.mrf.mxu0
        %v1105 = vadd.f32 %v388, %v1104
        %v1106 = vpop.f32.mrf.mxu0
        %v1107 = vadd.f32 %v388, %v1106
        %1108 = vmatmul.bf16.gmra.mxu0 %v835
        %v1109 = vpop.f32.mrf.mxu0
        %v1110 = vadd.f32 %v388, %v1109
        %v1111 = vpop.f32.mrf.mxu0
        %v1112 = vadd.f32 %v388, %v1111
        %1113 = vmatmul.bf16.gmra.mxu0 %v838
        %v1114 = vpop.f32.mrf.mxu0
        %v1115 = vadd.f32 %v388, %v1114
        %v1116 = vpop.f32.mrf.mxu0
        %v1117 = vadd.f32 %v388, %v1116
        %1118 = vmatmul.bf16.gmra.mxu0 %v841
        %v1119 = vpop.f32.mrf.mxu0
        %v1120 = vadd.f32 %v388, %v1119
        %v1121 = vpop.f32.mrf.mxu0
        %v1122 = vadd.f32 %v388, %v1121
        %1123 = vmatmul.bf16.gmra.mxu0 %v844
        %v1124 = vpop.f32.mrf.mxu0
        %v1125 = vadd.f32 %v388, %v1124
        %v1126 = vpop.f32.mrf.mxu0
        %v1127 = vadd.f32 %v388, %v1126
        %1128 = vmatmul.bf16.gmra.mxu0 %v847
        %v1129 = vpop.f32.mrf.mxu0
        %v1130 = vadd.f32 %v388, %v1129
        %v1131 = vpop.f32.mrf.mxu0
        %v1132 = vadd.f32 %v388, %v1131
        %1133 = vmatmul.bf16.gmra.mxu0 %v850
        %v1134 = vpop.f32.mrf.mxu0
        %v1135 = vadd.f32 %v388, %v1134
        %v1136 = vpop.f32.mrf.mxu0
        %v1137 = vadd.f32 %v388, %v1136
        %1138 = vmatmul.bf16.gmra.mxu0 %v853
        %v1139 = vpop.f32.mrf.mxu0
        %v1140 = vadd.f32 %v388, %v1139
        %v1141 = vpop.f32.mrf.mxu0
        %v1142 = vadd.f32 %v388, %v1141
        %1143 = vmatmul.bf16.gmra.mxu0 %v856
        %v1144 = vpop.f32.mrf.mxu0
        %v1145 = vadd.f32 %v388, %v1144
        %v1146 = vpop.f32.mrf.mxu0
        %v1147 = vadd.f32 %v388, %v1146
        %1148 = vmatmul.bf16.gmra.mxu0 %v859
        %v1149 = vpop.f32.mrf.mxu0
        %v1150 = vadd.f32 %v388, %v1149
        %v1151 = vpop.f32.mrf.mxu0
        %v1152 = vadd.f32 %v388, %v1151
        %1153 = vmatmul.bf16.gmra.mxu0 %v862
        %v1154 = vpop.f32.mrf.mxu0
        %v1155 = vadd.f32 %v388, %v1154
        %v1156 = vpop.f32.mrf.mxu0
        %v1157 = vadd.f32 %v388, %v1156
        %1158 = vmatmul.bf16.gmra.mxu0 %v865
        %v1159 = vpop.f32.mrf.mxu0
        %v1160 = vadd.f32 %v388, %v1159
        %v1161 = vpop.f32.mrf.mxu0
        %v1162 = vadd.f32 %v388, %v1161
        %1163 = vmatmul.bf16.gmra.mxu0 %v868
        %v1164 = vpop.f32.mrf.mxu0
        %v1165 = vadd.f32 %v388, %v1164
        %v1166 = vpop.f32.mrf.mxu0
        %v1167 = vadd.f32 %v388, %v1166
        %1168 = vmatmul.bf16.gmra.mxu0 %v871
        %v1169 = vpop.f32.mrf.mxu0
        %v1170 = vadd.f32 %v388, %v1169
        %v1171 = vpop.f32.mrf.mxu0
        %v1172 = vadd.f32 %v388, %v1171
        %1173 = vmatmul.bf16.gmra.mxu0 %v874
        %v1174 = vpop.f32.mrf.mxu0
        %v1175 = vadd.f32 %v388, %v1174
        %v1176 = vpop.f32.mrf.mxu0
        %v1177 = vadd.f32 %v388, %v1176
        %1178 = vmatmul.bf16.gmra.mxu0 %v877
        %v1179 = vpop.f32.mrf.mxu0
        %v1180 = vadd.f32 %v388, %v1179
        %v1181 = vpop.f32.mrf.mxu0
        %v1182 = vadd.f32 %v388, %v1181
        %1183 = vmatmul.bf16.gmra.mxu0 %v880
        %v1184 = vpop.f32.mrf.mxu0
        %v1185 = vadd.f32 %v388, %v1184
        %v1186 = vpop.f32.mrf.mxu0
        %v1187 = vadd.f32 %v388, %v1186
        %1188 = vmatmul.bf16.gmra.mxu0 %v883
        %v1189 = vpop.f32.mrf.mxu0
        %v1190 = vadd.f32 %v388, %v1189
        %v1191 = vpop.f32.mrf.mxu0
        %v1192 = vadd.f32 %v388, %v1191
        %1193 = vmatmul.bf16.gmra.mxu0 %v886
        %v1194 = vpop.f32.mrf.mxu0
        %v1195 = vadd.f32 %v388, %v1194
        %v1196 = vpop.f32.mrf.mxu0
        %v1197 = vadd.f32 %v388, %v1196
        %1198 = vmatmul.bf16.gmra.mxu0 %v889
        %v1199 = vpop.f32.mrf.mxu0
        %v1200 = vadd.f32 %v388, %v1199
        %v1201 = vpop.f32.mrf.mxu0
        %v1202 = vadd.f32 %v388, %v1201
        %1203 = vmatmul.bf16.gmra.mxu0 %v892
        %v1204 = vpop.f32.mrf.mxu0
        %v1205 = vadd.f32 %v388, %v1204
        %v1206 = vpop.f32.mrf.mxu0
        %v1207 = vadd.f32 %v388, %v1206
        %1208 = vmatmul.bf16.gmra.mxu0 %v895
        %v1209 = vpop.f32.mrf.mxu0
        %v1210 = vadd.f32 %v388, %v1209
        %v1211 = vpop.f32.mrf.mxu0
        %v1212 = vadd.f32 %v388, %v1211
        %1213 = vmatmul.bf16.gmra.mxu0 %v898
        %v1214 = vpop.f32.mrf.mxu0
        %v1215 = vadd.f32 %v388, %v1214
        %v1216 = vpop.f32.mrf.mxu0
        %v1217 = vadd.f32 %v388, %v1216
        %1218 = vmatmul.bf16.gmra.mxu0 %v901
        %v1219 = vpop.f32.mrf.mxu0
        %v1220 = vadd.f32 %v388, %v1219
        %v1221 = vpop.f32.mrf.mxu0
        %v1222 = vadd.f32 %v388, %v1221
        %1223 = vmatmul.bf16.gmra.mxu0 %v904
        %v1224 = vpop.f32.mrf.mxu0
        %v1225 = vadd.f32 %v388, %v1224
        %v1226 = vpop.f32.mrf.mxu0
        %v1227 = vadd.f32 %v388, %v1226
        %1228 = vmatmul.bf16.gmra.mxu0 %v907
        %v1229 = vpop.f32.mrf.mxu0
        %v1230 = vadd.f32 %v388, %v1229
        %v1231 = vpop.f32.mrf.mxu0
        %v1232 = vadd.f32 %v388, %v1231
        %1233 = vmatmul.bf16.gmra.mxu0 %v910
        %v1234 = vpop.f32.mrf.mxu0
        %v1235 = vadd.f32 %v388, %v1234
        %v1236 = vpop.f32.mrf.mxu0
        %v1237 = vadd.f32 %v388, %v1236
        %1238 = vmatmul.bf16.gmra.mxu0 %v913
        %v1239 = vpop.f32.mrf.mxu0
        %v1240 = vadd.f32 %v388, %v1239
        %v1241 = vpop.f32.mrf.mxu0
        %v1242 = vadd.f32 %v388, %v1241
        %1243 = vdwg.mxu0
        %v1244 = vmul.f32 %v925, %v925
        %v1245 = vmul.f32 %v927, %v927
        %v1246 = vmul.f32 %v930, %v930
        %v1247 = vmul.f32 %v932, %v932
        %v1248 = vmul.f32 %v935, %v935
        %v1249 = vmul.f32 %v937, %v937
        %v1250 = vmul.f32 %v940, %v940
        %v1251 = vmul.f32 %v942, %v942
        %v1252 = vmul.f32 %v945, %v945
        %v1253 = vmul.f32 %v947, %v947
        %v1254 = vmul.f32 %v950, %v950
        %v1255 = vmul.f32 %v952, %v952
        %v1256 = vmul.f32 %v955, %v955
        %v1257 = vmul.f32 %v957, %v957
        %v1258 = vmul.f32 %v960, %v960
        %v1259 = vmul.f32 %v962, %v962
        %v1260 = vmul.f32 %v965, %v965
        %v1261 = vmul.f32 %v967, %v967
        %v1262 = vmul.f32 %v970, %v970
        %v1263 = vmul.f32 %v972, %v972
        %v1264 = vmul.f32 %v975, %v975
        %v1265 = vmul.f32 %v977, %v977
        %v1266 = vmul.f32 %v980, %v980
        %v1267 = vmul.f32 %v982, %v982
        %v1268 = vmul.f32 %v985, %v985
        %v1269 = vmul.f32 %v987, %v987
        %v1270 = vmul.f32 %v990, %v990
        %v1271 = vmul.f32 %v992, %v992
        %v1272 = vmul.f32 %v995, %v995
        %v1273 = vmul.f32 %v997, %v997
        %v1274 = vmul.f32 %v1000, %v1000
        %v1275 = vmul.f32 %v1002, %v1002
        %v1276 = vmul.f32 %v1005, %v1005
        %v1277 = vmul.f32 %v1007, %v1007
        %v1278 = vmul.f32 %v1010, %v1010
        %v1279 = vmul.f32 %v1012, %v1012
        %v1280 = vmul.f32 %v1015, %v1015
        %v1281 = vmul.f32 %v1017, %v1017
        %v1282 = vmul.f32 %v1020, %v1020
        %v1283 = vmul.f32 %v1022, %v1022
        %v1284 = vmul.f32 %v1025, %v1025
        %v1285 = vmul.f32 %v1027, %v1027
        %v1286 = vmul.f32 %v1030, %v1030
        %v1287 = vmul.f32 %v1032, %v1032
        %v1288 = vmul.f32 %v1035, %v1035
        %v1289 = vmul.f32 %v1037, %v1037
        %v1290 = vmul.f32 %v1040, %v1040
        %v1291 = vmul.f32 %v1042, %v1042
        %v1292 = vmul.f32 %v1045, %v1045
        %v1293 = vmul.f32 %v1047, %v1047
        %v1294 = vmul.f32 %v1050, %v1050
        %v1295 = vmul.f32 %v1052, %v1052
        %v1296 = vmul.f32 %v1055, %v1055
        %v1297 = vmul.f32 %v1057, %v1057
        %v1298 = vmul.f32 %v1060, %v1060
        %v1299 = vmul.f32 %v1062, %v1062
        %v1300 = vmul.f32 %v1065, %v1065
        %v1301 = vmul.f32 %v1067, %v1067
        %v1302 = vmul.f32 %v1070, %v1070
        %v1303 = vmul.f32 %v1072, %v1072
        %v1304 = vmul.f32 %v1075, %v1075
        %v1305 = vmul.f32 %v1077, %v1077
        %v1306 = vmul.f32 %v1080, %v1080
        %v1307 = vmul.f32 %v1082, %v1082
        %v1308 = vmul.f32 %v1085, %v1085
        %v1309 = vmul.f32 %v1087, %v1087
        %v1310 = vmul.f32 %v1090, %v1090
        %v1311 = vmul.f32 %v1092, %v1092
        %v1312 = vmul.f32 %v1095, %v1095
        %v1313 = vmul.f32 %v1097, %v1097
        %v1314 = vmul.f32 %v1100, %v1100
        %v1315 = vmul.f32 %v1102, %v1102
        %v1316 = vmul.f32 %v1105, %v1105
        %v1317 = vmul.f32 %v1107, %v1107
        %v1318 = vmul.f32 %v1110, %v1110
        %v1319 = vmul.f32 %v1112, %v1112
        %v1320 = vmul.f32 %v1115, %v1115
        %v1321 = vmul.f32 %v1117, %v1117
        %v1322 = vmul.f32 %v1120, %v1120
        %v1323 = vmul.f32 %v1122, %v1122
        %v1324 = vmul.f32 %v1125, %v1125
        %v1325 = vmul.f32 %v1127, %v1127
        %v1326 = vmul.f32 %v1130, %v1130
        %v1327 = vmul.f32 %v1132, %v1132
        %v1328 = vmul.f32 %v1135, %v1135
        %v1329 = vmul.f32 %v1137, %v1137
        %v1330 = vmul.f32 %v1140, %v1140
        %v1331 = vmul.f32 %v1142, %v1142
        %v1332 = vmul.f32 %v1145, %v1145
        %v1333 = vmul.f32 %v1147, %v1147
        %v1334 = vmul.f32 %v1150, %v1150
        %v1335 = vmul.f32 %v1152, %v1152
        %v1336 = vmul.f32 %v1155, %v1155
        %v1337 = vmul.f32 %v1157, %v1157
        %v1338 = vmul.f32 %v1160, %v1160
        %v1339 = vmul.f32 %v1162, %v1162
        %v1340 = vmul.f32 %v1165, %v1165
        %v1341 = vmul.f32 %v1167, %v1167
        %v1342 = vmul.f32 %v1170, %v1170
        %v1343 = vmul.f32 %v1172, %v1172
        %v1344 = vmul.f32 %v1175, %v1175
        %v1345 = vmul.f32 %v1177, %v1177
        %v1346 = vmul.f32 %v1180, %v1180
        %v1347 = vmul.f32 %v1182, %v1182
        %v1348 = vmul.f32 %v1185, %v1185
        %v1349 = vmul.f32 %v1187, %v1187
        %v1350 = vmul.f32 %v1190, %v1190
        %v1351 = vmul.f32 %v1192, %v1192
        %v1352 = vmul.f32 %v1195, %v1195
        %v1353 = vmul.f32 %v1197, %v1197
        %v1354 = vmul.f32 %v1200, %v1200
        %v1355 = vmul.f32 %v1202, %v1202
        %v1356 = vmul.f32 %v1205, %v1205
        %v1357 = vmul.f32 %v1207, %v1207
        %v1358 = vmul.f32 %v1210, %v1210
        %v1359 = vmul.f32 %v1212, %v1212
        %v1360 = vmul.f32 %v1215, %v1215
        %v1361 = vmul.f32 %v1217, %v1217
        %v1362 = vmul.f32 %v1220, %v1220
        %v1363 = vmul.f32 %v1222, %v1222
        %v1364 = vmul.f32 %v1225, %v1225
        %v1365 = vmul.f32 %v1227, %v1227
        %v1366 = vmul.f32 %v1230, %v1230
        %v1367 = vmul.f32 %v1232, %v1232
        %v1368 = vmul.f32 %v1235, %v1235
        %v1369 = vmul.f32 %v1237, %v1237
        %v1370 = vmul.f32 %v1240, %v1240
        %v1371 = vmul.f32 %v1242, %v1242
        %v1372 = vld [vmem:[%s4] sm:$0xff]
        %v1373 = vld [vmem:[%s4 + $0x8] sm:$0xff]
        %v1374 = vld [vmem:[%s4 + $0x10] sm:$0xff]
        %v1375 = vld [vmem:[%s4 + $0x18] sm:$0xff]
        %v1376 = vld [vmem:[%s4 + $0x20] sm:$0xff]
        %v1377 = vld [vmem:[%s4 + $0x28] sm:$0xff]
        %v1378 = vld [vmem:[%s4 + $0x30] sm:$0xff]
        %v1379 = vld [vmem:[%s4 + $0x38] sm:$0xff]
        %v1380 = vld [vmem:[%s4 + $0x40] sm:$0xff]
        %v1381 = vld [vmem:[%s4 + $0x48] sm:$0xff]
        %v1382 = vld [vmem:[%s4 + $0x50] sm:$0xff]
        %v1383 = vld [vmem:[%s4 + $0x58] sm:$0xff]
        %v1384 = vld [vmem:[%s4 + $0x60] sm:$0xff]
        %v1385 = vld [vmem:[%s4 + $0x68] sm:$0xff]
        %v1386 = vld [vmem:[%s4 + $0x70] sm:$0xff]
        %v1387 = vld [vmem:[%s4 + $0x78] sm:$0xff]
        %1388 = vmatpush.msra.mxu0 %v1387
        %1389 = vmatpush.msra.mxu0 %v1386
        %1390 = vmatpush.msra.mxu0 %v1385
        %1391 = vmatpush.msra.mxu0 %v1384
        %1392 = vmatpush.msra.mxu0 %v1383
        %1393 = vmatpush.msra.mxu0 %v1382
        %1394 = vmatpush.msra.mxu0 %v1381
        %1395 = vmatpush.msra.mxu0 %v1380
        %1396 = vmatpush.msra.mxu0 %v1379
        %1397 = vmatpush.msra.mxu0 %v1378
        %1398 = vmatpush.msra.mxu0 %v1377
        %1399 = vmatpush.msra.mxu0 %v1376
        %1400 = vmatpush.msra.mxu0 %v1375
        %1401 = vmatpush.msra.mxu0 %v1374
        %1402 = vmatpush.msra.mxu0 %v1373
        %1403 = vmatpush.msra.mxu0 %v1372
        %1404 = vmatmul.f32.gmra.mxu0 %v925
        %v1405 = vpop.f32.mrf.mxu0
        %v1406 = vadd.f32 0.0, %v1405
        %1407 = vmatmul.f32.gmra.mxu0 %v927
        %v1408 = vpop.f32.mrf.mxu0
        %v1409 = vadd.f32 0.0, %v1408
        %1410 = vmatmul.f32.gmra.mxu0 %v930
        %v1411 = vpop.f32.mrf.mxu0
        %v1412 = vadd.f32 0.0, %v1411
        %1413 = vmatmul.f32.gmra.mxu0 %v932
        %v1414 = vpop.f32.mrf.mxu0
        %v1415 = vadd.f32 0.0, %v1414
        %1416 = vmatmul.f32.gmra.mxu0 %v935
        %v1417 = vpop.f32.mrf.mxu0
        %v1418 = vadd.f32 0.0, %v1417
        %1419 = vmatmul.f32.gmra.mxu0 %v937
        %v1420 = vpop.f32.mrf.mxu0
        %v1421 = vadd.f32 0.0, %v1420
        %1422 = vmatmul.f32.gmra.mxu0 %v940
        %v1423 = vpop.f32.mrf.mxu0
        %v1424 = vadd.f32 0.0, %v1423
        %1425 = vmatmul.f32.gmra.mxu0 %v942
        %v1426 = vpop.f32.mrf.mxu0
        %v1427 = vadd.f32 0.0, %v1426
        %1428 = vmatmul.f32.gmra.mxu0 %v945
        %v1429 = vpop.f32.mrf.mxu0
        %v1430 = vadd.f32 0.0, %v1429
        %1431 = vmatmul.f32.gmra.mxu0 %v947
        %v1432 = vpop.f32.mrf.mxu0
        %v1433 = vadd.f32 0.0, %v1432
        %1434 = vmatmul.f32.gmra.mxu0 %v950
        %v1435 = vpop.f32.mrf.mxu0
        %v1436 = vadd.f32 0.0, %v1435
        %1437 = vmatmul.f32.gmra.mxu0 %v952
        %v1438 = vpop.f32.mrf.mxu0
        %v1439 = vadd.f32 0.0, %v1438
        %1440 = vmatmul.f32.gmra.mxu0 %v955
        %v1441 = vpop.f32.mrf.mxu0
        %v1442 = vadd.f32 0.0, %v1441
        %1443 = vmatmul.f32.gmra.mxu0 %v957
        %v1444 = vpop.f32.mrf.mxu0
        %v1445 = vadd.f32 0.0, %v1444
        %1446 = vmatmul.f32.gmra.mxu0 %v960
        %v1447 = vpop.f32.mrf.mxu0
        %v1448 = vadd.f32 0.0, %v1447
        %1449 = vmatmul.f32.gmra.mxu0 %v962
        %v1450 = vpop.f32.mrf.mxu0
        %v1451 = vadd.f32 0.0, %v1450
        %1452 = vmatmul.f32.gmra.mxu0 %v965
        %v1453 = vpop.f32.mrf.mxu0
        %v1454 = vadd.f32 0.0, %v1453
        %1455 = vmatmul.f32.gmra.mxu0 %v967
        %v1456 = vpop.f32.mrf.mxu0
        %v1457 = vadd.f32 0.0, %v1456
        %1458 = vmatmul.f32.gmra.mxu0 %v970
        %v1459 = vpop.f32.mrf.mxu0
        %v1460 = vadd.f32 0.0, %v1459
        %1461 = vmatmul.f32.gmra.mxu0 %v972
        %v1462 = vpop.f32.mrf.mxu0
        %v1463 = vadd.f32 0.0, %v1462
        %1464 = vmatmul.f32.gmra.mxu0 %v975
        %v1465 = vpop.f32.mrf.mxu0
        %v1466 = vadd.f32 0.0, %v1465
        %1467 = vmatmul.f32.gmra.mxu0 %v977
        %v1468 = vpop.f32.mrf.mxu0
        %v1469 = vadd.f32 0.0, %v1468
        %1470 = vmatmul.f32.gmra.mxu0 %v980
        %v1471 = vpop.f32.mrf.mxu0
        %v1472 = vadd.f32 0.0, %v1471
        %1473 = vmatmul.f32.gmra.mxu0 %v982
        %v1474 = vpop.f32.mrf.mxu0
        %v1475 = vadd.f32 0.0, %v1474
        %1476 = vmatmul.f32.gmra.mxu0 %v985
        %v1477 = vpop.f32.mrf.mxu0
        %v1478 = vadd.f32 0.0, %v1477
        %1479 = vmatmul.f32.gmra.mxu0 %v987
        %v1480 = vpop.f32.mrf.mxu0
        %v1481 = vadd.f32 0.0, %v1480
        %1482 = vmatmul.f32.gmra.mxu0 %v990
        %v1483 = vpop.f32.mrf.mxu0
        %v1484 = vadd.f32 0.0, %v1483
        %1485 = vmatmul.f32.gmra.mxu0 %v992
        %v1486 = vpop.f32.mrf.mxu0
        %v1487 = vadd.f32 0.0, %v1486
        %1488 = vmatmul.f32.gmra.mxu0 %v995
        %v1489 = vpop.f32.mrf.mxu0
        %v1490 = vadd.f32 0.0, %v1489
        %1491 = vmatmul.f32.gmra.mxu0 %v997
        %v1492 = vpop.f32.mrf.mxu0
        %v1493 = vadd.f32 0.0, %v1492
        %1494 = vmatmul.f32.gmra.mxu0 %v1000
        %v1495 = vpop.f32.mrf.mxu0
        %v1496 = vadd.f32 0.0, %v1495
        %1497 = vmatmul.f32.gmra.mxu0 %v1002
        %v1498 = vpop.f32.mrf.mxu0
        %v1499 = vadd.f32 0.0, %v1498
        %1500 = vmatmul.f32.gmra.mxu0 %v1005
        %v1501 = vpop.f32.mrf.mxu0
        %v1502 = vadd.f32 0.0, %v1501
        %1503 = vmatmul.f32.gmra.mxu0 %v1007
        %v1504 = vpop.f32.mrf.mxu0
        %v1505 = vadd.f32 0.0, %v1504
        %1506 = vmatmul.f32.gmra.mxu0 %v1010
        %v1507 = vpop.f32.mrf.mxu0
        %v1508 = vadd.f32 0.0, %v1507
        %1509 = vmatmul.f32.gmra.mxu0 %v1012
        %v1510 = vpop.f32.mrf.mxu0
        %v1511 = vadd.f32 0.0, %v1510
        %1512 = vmatmul.f32.gmra.mxu0 %v1015
        %v1513 = vpop.f32.mrf.mxu0
        %v1514 = vadd.f32 0.0, %v1513
        %1515 = vmatmul.f32.gmra.mxu0 %v1017
        %v1516 = vpop.f32.mrf.mxu0
        %v1517 = vadd.f32 0.0, %v1516
        %1518 = vmatmul.f32.gmra.mxu0 %v1020
        %v1519 = vpop.f32.mrf.mxu0
        %v1520 = vadd.f32 0.0, %v1519
        %1521 = vmatmul.f32.gmra.mxu0 %v1022
        %v1522 = vpop.f32.mrf.mxu0
        %v1523 = vadd.f32 0.0, %v1522
        %1524 = vmatmul.f32.gmra.mxu0 %v1025
        %v1525 = vpop.f32.mrf.mxu0
        %v1526 = vadd.f32 0.0, %v1525
        %1527 = vmatmul.f32.gmra.mxu0 %v1027
        %v1528 = vpop.f32.mrf.mxu0
        %v1529 = vadd.f32 0.0, %v1528
        %1530 = vmatmul.f32.gmra.mxu0 %v1030
        %v1531 = vpop.f32.mrf.mxu0
        %v1532 = vadd.f32 0.0, %v1531
        %1533 = vmatmul.f32.gmra.mxu0 %v1032
        %v1534 = vpop.f32.mrf.mxu0
        %v1535 = vadd.f32 0.0, %v1534
        %1536 = vmatmul.f32.gmra.mxu0 %v1035
        %v1537 = vpop.f32.mrf.mxu0
        %v1538 = vadd.f32 0.0, %v1537
        %1539 = vmatmul.f32.gmra.mxu0 %v1037
        %v1540 = vpop.f32.mrf.mxu0
        %v1541 = vadd.f32 0.0, %v1540
        %1542 = vmatmul.f32.gmra.mxu0 %v1040
        %v1543 = vpop.f32.mrf.mxu0
        %v1544 = vadd.f32 0.0, %v1543
        %1545 = vmatmul.f32.gmra.mxu0 %v1042
        %v1546 = vpop.f32.mrf.mxu0
        %v1547 = vadd.f32 0.0, %v1546
        %1548 = vmatmul.f32.gmra.mxu0 %v1045
        %v1549 = vpop.f32.mrf.mxu0
        %v1550 = vadd.f32 0.0, %v1549
        %1551 = vmatmul.f32.gmra.mxu0 %v1047
        %v1552 = vpop.f32.mrf.mxu0
        %v1553 = vadd.f32 0.0, %v1552
        %1554 = vmatmul.f32.gmra.mxu0 %v1050
        %v1555 = vpop.f32.mrf.mxu0
        %v1556 = vadd.f32 0.0, %v1555
        %1557 = vmatmul.f32.gmra.mxu0 %v1052
        %v1558 = vpop.f32.mrf.mxu0
        %v1559 = vadd.f32 0.0, %v1558
        %1560 = vmatmul.f32.gmra.mxu0 %v1055
        %v1561 = vpop.f32.mrf.mxu0
        %v1562 = vadd.f32 0.0, %v1561
        %1563 = vmatmul.f32.gmra.mxu0 %v1057
        %v1564 = vpop.f32.mrf.mxu0
        %v1565 = vadd.f32 0.0, %v1564
        %1566 = vmatmul.f32.gmra.mxu0 %v1060
        %v1567 = vpop.f32.mrf.mxu0
        %v1568 = vadd.f32 0.0, %v1567
        %1569 = vmatmul.f32.gmra.mxu0 %v1062
        %v1570 = vpop.f32.mrf.mxu0
        %v1571 = vadd.f32 0.0, %v1570
        %1572 = vmatmul.f32.gmra.mxu0 %v1065
        %v1573 = vpop.f32.mrf.mxu0
        %v1574 = vadd.f32 0.0, %v1573
        %1575 = vmatmul.f32.gmra.mxu0 %v1067
        %v1576 = vpop.f32.mrf.mxu0
        %v1577 = vadd.f32 0.0, %v1576
        %1578 = vmatmul.f32.gmra.mxu0 %v1070
        %v1579 = vpop.f32.mrf.mxu0
        %v1580 = vadd.f32 0.0, %v1579
        %1581 = vmatmul.f32.gmra.mxu0 %v1072
        %v1582 = vpop.f32.mrf.mxu0
        %v1583 = vadd.f32 0.0, %v1582
        %1584 = vmatmul.f32.gmra.mxu0 %v1075
        %v1585 = vpop.f32.mrf.mxu0
        %v1586 = vadd.f32 0.0, %v1585
        %1587 = vmatmul.f32.gmra.mxu0 %v1077
        %v1588 = vpop.f32.mrf.mxu0
        %v1589 = vadd.f32 0.0, %v1588
        %1590 = vmatmul.f32.gmra.mxu0 %v1080
        %v1591 = vpop.f32.mrf.mxu0
        %v1592 = vadd.f32 0.0, %v1591
        %1593 = vmatmul.f32.gmra.mxu0 %v1082
        %v1594 = vpop.f32.mrf.mxu0
        %v1595 = vadd.f32 0.0, %v1594
        %1596 = vmatmul.f32.gmra.mxu0 %v1085
        %v1597 = vpop.f32.mrf.mxu0
        %v1598 = vadd.f32 0.0, %v1597
        %1599 = vmatmul.f32.gmra.mxu0 %v1087
        %v1600 = vpop.f32.mrf.mxu0
        %v1601 = vadd.f32 0.0, %v1600
        %1602 = vmatmul.f32.gmra.mxu0 %v1090
        %v1603 = vpop.f32.mrf.mxu0
        %v1604 = vadd.f32 0.0, %v1603
        %1605 = vmatmul.f32.gmra.mxu0 %v1092
        %v1606 = vpop.f32.mrf.mxu0
        %v1607 = vadd.f32 0.0, %v1606
        %1608 = vmatmul.f32.gmra.mxu0 %v1095
        %v1609 = vpop.f32.mrf.mxu0
        %v1610 = vadd.f32 0.0, %v1609
        %1611 = vmatmul.f32.gmra.mxu0 %v1097
        %v1612 = vpop.f32.mrf.mxu0
        %v1613 = vadd.f32 0.0, %v1612
        %1614 = vmatmul.f32.gmra.mxu0 %v1100
        %v1615 = vpop.f32.mrf.mxu0
        %v1616 = vadd.f32 0.0, %v1615
        %1617 = vmatmul.f32.gmra.mxu0 %v1102
        %v1618 = vpop.f32.mrf.mxu0
        %v1619 = vadd.f32 0.0, %v1618
        %1620 = vmatmul.f32.gmra.mxu0 %v1105
        %v1621 = vpop.f32.mrf.mxu0
        %v1622 = vadd.f32 0.0, %v1621
        %1623 = vmatmul.f32.gmra.mxu0 %v1107
        %v1624 = vpop.f32.mrf.mxu0
        %v1625 = vadd.f32 0.0, %v1624
        %1626 = vmatmul.f32.gmra.mxu0 %v1110
        %v1627 = vpop.f32.mrf.mxu0
        %v1628 = vadd.f32 0.0, %v1627
        %1629 = vmatmul.f32.gmra.mxu0 %v1112
        %v1630 = vpop.f32.mrf.mxu0
        %v1631 = vadd.f32 0.0, %v1630
        %1632 = vmatmul.f32.gmra.mxu0 %v1115
        %v1633 = vpop.f32.mrf.mxu0
        %v1634 = vadd.f32 0.0, %v1633
        %1635 = vmatmul.f32.gmra.mxu0 %v1117
        %v1636 = vpop.f32.mrf.mxu0
        %v1637 = vadd.f32 0.0, %v1636
        %1638 = vmatmul.f32.gmra.mxu0 %v1120
        %v1639 = vpop.f32.mrf.mxu0
        %v1640 = vadd.f32 0.0, %v1639
        %1641 = vmatmul.f32.gmra.mxu0 %v1122
        %v1642 = vpop.f32.mrf.mxu0
        %v1643 = vadd.f32 0.0, %v1642
        %1644 = vmatmul.f32.gmra.mxu0 %v1125
        %v1645 = vpop.f32.mrf.mxu0
        %v1646 = vadd.f32 0.0, %v1645
        %1647 = vmatmul.f32.gmra.mxu0 %v1127
        %v1648 = vpop.f32.mrf.mxu0
        %v1649 = vadd.f32 0.0, %v1648
        %1650 = vmatmul.f32.gmra.mxu0 %v1130
        %v1651 = vpop.f32.mrf.mxu0
        %v1652 = vadd.f32 0.0, %v1651
        %1653 = vmatmul.f32.gmra.mxu0 %v1132
        %v1654 = vpop.f32.mrf.mxu0
        %v1655 = vadd.f32 0.0, %v1654
        %1656 = vmatmul.f32.gmra.mxu0 %v1135
        %v1657 = vpop.f32.mrf.mxu0
        %v1658 = vadd.f32 0.0, %v1657
        %1659 = vmatmul.f32.gmra.mxu0 %v1137
        %v1660 = vpop.f32.mrf.mxu0
        %v1661 = vadd.f32 0.0, %v1660
        %1662 = vmatmul.f32.gmra.mxu0 %v1140
        %v1663 = vpop.f32.mrf.mxu0
        %v1664 = vadd.f32 0.0, %v1663
        %1665 = vmatmul.f32.gmra.mxu0 %v1142
        %v1666 = vpop.f32.mrf.mxu0
        %v1667 = vadd.f32 0.0, %v1666
        %1668 = vmatmul.f32.gmra.mxu0 %v1145
        %v1669 = vpop.f32.mrf.mxu0
        %v1670 = vadd.f32 0.0, %v1669
        %1671 = vmatmul.f32.gmra.mxu0 %v1147
        %v1672 = vpop.f32.mrf.mxu0
        %v1673 = vadd.f32 0.0, %v1672
        %1674 = vmatmul.f32.gmra.mxu0 %v1150
        %v1675 = vpop.f32.mrf.mxu0
        %v1676 = vadd.f32 0.0, %v1675
        %1677 = vmatmul.f32.gmra.mxu0 %v1152
        %v1678 = vpop.f32.mrf.mxu0
        %v1679 = vadd.f32 0.0, %v1678
        %1680 = vmatmul.f32.gmra.mxu0 %v1155
        %v1681 = vpop.f32.mrf.mxu0
        %v1682 = vadd.f32 0.0, %v1681
        %1683 = vmatmul.f32.gmra.mxu0 %v1157
        %v1684 = vpop.f32.mrf.mxu0
        %v1685 = vadd.f32 0.0, %v1684
        %1686 = vmatmul.f32.gmra.mxu0 %v1160
        %v1687 = vpop.f32.mrf.mxu0
        %v1688 = vadd.f32 0.0, %v1687
        %1689 = vmatmul.f32.gmra.mxu0 %v1162
        %v1690 = vpop.f32.mrf.mxu0
        %v1691 = vadd.f32 0.0, %v1690
        %1692 = vmatmul.f32.gmra.mxu0 %v1165
        %v1693 = vpop.f32.mrf.mxu0
        %v1694 = vadd.f32 0.0, %v1693
        %1695 = vmatmul.f32.gmra.mxu0 %v1167
        %v1696 = vpop.f32.mrf.mxu0
        %v1697 = vadd.f32 0.0, %v1696
        %1698 = vmatmul.f32.gmra.mxu0 %v1170
        %v1699 = vpop.f32.mrf.mxu0
        %v1700 = vadd.f32 0.0, %v1699
        %1701 = vmatmul.f32.gmra.mxu0 %v1172
        %v1702 = vpop.f32.mrf.mxu0
        %v1703 = vadd.f32 0.0, %v1702
        %1704 = vmatmul.f32.gmra.mxu0 %v1175
        %v1705 = vpop.f32.mrf.mxu0
        %v1706 = vadd.f32 0.0, %v1705
        %1707 = vmatmul.f32.gmra.mxu0 %v1177
        %v1708 = vpop.f32.mrf.mxu0
        %v1709 = vadd.f32 0.0, %v1708
        %1710 = vmatmul.f32.gmra.mxu0 %v1180
        %v1711 = vpop.f32.mrf.mxu0
        %v1712 = vadd.f32 0.0, %v1711
        %1713 = vmatmul.f32.gmra.mxu0 %v1182
        %v1714 = vpop.f32.mrf.mxu0
        %v1715 = vadd.f32 0.0, %v1714
        %1716 = vmatmul.f32.gmra.mxu0 %v1185
        %v1717 = vpop.f32.mrf.mxu0
        %v1718 = vadd.f32 0.0, %v1717
        %1719 = vmatmul.f32.gmra.mxu0 %v1187
        %v1720 = vpop.f32.mrf.mxu0
        %v1721 = vadd.f32 0.0, %v1720
        %1722 = vmatmul.f32.gmra.mxu0 %v1190
        %v1723 = vpop.f32.mrf.mxu0
        %v1724 = vadd.f32 0.0, %v1723
        %1725 = vmatmul.f32.gmra.mxu0 %v1192
        %v1726 = vpop.f32.mrf.mxu0
        %v1727 = vadd.f32 0.0, %v1726
        %1728 = vmatmul.f32.gmra.mxu0 %v1195
        %v1729 = vpop.f32.mrf.mxu0
        %v1730 = vadd.f32 0.0, %v1729
        %1731 = vmatmul.f32.gmra.mxu0 %v1197
        %v1732 = vpop.f32.mrf.mxu0
        %v1733 = vadd.f32 0.0, %v1732
        %1734 = vmatmul.f32.gmra.mxu0 %v1200
        %v1735 = vpop.f32.mrf.mxu0
        %v1736 = vadd.f32 0.0, %v1735
        %1737 = vmatmul.f32.gmra.mxu0 %v1202
        %v1738 = vpop.f32.mrf.mxu0
        %v1739 = vadd.f32 0.0, %v1738
        %1740 = vmatmul.f32.gmra.mxu0 %v1205
        %v1741 = vpop.f32.mrf.mxu0
        %v1742 = vadd.f32 0.0, %v1741
        %1743 = vmatmul.f32.gmra.mxu0 %v1207
        %v1744 = vpop.f32.mrf.mxu0
        %v1745 = vadd.f32 0.0, %v1744
        %1746 = vmatmul.f32.gmra.mxu0 %v1210
        %v1747 = vpop.f32.mrf.mxu0
        %v1748 = vadd.f32 0.0, %v1747
        %1749 = vmatmul.f32.gmra.mxu0 %v1212
        %v1750 = vpop.f32.mrf.mxu0
        %v1751 = vadd.f32 0.0, %v1750
        %1752 = vmatmul.f32.gmra.mxu0 %v1215
        %v1753 = vpop.f32.mrf.mxu0
        %v1754 = vadd.f32 0.0, %v1753
        %1755 = vmatmul.f32.gmra.mxu0 %v1217
        %v1756 = vpop.f32.mrf.mxu0
        %v1757 = vadd.f32 0.0, %v1756
        %1758 = vmatmul.f32.gmra.mxu0 %v1220
        %v1759 = vpop.f32.mrf.mxu0
        %v1760 = vadd.f32 0.0, %v1759
        %1761 = vmatmul.f32.gmra.mxu0 %v1222
        %v1762 = vpop.f32.mrf.mxu0
        %v1763 = vadd.f32 0.0, %v1762
        %1764 = vmatmul.f32.gmra.mxu0 %v1225
        %v1765 = vpop.f32.mrf.mxu0
        %v1766 = vadd.f32 0.0, %v1765
        %1767 = vmatmul.f32.gmra.mxu0 %v1227
        %v1768 = vpop.f32.mrf.mxu0
        %v1769 = vadd.f32 0.0, %v1768
        %1770 = vmatmul.f32.gmra.mxu0 %v1230
        %v1771 = vpop.f32.mrf.mxu0
        %v1772 = vadd.f32 0.0, %v1771
        %1773 = vmatmul.f32.gmra.mxu0 %v1232
        %v1774 = vpop.f32.mrf.mxu0
        %v1775 = vadd.f32 0.0, %v1774
        %1776 = vmatmul.f32.gmra.mxu0 %v1235
        %v1777 = vpop.f32.mrf.mxu0
        %v1778 = vadd.f32 0.0, %v1777
        %1779 = vmatmul.f32.gmra.mxu0 %v1237
        %v1780 = vpop.f32.mrf.mxu0
        %v1781 = vadd.f32 0.0, %v1780
        %1782 = vmatmul.f32.gmra.mxu0 %v1240
        %v1783 = vpop.f32.mrf.mxu0
        %v1784 = vadd.f32 0.0, %v1783
        %1785 = vmatmul.f32.gmra.mxu0 %v1242
        %v1786 = vpop.f32.mrf.mxu0
        %v1787 = vadd.f32 0.0, %v1786
        %1788 = vmatmul.f32.gmra.mxu0 %v1244
        %v1789 = vpop.f32.mrf.mxu0
        %v1790 = vadd.f32 0.0, %v1789
        %1791 = vmatmul.f32.gmra.mxu0 %v1245
        %v1792 = vpop.f32.mrf.mxu0
        %v1793 = vadd.f32 0.0, %v1792
        %1794 = vmatmul.f32.gmra.mxu0 %v1246
        %v1795 = vpop.f32.mrf.mxu0
        %v1796 = vadd.f32 0.0, %v1795
        %1797 = vmatmul.f32.gmra.mxu0 %v1247
        %v1798 = vpop.f32.mrf.mxu0
        %v1799 = vadd.f32 0.0, %v1798
        %1800 = vmatmul.f32.gmra.mxu0 %v1248
        %v1801 = vpop.f32.mrf.mxu0
        %v1802 = vadd.f32 0.0, %v1801
        %1803 = vmatmul.f32.gmra.mxu0 %v1249
        %v1804 = vpop.f32.mrf.mxu0
        %v1805 = vadd.f32 0.0, %v1804
        %1806 = vmatmul.f32.gmra.mxu0 %v1250
        %v1807 = vpop.f32.mrf.mxu0
        %v1808 = vadd.f32 0.0, %v1807
        %1809 = vmatmul.f32.gmra.mxu0 %v1251
        %v1810 = vpop.f32.mrf.mxu0
        %v1811 = vadd.f32 0.0, %v1810
        %1812 = vmatmul.f32.gmra.mxu0 %v1252
        %v1813 = vpop.f32.mrf.mxu0
        %v1814 = vadd.f32 0.0, %v1813
        %1815 = vmatmul.f32.gmra.mxu0 %v1253
        %v1816 = vpop.f32.mrf.mxu0
        %v1817 = vadd.f32 0.0, %v1816
        %1818 = vmatmul.f32.gmra.mxu0 %v1254
        %v1819 = vpop.f32.mrf.mxu0
        %v1820 = vadd.f32 0.0, %v1819
        %1821 = vmatmul.f32.gmra.mxu0 %v1255
        %v1822 = vpop.f32.mrf.mxu0
        %v1823 = vadd.f32 0.0, %v1822
        %1824 = vmatmul.f32.gmra.mxu0 %v1256
        %v1825 = vpop.f32.mrf.mxu0
        %v1826 = vadd.f32 0.0, %v1825
        %1827 = vmatmul.f32.gmra.mxu0 %v1257
        %v1828 = vpop.f32.mrf.mxu0
        %v1829 = vadd.f32 0.0, %v1828
        %1830 = vmatmul.f32.gmra.mxu0 %v1258
        %v1831 = vpop.f32.mrf.mxu0
        %v1832 = vadd.f32 0.0, %v1831
        %1833 = vmatmul.f32.gmra.mxu0 %v1259
        %v1834 = vpop.f32.mrf.mxu0
        %v1835 = vadd.f32 0.0, %v1834
        %1836 = vmatmul.f32.gmra.mxu0 %v1260
        %v1837 = vpop.f32.mrf.mxu0
        %v1838 = vadd.f32 0.0, %v1837
        %1839 = vmatmul.f32.gmra.mxu0 %v1261
        %v1840 = vpop.f32.mrf.mxu0
        %v1841 = vadd.f32 0.0, %v1840
        %1842 = vmatmul.f32.gmra.mxu0 %v1262
        %v1843 = vpop.f32.mrf.mxu0
        %v1844 = vadd.f32 0.0, %v1843
        %1845 = vmatmul.f32.gmra.mxu0 %v1263
        %v1846 = vpop.f32.mrf.mxu0
        %v1847 = vadd.f32 0.0, %v1846
        %1848 = vmatmul.f32.gmra.mxu0 %v1264
        %v1849 = vpop.f32.mrf.mxu0
        %v1850 = vadd.f32 0.0, %v1849
        %1851 = vmatmul.f32.gmra.mxu0 %v1265
        %v1852 = vpop.f32.mrf.mxu0
        %v1853 = vadd.f32 0.0, %v1852
        %1854 = vmatmul.f32.gmra.mxu0 %v1266
        %v1855 = vpop.f32.mrf.mxu0
        %v1856 = vadd.f32 0.0, %v1855
        %1857 = vmatmul.f32.gmra.mxu0 %v1267
        %v1858 = vpop.f32.mrf.mxu0
        %v1859 = vadd.f32 0.0, %v1858
        %1860 = vmatmul.f32.gmra.mxu0 %v1268
        %v1861 = vpop.f32.mrf.mxu0
        %v1862 = vadd.f32 0.0, %v1861
        %1863 = vmatmul.f32.gmra.mxu0 %v1269
        %v1864 = vpop.f32.mrf.mxu0
        %v1865 = vadd.f32 0.0, %v1864
        %1866 = vmatmul.f32.gmra.mxu0 %v1270
        %v1867 = vpop.f32.mrf.mxu0
        %v1868 = vadd.f32 0.0, %v1867
        %1869 = vmatmul.f32.gmra.mxu0 %v1271
        %v1870 = vpop.f32.mrf.mxu0
        %v1871 = vadd.f32 0.0, %v1870
        %1872 = vmatmul.f32.gmra.mxu0 %v1272
        %v1873 = vpop.f32.mrf.mxu0
        %v1874 = vadd.f32 0.0, %v1873
        %1875 = vmatmul.f32.gmra.mxu0 %v1273
        %v1876 = vpop.f32.mrf.mxu0
        %v1877 = vadd.f32 0.0, %v1876
        %1878 = vmatmul.f32.gmra.mxu0 %v1274
        %v1879 = vpop.f32.mrf.mxu0
        %v1880 = vadd.f32 0.0, %v1879
        %1881 = vmatmul.f32.gmra.mxu0 %v1275
        %v1882 = vpop.f32.mrf.mxu0
        %v1883 = vadd.f32 0.0, %v1882
        %1884 = vmatmul.f32.gmra.mxu0 %v1276
        %v1885 = vpop.f32.mrf.mxu0
        %v1886 = vadd.f32 0.0, %v1885
        %1887 = vmatmul.f32.gmra.mxu0 %v1277
        %v1888 = vpop.f32.mrf.mxu0
        %v1889 = vadd.f32 0.0, %v1888
        %1890 = vmatmul.f32.gmra.mxu0 %v1278
        %v1891 = vpop.f32.mrf.mxu0
        %v1892 = vadd.f32 0.0, %v1891
        %1893 = vmatmul.f32.gmra.mxu0 %v1279
        %v1894 = vpop.f32.mrf.mxu0
        %v1895 = vadd.f32 0.0, %v1894
        %1896 = vmatmul.f32.gmra.mxu0 %v1280
        %v1897 = vpop.f32.mrf.mxu0
        %v1898 = vadd.f32 0.0, %v1897
        %1899 = vmatmul.f32.gmra.mxu0 %v1281
        %v1900 = vpop.f32.mrf.mxu0
        %v1901 = vadd.f32 0.0, %v1900
        %1902 = vmatmul.f32.gmra.mxu0 %v1282
        %v1903 = vpop.f32.mrf.mxu0
        %v1904 = vadd.f32 0.0, %v1903
        %1905 = vmatmul.f32.gmra.mxu0 %v1283
        %v1906 = vpop.f32.mrf.mxu0
        %v1907 = vadd.f32 0.0, %v1906
        %1908 = vmatmul.f32.gmra.mxu0 %v1284
        %v1909 = vpop.f32.mrf.mxu0
        %v1910 = vadd.f32 0.0, %v1909
        %1911 = vmatmul.f32.gmra.mxu0 %v1285
        %v1912 = vpop.f32.mrf.mxu0
        %v1913 = vadd.f32 0.0, %v1912
        %1914 = vmatmul.f32.gmra.mxu0 %v1286
        %v1915 = vpop.f32.mrf.mxu0
        %v1916 = vadd.f32 0.0, %v1915
        %1917 = vmatmul.f32.gmra.mxu0 %v1287
        %v1918 = vpop.f32.mrf.mxu0
        %v1919 = vadd.f32 0.0, %v1918
        %1920 = vmatmul.f32.gmra.mxu0 %v1288
        %v1921 = vpop.f32.mrf.mxu0
        %v1922 = vadd.f32 0.0, %v1921
        %1923 = vmatmul.f32.gmra.mxu0 %v1289
        %v1924 = vpop.f32.mrf.mxu0
        %v1925 = vadd.f32 0.0, %v1924
        %1926 = vmatmul.f32.gmra.mxu0 %v1290
        %v1927 = vpop.f32.mrf.mxu0
        %v1928 = vadd.f32 0.0, %v1927
        %1929 = vmatmul.f32.gmra.mxu0 %v1291
        %v1930 = vpop.f32.mrf.mxu0
        %v1931 = vadd.f32 0.0, %v1930
        %1932 = vmatmul.f32.gmra.mxu0 %v1292
        %v1933 = vpop.f32.mrf.mxu0
        %v1934 = vadd.f32 0.0, %v1933
        %1935 = vmatmul.f32.gmra.mxu0 %v1293
        %v1936 = vpop.f32.mrf.mxu0
        %v1937 = vadd.f32 0.0, %v1936
        %1938 = vmatmul.f32.gmra.mxu0 %v1294
        %v1939 = vpop.f32.mrf.mxu0
        %v1940 = vadd.f32 0.0, %v1939
        %1941 = vmatmul.f32.gmra.mxu0 %v1295
        %v1942 = vpop.f32.mrf.mxu0
        %v1943 = vadd.f32 0.0, %v1942
        %1944 = vmatmul.f32.gmra.mxu0 %v1296
        %v1945 = vpop.f32.mrf.mxu0
        %v1946 = vadd.f32 0.0, %v1945
        %1947 = vmatmul.f32.gmra.mxu0 %v1297
        %v1948 = vpop.f32.mrf.mxu0
        %v1949 = vadd.f32 0.0, %v1948
        %1950 = vmatmul.f32.gmra.mxu0 %v1298
        %v1951 = vpop.f32.mrf.mxu0
        %v1952 = vadd.f32 0.0, %v1951
        %1953 = vmatmul.f32.gmra.mxu0 %v1299
        %v1954 = vpop.f32.mrf.mxu0
        %v1955 = vadd.f32 0.0, %v1954
        %1956 = vmatmul.f32.gmra.mxu0 %v1300
        %v1957 = vpop.f32.mrf.mxu0
        %v1958 = vadd.f32 0.0, %v1957
        %1959 = vmatmul.f32.gmra.mxu0 %v1301
        %v1960 = vpop.f32.mrf.mxu0
        %v1961 = vadd.f32 0.0, %v1960
        %1962 = vmatmul.f32.gmra.mxu0 %v1302
        %v1963 = vpop.f32.mrf.mxu0
        %v1964 = vadd.f32 0.0, %v1963
        %1965 = vmatmul.f32.gmra.mxu0 %v1303
        %v1966 = vpop.f32.mrf.mxu0
        %v1967 = vadd.f32 0.0, %v1966
        %1968 = vmatmul.f32.gmra.mxu0 %v1304
        %v1969 = vpop.f32.mrf.mxu0
        %v1970 = vadd.f32 0.0, %v1969
        %1971 = vmatmul.f32.gmra.mxu0 %v1305
        %v1972 = vpop.f32.mrf.mxu0
        %v1973 = vadd.f32 0.0, %v1972
        %1974 = vmatmul.f32.gmra.mxu0 %v1306
        %v1975 = vpop.f32.mrf.mxu0
        %v1976 = vadd.f32 0.0, %v1975
        %1977 = vmatmul.f32.gmra.mxu0 %v1307
        %v1978 = vpop.f32.mrf.mxu0
        %v1979 = vadd.f32 0.0, %v1978
        %1980 = vmatmul.f32.gmra.mxu0 %v1308
        %v1981 = vpop.f32.mrf.mxu0
        %v1982 = vadd.f32 0.0, %v1981
        %1983 = vmatmul.f32.gmra.mxu0 %v1309
        %v1984 = vpop.f32.mrf.mxu0
        %v1985 = vadd.f32 0.0, %v1984
        %1986 = vmatmul.f32.gmra.mxu0 %v1310
        %v1987 = vpop.f32.mrf.mxu0
        %v1988 = vadd.f32 0.0, %v1987
        %1989 = vmatmul.f32.gmra.mxu0 %v1311
        %v1990 = vpop.f32.mrf.mxu0
        %v1991 = vadd.f32 0.0, %v1990
        %1992 = vmatmul.f32.gmra.mxu0 %v1312
        %v1993 = vpop.f32.mrf.mxu0
        %v1994 = vadd.f32 0.0, %v1993
        %1995 = vmatmul.f32.gmra.mxu0 %v1313
        %v1996 = vpop.f32.mrf.mxu0
        %v1997 = vadd.f32 0.0, %v1996
        %1998 = vmatmul.f32.gmra.mxu0 %v1314
        %v1999 = vpop.f32.mrf.mxu0
        %v2000 = vadd.f32 0.0, %v1999
        %2001 = vmatmul.f32.gmra.mxu0 %v1315
        %v2002 = vpop.f32.mrf.mxu0
        %v2003 = vadd.f32 0.0, %v2002
        %2004 = vmatmul.f32.gmra.mxu0 %v1316
        %v2005 = vpop.f32.mrf.mxu0
        %v2006 = vadd.f32 0.0, %v2005
        %2007 = vmatmul.f32.gmra.mxu0 %v1317
        %v2008 = vpop.f32.mrf.mxu0
        %v2009 = vadd.f32 0.0, %v2008
        %2010 = vmatmul.f32.gmra.mxu0 %v1318
        %v2011 = vpop.f32.mrf.mxu0
        %v2012 = vadd.f32 0.0, %v2011
        %2013 = vmatmul.f32.gmra.mxu0 %v1319
        %v2014 = vpop.f32.mrf.mxu0
        %v2015 = vadd.f32 0.0, %v2014
        %2016 = vmatmul.f32.gmra.mxu0 %v1320
        %v2017 = vpop.f32.mrf.mxu0
        %v2018 = vadd.f32 0.0, %v2017
        %2019 = vmatmul.f32.gmra.mxu0 %v1321
        %v2020 = vpop.f32.mrf.mxu0
        %v2021 = vadd.f32 0.0, %v2020
        %2022 = vmatmul.f32.gmra.mxu0 %v1322
        %v2023 = vpop.f32.mrf.mxu0
        %v2024 = vadd.f32 0.0, %v2023
        %2025 = vmatmul.f32.gmra.mxu0 %v1323
        %v2026 = vpop.f32.mrf.mxu0
        %v2027 = vadd.f32 0.0, %v2026
        %2028 = vmatmul.f32.gmra.mxu0 %v1324
        %v2029 = vpop.f32.mrf.mxu0
        %v2030 = vadd.f32 0.0, %v2029
        %2031 = vmatmul.f32.gmra.mxu0 %v1325
        %v2032 = vpop.f32.mrf.mxu0
        %v2033 = vadd.f32 0.0, %v2032
        %2034 = vmatmul.f32.gmra.mxu0 %v1326
        %v2035 = vpop.f32.mrf.mxu0
        %v2036 = vadd.f32 0.0, %v2035
        %2037 = vmatmul.f32.gmra.mxu0 %v1327
        %v2038 = vpop.f32.mrf.mxu0
        %v2039 = vadd.f32 0.0, %v2038
        %2040 = vmatmul.f32.gmra.mxu0 %v1328
        %v2041 = vpop.f32.mrf.mxu0
        %v2042 = vadd.f32 0.0, %v2041
        %2043 = vmatmul.f32.gmra.mxu0 %v1329
        %v2044 = vpop.f32.mrf.mxu0
        %v2045 = vadd.f32 0.0, %v2044
        %2046 = vmatmul.f32.gmra.mxu0 %v1330
        %v2047 = vpop.f32.mrf.mxu0
        %v2048 = vadd.f32 0.0, %v2047
        %2049 = vmatmul.f32.gmra.mxu0 %v1331
        %v2050 = vpop.f32.mrf.mxu0
        %v2051 = vadd.f32 0.0, %v2050
        %2052 = vmatmul.f32.gmra.mxu0 %v1332
        %v2053 = vpop.f32.mrf.mxu0
        %v2054 = vadd.f32 0.0, %v2053
        %2055 = vmatmul.f32.gmra.mxu0 %v1333
        %v2056 = vpop.f32.mrf.mxu0
        %v2057 = vadd.f32 0.0, %v2056
        %2058 = vmatmul.f32.gmra.mxu0 %v1334
        %v2059 = vpop.f32.mrf.mxu0
        %v2060 = vadd.f32 0.0, %v2059
        %2061 = vmatmul.f32.gmra.mxu0 %v1335
        %v2062 = vpop.f32.mrf.mxu0
        %v2063 = vadd.f32 0.0, %v2062
        %2064 = vmatmul.f32.gmra.mxu0 %v1336
        %v2065 = vpop.f32.mrf.mxu0
        %v2066 = vadd.f32 0.0, %v2065
        %2067 = vmatmul.f32.gmra.mxu0 %v1337
        %v2068 = vpop.f32.mrf.mxu0
        %v2069 = vadd.f32 0.0, %v2068
        %2070 = vmatmul.f32.gmra.mxu0 %v1338
        %v2071 = vpop.f32.mrf.mxu0
        %v2072 = vadd.f32 0.0, %v2071
        %2073 = vmatmul.f32.gmra.mxu0 %v1339
        %v2074 = vpop.f32.mrf.mxu0
        %v2075 = vadd.f32 0.0, %v2074
        %2076 = vmatmul.f32.gmra.mxu0 %v1340
        %v2077 = vpop.f32.mrf.mxu0
        %v2078 = vadd.f32 0.0, %v2077
        %2079 = vmatmul.f32.gmra.mxu0 %v1341
        %v2080 = vpop.f32.mrf.mxu0
        %v2081 = vadd.f32 0.0, %v2080
        %2082 = vmatmul.f32.gmra.mxu0 %v1342
        %v2083 = vpop.f32.mrf.mxu0
        %v2084 = vadd.f32 0.0, %v2083
        %2085 = vmatmul.f32.gmra.mxu0 %v1343
        %v2086 = vpop.f32.mrf.mxu0
        %v2087 = vadd.f32 0.0, %v2086
        %2088 = vmatmul.f32.gmra.mxu0 %v1344
        %v2089 = vpop.f32.mrf.mxu0
        %v2090 = vadd.f32 0.0, %v2089
        %2091 = vmatmul.f32.gmra.mxu0 %v1345
        %v2092 = vpop.f32.mrf.mxu0
        %v2093 = vadd.f32 0.0, %v2092
        %2094 = vmatmul.f32.gmra.mxu0 %v1346
        %v2095 = vpop.f32.mrf.mxu0
        %v2096 = vadd.f32 0.0, %v2095
        %2097 = vmatmul.f32.gmra.mxu0 %v1347
        %v2098 = vpop.f32.mrf.mxu0
        %v2099 = vadd.f32 0.0, %v2098
        %2100 = vmatmul.f32.gmra.mxu0 %v1348
        %v2101 = vpop.f32.mrf.mxu0
        %v2102 = vadd.f32 0.0, %v2101
        %2103 = vmatmul.f32.gmra.mxu0 %v1349
        %v2104 = vpop.f32.mrf.mxu0
        %v2105 = vadd.f32 0.0, %v2104
        %2106 = vmatmul.f32.gmra.mxu0 %v1350
        %v2107 = vpop.f32.mrf.mxu0
        %v2108 = vadd.f32 0.0, %v2107
        %2109 = vmatmul.f32.gmra.mxu0 %v1351
        %v2110 = vpop.f32.mrf.mxu0
        %v2111 = vadd.f32 0.0, %v2110
        %2112 = vmatmul.f32.gmra.mxu0 %v1352
        %v2113 = vpop.f32.mrf.mxu0
        %v2114 = vadd.f32 0.0, %v2113
        %2115 = vmatmul.f32.gmra.mxu0 %v1353
        %v2116 = vpop.f32.mrf.mxu0
        %v2117 = vadd.f32 0.0, %v2116
        %2118 = vmatmul.f32.gmra.mxu0 %v1354
        %v2119 = vpop.f32.mrf.mxu0
        %v2120 = vadd.f32 0.0, %v2119
        %2121 = vmatmul.f32.gmra.mxu0 %v1355
        %v2122 = vpop.f32.mrf.mxu0
        %v2123 = vadd.f32 0.0, %v2122
        %2124 = vmatmul.f32.gmra.mxu0 %v1356
        %v2125 = vpop.f32.mrf.mxu0
        %v2126 = vadd.f32 0.0, %v2125
        %2127 = vmatmul.f32.gmra.mxu0 %v1357
        %v2128 = vpop.f32.mrf.mxu0
        %v2129 = vadd.f32 0.0, %v2128
        %2130 = vmatmul.f32.gmra.mxu0 %v1358
        %v2131 = vpop.f32.mrf.mxu0
        %v2132 = vadd.f32 0.0, %v2131
        %2133 = vmatmul.f32.gmra.mxu0 %v1359
        %v2134 = vpop.f32.mrf.mxu0
        %v2135 = vadd.f32 0.0, %v2134
        %2136 = vmatmul.f32.gmra.mxu0 %v1360
        %v2137 = vpop.f32.mrf.mxu0
        %v2138 = vadd.f32 0.0, %v2137
        %2139 = vmatmul.f32.gmra.mxu0 %v1361
        %v2140 = vpop.f32.mrf.mxu0
        %v2141 = vadd.f32 0.0, %v2140
        %2142 = vmatmul.f32.gmra.mxu0 %v1362
        %v2143 = vpop.f32.mrf.mxu0
        %v2144 = vadd.f32 0.0, %v2143
        %2145 = vmatmul.f32.gmra.mxu0 %v1363
        %v2146 = vpop.f32.mrf.mxu0
        %v2147 = vadd.f32 0.0, %v2146
        %2148 = vmatmul.f32.gmra.mxu0 %v1364
        %v2149 = vpop.f32.mrf.mxu0
        %v2150 = vadd.f32 0.0, %v2149
        %2151 = vmatmul.f32.gmra.mxu0 %v1365
        %v2152 = vpop.f32.mrf.mxu0
        %v2153 = vadd.f32 0.0, %v2152
        %2154 = vmatmul.f32.gmra.mxu0 %v1366
        %v2155 = vpop.f32.mrf.mxu0
        %v2156 = vadd.f32 0.0, %v2155
        %2157 = vmatmul.f32.gmra.mxu0 %v1367
        %v2158 = vpop.f32.mrf.mxu0
        %v2159 = vadd.f32 0.0, %v2158
        %2160 = vmatmul.f32.gmra.mxu0 %v1368
        %v2161 = vpop.f32.mrf.mxu0
        %v2162 = vadd.f32 0.0, %v2161
        %2163 = vmatmul.f32.gmra.mxu0 %v1369
        %v2164 = vpop.f32.mrf.mxu0
        %v2165 = vadd.f32 0.0, %v2164
        %2166 = vmatmul.f32.gmra.mxu0 %v1370
        %v2167 = vpop.f32.mrf.mxu0
        %v2168 = vadd.f32 0.0, %v2167
        %2169 = vmatmul.f32.gmra.mxu0 %v1371
        %v2170 = vpop.f32.mrf.mxu0
        %v2171 = vadd.f32 0.0, %v2170
        %2172 = vdwg.mxu0
        %v2173 = vmul.f32 %v1406, %v1406
        %v2174 = vmul.f32 %v1409, %v1409
        %v2175 = vmul.f32 %v1412, %v1412
        %v2176 = vmul.f32 %v1415, %v1415
        %v2177 = vmul.f32 %v1418, %v1418
        %v2178 = vmul.f32 %v1421, %v1421
        %v2179 = vmul.f32 %v1424, %v1424
        %v2180 = vmul.f32 %v1427, %v1427
        %v2181 = vmul.f32 %v1430, %v1430
        %v2182 = vmul.f32 %v1433, %v1433
        %v2183 = vmul.f32 %v1436, %v1436
        %v2184 = vmul.f32 %v1439, %v1439
        %v2185 = vmul.f32 %v1442, %v1442
        %v2186 = vmul.f32 %v1445, %v1445
        %v2187 = vmul.f32 %v1448, %v1448
        %v2188 = vmul.f32 %v1451, %v1451
        %v2189 = vmul.f32 %v1454, %v1454
        %v2190 = vmul.f32 %v1457, %v1457
        %v2191 = vmul.f32 %v1460, %v1460
        %v2192 = vmul.f32 %v1463, %v1463
        %v2193 = vmul.f32 %v1466, %v1466
        %v2194 = vmul.f32 %v1469, %v1469
        %v2195 = vmul.f32 %v1472, %v1472
        %v2196 = vmul.f32 %v1475, %v1475
        %v2197 = vmul.f32 %v1478, %v1478
        %v2198 = vmul.f32 %v1481, %v1481
        %v2199 = vmul.f32 %v1484, %v1484
        %v2200 = vmul.f32 %v1487, %v1487
        %v2201 = vmul.f32 %v1490, %v1490
        %v2202 = vmul.f32 %v1493, %v1493
        %v2203 = vmul.f32 %v1496, %v1496
        %v2204 = vmul.f32 %v1499, %v1499
        %v2205 = vmul.f32 %v1502, %v1502
        %v2206 = vmul.f32 %v1505, %v1505
        %v2207 = vmul.f32 %v1508, %v1508
        %v2208 = vmul.f32 %v1511, %v1511
        %v2209 = vmul.f32 %v1514, %v1514
        %v2210 = vmul.f32 %v1517, %v1517
        %v2211 = vmul.f32 %v1520, %v1520
        %v2212 = vmul.f32 %v1523, %v1523
        %v2213 = vmul.f32 %v1526, %v1526
        %v2214 = vmul.f32 %v1529, %v1529
        %v2215 = vmul.f32 %v1532, %v1532
        %v2216 = vmul.f32 %v1535, %v1535
        %v2217 = vmul.f32 %v1538, %v1538
        %v2218 = vmul.f32 %v1541, %v1541
        %v2219 = vmul.f32 %v1544, %v1544
        %v2220 = vmul.f32 %v1547, %v1547
        %v2221 = vmul.f32 %v1550, %v1550
        %v2222 = vmul.f32 %v1553, %v1553
        %v2223 = vmul.f32 %v1556, %v1556
        %v2224 = vmul.f32 %v1559, %v1559
        %v2225 = vmul.f32 %v1562, %v1562
        %v2226 = vmul.f32 %v1565, %v1565
        %v2227 = vmul.f32 %v1568, %v1568
        %v2228 = vmul.f32 %v1571, %v1571
        %v2229 = vmul.f32 %v1574, %v1574
        %v2230 = vmul.f32 %v1577, %v1577
        %v2231 = vmul.f32 %v1580, %v1580
        %v2232 = vmul.f32 %v1583, %v1583
        %v2233 = vmul.f32 %v1586, %v1586
        %v2234 = vmul.f32 %v1589, %v1589
        %v2235 = vmul.f32 %v1592, %v1592
        %v2236 = vmul.f32 %v1595, %v1595
        %v2237 = vmul.f32 %v1598, %v1598
        %v2238 = vmul.f32 %v1601, %v1601
        %v2239 = vmul.f32 %v1604, %v1604
        %v2240 = vmul.f32 %v1607, %v1607
        %v2241 = vmul.f32 %v1610, %v1610
        %v2242 = vmul.f32 %v1613, %v1613
        %v2243 = vmul.f32 %v1616, %v1616
        %v2244 = vmul.f32 %v1619, %v1619
        %v2245 = vmul.f32 %v1622, %v1622
        %v2246 = vmul.f32 %v1625, %v1625
        %v2247 = vmul.f32 %v1628, %v1628
        %v2248 = vmul.f32 %v1631, %v1631
        %v2249 = vmul.f32 %v1634, %v1634
        %v2250 = vmul.f32 %v1637, %v1637
        %v2251 = vmul.f32 %v1640, %v1640
        %v2252 = vmul.f32 %v1643, %v1643
        %v2253 = vmul.f32 %v1646, %v1646
        %v2254 = vmul.f32 %v1649, %v1649
        %v2255 = vmul.f32 %v1652, %v1652
        %v2256 = vmul.f32 %v1655, %v1655
        %v2257 = vmul.f32 %v1658, %v1658
        %v2258 = vmul.f32 %v1661, %v1661
        %v2259 = vmul.f32 %v1664, %v1664
        %v2260 = vmul.f32 %v1667, %v1667
        %v2261 = vmul.f32 %v1670, %v1670
        %v2262 = vmul.f32 %v1673, %v1673
        %v2263 = vmul.f32 %v1676, %v1676
        %v2264 = vmul.f32 %v1679, %v1679
        %v2265 = vmul.f32 %v1682, %v1682
        %v2266 = vmul.f32 %v1685, %v1685
        %v2267 = vmul.f32 %v1688, %v1688
        %v2268 = vmul.f32 %v1691, %v1691
        %v2269 = vmul.f32 %v1694, %v1694
        %v2270 = vmul.f32 %v1697, %v1697
        %v2271 = vmul.f32 %v1700, %v1700
        %v2272 = vmul.f32 %v1703, %v1703
        %v2273 = vmul.f32 %v1706, %v1706
        %v2274 = vmul.f32 %v1709, %v1709
        %v2275 = vmul.f32 %v1712, %v1712
        %v2276 = vmul.f32 %v1715, %v1715
        %v2277 = vmul.f32 %v1718, %v1718
        %v2278 = vmul.f32 %v1721, %v1721
        %v2279 = vmul.f32 %v1724, %v1724
        %v2280 = vmul.f32 %v1727, %v1727
        %v2281 = vmul.f32 %v1730, %v1730
        %v2282 = vmul.f32 %v1733, %v1733
        %v2283 = vmul.f32 %v1736, %v1736
        %v2284 = vmul.f32 %v1739, %v1739
        %v2285 = vmul.f32 %v1742, %v1742
        %v2286 = vmul.f32 %v1745, %v1745
        %v2287 = vmul.f32 %v1748, %v1748
        %v2288 = vmul.f32 %v1751, %v1751
        %v2289 = vmul.f32 %v1754, %v1754
        %v2290 = vmul.f32 %v1757, %v1757
        %v2291 = vmul.f32 %v1760, %v1760
        %v2292 = vmul.f32 %v1763, %v1763
        %v2293 = vmul.f32 %v1766, %v1766
        %v2294 = vmul.f32 %v1769, %v1769
        %v2295 = vmul.f32 %v1772, %v1772
        %v2296 = vmul.f32 %v1775, %v1775
        %v2297 = vmul.f32 %v1778, %v1778
        %v2298 = vmul.f32 %v1781, %v1781
        %v2299 = vmul.f32 %v1784, %v1784
        %v2300 = vmul.f32 %v1787, %v1787
        %v2301 = vsub.f32 %v1790, %v2173
        %v2302 = vsub.f32 %v1793, %v2174
        %v2303 = vsub.f32 %v1796, %v2175
        %v2304 = vsub.f32 %v1799, %v2176
        %v2305 = vsub.f32 %v1802, %v2177
        %v2306 = vsub.f32 %v1805, %v2178
        %v2307 = vsub.f32 %v1808, %v2179
        %v2308 = vsub.f32 %v1811, %v2180
        %v2309 = vsub.f32 %v1814, %v2181
        %v2310 = vsub.f32 %v1817, %v2182
        %v2311 = vsub.f32 %v1820, %v2183
        %v2312 = vsub.f32 %v1823, %v2184
        %v2313 = vsub.f32 %v1826, %v2185
        %v2314 = vsub.f32 %v1829, %v2186
        %v2315 = vsub.f32 %v1832, %v2187
        %v2316 = vsub.f32 %v1835, %v2188
        %v2317 = vsub.f32 %v1838, %v2189
        %v2318 = vsub.f32 %v1841, %v2190
        %v2319 = vsub.f32 %v1844, %v2191
        %v2320 = vsub.f32 %v1847, %v2192
        %v2321 = vsub.f32 %v1850, %v2193
        %v2322 = vsub.f32 %v1853, %v2194
        %v2323 = vsub.f32 %v1856, %v2195
        %v2324 = vsub.f32 %v1859, %v2196
        %v2325 = vsub.f32 %v1862, %v2197
        %v2326 = vsub.f32 %v1865, %v2198
        %v2327 = vsub.f32 %v1868, %v2199
        %v2328 = vsub.f32 %v1871, %v2200
        %v2329 = vsub.f32 %v1874, %v2201
        %v2330 = vsub.f32 %v1877, %v2202
        %v2331 = vsub.f32 %v1880, %v2203
        %v2332 = vsub.f32 %v1883, %v2204
        %v2333 = vsub.f32 %v1886, %v2205
        %v2334 = vsub.f32 %v1889, %v2206
        %v2335 = vsub.f32 %v1892, %v2207
        %v2336 = vsub.f32 %v1895, %v2208
        %v2337 = vsub.f32 %v1898, %v2209
        %v2338 = vsub.f32 %v1901, %v2210
        %v2339 = vsub.f32 %v1904, %v2211
        %v2340 = vsub.f32 %v1907, %v2212
        %v2341 = vsub.f32 %v1910, %v2213
        %v2342 = vsub.f32 %v1913, %v2214
        %v2343 = vsub.f32 %v1916, %v2215
        %v2344 = vsub.f32 %v1919, %v2216
        %v2345 = vsub.f32 %v1922, %v2217
        %v2346 = vsub.f32 %v1925, %v2218
        %v2347 = vsub.f32 %v1928, %v2219
        %v2348 = vsub.f32 %v1931, %v2220
        %v2349 = vsub.f32 %v1934, %v2221
        %v2350 = vsub.f32 %v1937, %v2222
        %v2351 = vsub.f32 %v1940, %v2223
        %v2352 = vsub.f32 %v1943, %v2224
        %v2353 = vsub.f32 %v1946, %v2225
        %v2354 = vsub.f32 %v1949, %v2226
        %v2355 = vsub.f32 %v1952, %v2227
        %v2356 = vsub.f32 %v1955, %v2228
        %v2357 = vsub.f32 %v1958, %v2229
        %v2358 = vsub.f32 %v1961, %v2230
        %v2359 = vsub.f32 %v1964, %v2231
        %v2360 = vsub.f32 %v1967, %v2232
        %v2361 = vsub.f32 %v1970, %v2233
        %v2362 = vsub.f32 %v1973, %v2234
        %v2363 = vsub.f32 %v1976, %v2235
        %v2364 = vsub.f32 %v1979, %v2236
        %v2365 = vsub.f32 %v1982, %v2237
        %v2366 = vsub.f32 %v1985, %v2238
        %v2367 = vsub.f32 %v1988, %v2239
        %v2368 = vsub.f32 %v1991, %v2240
        %v2369 = vsub.f32 %v1994, %v2241
        %v2370 = vsub.f32 %v1997, %v2242
        %v2371 = vsub.f32 %v2000, %v2243
        %v2372 = vsub.f32 %v2003, %v2244
        %v2373 = vsub.f32 %v2006, %v2245
        %v2374 = vsub.f32 %v2009, %v2246
        %v2375 = vsub.f32 %v2012, %v2247
        %v2376 = vsub.f32 %v2015, %v2248
        %v2377 = vsub.f32 %v2018, %v2249
        %v2378 = vsub.f32 %v2021, %v2250
        %v2379 = vsub.f32 %v2024, %v2251
        %v2380 = vsub.f32 %v2027, %v2252
        %v2381 = vsub.f32 %v2030, %v2253
        %v2382 = vsub.f32 %v2033, %v2254
        %v2383 = vsub.f32 %v2036, %v2255
        %v2384 = vsub.f32 %v2039, %v2256
        %v2385 = vsub.f32 %v2042, %v2257
        %v2386 = vsub.f32 %v2045, %v2258
        %v2387 = vsub.f32 %v2048, %v2259
        %v2388 = vsub.f32 %v2051, %v2260
        %v2389 = vsub.f32 %v2054, %v2261
        %v2390 = vsub.f32 %v2057, %v2262
        %v2391 = vsub.f32 %v2060, %v2263
        %v2392 = vsub.f32 %v2063, %v2264
        %v2393 = vsub.f32 %v2066, %v2265
        %v2394 = vsub.f32 %v2069, %v2266
        %v2395 = vsub.f32 %v2072, %v2267
        %v2396 = vsub.f32 %v2075, %v2268
        %v2397 = vsub.f32 %v2078, %v2269
        %v2398 = vsub.f32 %v2081, %v2270
        %v2399 = vsub.f32 %v2084, %v2271
        %v2400 = vsub.f32 %v2087, %v2272
        %v2401 = vsub.f32 %v2090, %v2273
        %v2402 = vsub.f32 %v2093, %v2274
        %v2403 = vsub.f32 %v2096, %v2275
        %v2404 = vsub.f32 %v2099, %v2276
        %v2405 = vsub.f32 %v2102, %v2277
        %v2406 = vsub.f32 %v2105, %v2278
        %v2407 = vsub.f32 %v2108, %v2279
        %v2408 = vsub.f32 %v2111, %v2280
        %v2409 = vsub.f32 %v2114, %v2281
        %v2410 = vsub.f32 %v2117, %v2282
        %v2411 = vsub.f32 %v2120, %v2283
        %v2412 = vsub.f32 %v2123, %v2284
        %v2413 = vsub.f32 %v2126, %v2285
        %v2414 = vsub.f32 %v2129, %v2286
        %v2415 = vsub.f32 %v2132, %v2287
        %v2416 = vsub.f32 %v2135, %v2288
        %v2417 = vsub.f32 %v2138, %v2289
        %v2418 = vsub.f32 %v2141, %v2290
        %v2419 = vsub.f32 %v2144, %v2291
        %v2420 = vsub.f32 %v2147, %v2292
        %v2421 = vsub.f32 %v2150, %v2293
        %v2422 = vsub.f32 %v2153, %v2294
        %v2423 = vsub.f32 %v2156, %v2295
        %v2424 = vsub.f32 %v2159, %v2296
        %v2425 = vsub.f32 %v2162, %v2297
        %v2426 = vsub.f32 %v2165, %v2298
        %v2427 = vsub.f32 %v2168, %v2299
        %v2428 = vsub.f32 %v2171, %v2300
        %v2429 = vmax.f32 %v2301, 0.0
        %v2430 = vmax.f32 %v2302, 0.0
        %v2431 = vmax.f32 %v2303, 0.0
        %v2432 = vmax.f32 %v2304, 0.0
        %v2433 = vmax.f32 %v2305, 0.0
        %v2434 = vmax.f32 %v2306, 0.0
        %v2435 = vmax.f32 %v2307, 0.0
        %v2436 = vmax.f32 %v2308, 0.0
        %v2437 = vmax.f32 %v2309, 0.0
        %v2438 = vmax.f32 %v2310, 0.0
        %v2439 = vmax.f32 %v2311, 0.0
        %v2440 = vmax.f32 %v2312, 0.0
        %v2441 = vmax.f32 %v2313, 0.0
        %v2442 = vmax.f32 %v2314, 0.0
        %v2443 = vmax.f32 %v2315, 0.0
        %v2444 = vmax.f32 %v2316, 0.0
        %v2445 = vmax.f32 %v2317, 0.0
        %v2446 = vmax.f32 %v2318, 0.0
        %v2447 = vmax.f32 %v2319, 0.0
        %v2448 = vmax.f32 %v2320, 0.0
        %v2449 = vmax.f32 %v2321, 0.0
        %v2450 = vmax.f32 %v2322, 0.0
        %v2451 = vmax.f32 %v2323, 0.0
        %v2452 = vmax.f32 %v2324, 0.0
        %v2453 = vmax.f32 %v2325, 0.0
        %v2454 = vmax.f32 %v2326, 0.0
        %v2455 = vmax.f32 %v2327, 0.0
        %v2456 = vmax.f32 %v2328, 0.0
        %v2457 = vmax.f32 %v2329, 0.0
        %v2458 = vmax.f32 %v2330, 0.0
        %v2459 = vmax.f32 %v2331, 0.0
        %v2460 = vmax.f32 %v2332, 0.0
        %v2461 = vmax.f32 %v2333, 0.0
        %v2462 = vmax.f32 %v2334, 0.0
        %v2463 = vmax.f32 %v2335, 0.0
        %v2464 = vmax.f32 %v2336, 0.0
        %v2465 = vmax.f32 %v2337, 0.0
        %v2466 = vmax.f32 %v2338, 0.0
        %v2467 = vmax.f32 %v2339, 0.0
        %v2468 = vmax.f32 %v2340, 0.0
        %v2469 = vmax.f32 %v2341, 0.0
        %v2470 = vmax.f32 %v2342, 0.0
        %v2471 = vmax.f32 %v2343, 0.0
        %v2472 = vmax.f32 %v2344, 0.0
        %v2473 = vmax.f32 %v2345, 0.0
        %v2474 = vmax.f32 %v2346, 0.0
        %v2475 = vmax.f32 %v2347, 0.0
        %v2476 = vmax.f32 %v2348, 0.0
        %v2477 = vmax.f32 %v2349, 0.0
        %v2478 = vmax.f32 %v2350, 0.0
        %v2479 = vmax.f32 %v2351, 0.0
        %v2480 = vmax.f32 %v2352, 0.0
        %v2481 = vmax.f32 %v2353, 0.0
        %v2482 = vmax.f32 %v2354, 0.0
        %v2483 = vmax.f32 %v2355, 0.0
        %v2484 = vmax.f32 %v2356, 0.0
        %v2485 = vmax.f32 %v2357, 0.0
        %v2486 = vmax.f32 %v2358, 0.0
        %v2487 = vmax.f32 %v2359, 0.0
        %v2488 = vmax.f32 %v2360, 0.0
        %v2489 = vmax.f32 %v2361, 0.0
        %v2490 = vmax.f32 %v2362, 0.0
        %v2491 = vmax.f32 %v2363, 0.0
        %v2492 = vmax.f32 %v2364, 0.0
        %v2493 = vmax.f32 %v2365, 0.0
        %v2494 = vmax.f32 %v2366, 0.0
        %v2495 = vmax.f32 %v2367, 0.0
        %v2496 = vmax.f32 %v2368, 0.0
        %v2497 = vmax.f32 %v2369, 0.0
        %v2498 = vmax.f32 %v2370, 0.0
        %v2499 = vmax.f32 %v2371, 0.0
        %v2500 = vmax.f32 %v2372, 0.0
        %v2501 = vmax.f32 %v2373, 0.0
        %v2502 = vmax.f32 %v2374, 0.0
        %v2503 = vmax.f32 %v2375, 0.0
        %v2504 = vmax.f32 %v2376, 0.0
        %v2505 = vmax.f32 %v2377, 0.0
        %v2506 = vmax.f32 %v2378, 0.0
        %v2507 = vmax.f32 %v2379, 0.0
        %v2508 = vmax.f32 %v2380, 0.0
        %v2509 = vmax.f32 %v2381, 0.0
        %v2510 = vmax.f32 %v2382, 0.0
        %v2511 = vmax.f32 %v2383, 0.0
        %v2512 = vmax.f32 %v2384, 0.0
        %v2513 = vmax.f32 %v2385, 0.0
        %v2514 = vmax.f32 %v2386, 0.0
        %v2515 = vmax.f32 %v2387, 0.0
        %v2516 = vmax.f32 %v2388, 0.0
        %v2517 = vmax.f32 %v2389, 0.0
        %v2518 = vmax.f32 %v2390, 0.0
        %v2519 = vmax.f32 %v2391, 0.0
        %v2520 = vmax.f32 %v2392, 0.0
        %v2521 = vmax.f32 %v2393, 0.0
        %v2522 = vmax.f32 %v2394, 0.0
        %v2523 = vmax.f32 %v2395, 0.0
        %v2524 = vmax.f32 %v2396, 0.0
        %v2525 = vmax.f32 %v2397, 0.0
        %v2526 = vmax.f32 %v2398, 0.0
        %v2527 = vmax.f32 %v2399, 0.0
        %v2528 = vmax.f32 %v2400, 0.0
        %v2529 = vmax.f32 %v2401, 0.0
        %v2530 = vmax.f32 %v2402, 0.0
        %v2531 = vmax.f32 %v2403, 0.0
        %v2532 = vmax.f32 %v2404, 0.0
        %v2533 = vmax.f32 %v2405, 0.0
        %v2534 = vmax.f32 %v2406, 0.0
        %v2535 = vmax.f32 %v2407, 0.0
        %v2536 = vmax.f32 %v2408, 0.0
        %v2537 = vmax.f32 %v2409, 0.0
        %v2538 = vmax.f32 %v2410, 0.0
        %v2539 = vmax.f32 %v2411, 0.0
        %v2540 = vmax.f32 %v2412, 0.0
        %v2541 = vmax.f32 %v2413, 0.0
        %v2542 = vmax.f32 %v2414, 0.0
        %v2543 = vmax.f32 %v2415, 0.0
        %v2544 = vmax.f32 %v2416, 0.0
        %v2545 = vmax.f32 %v2417, 0.0
        %v2546 = vmax.f32 %v2418, 0.0
        %v2547 = vmax.f32 %v2419, 0.0
        %v2548 = vmax.f32 %v2420, 0.0
        %v2549 = vmax.f32 %v2421, 0.0
        %v2550 = vmax.f32 %v2422, 0.0
        %v2551 = vmax.f32 %v2423, 0.0
        %v2552 = vmax.f32 %v2424, 0.0
        %v2553 = vmax.f32 %v2425, 0.0
        %v2554 = vmax.f32 %v2426, 0.0
        %v2555 = vmax.f32 %v2427, 0.0
        %v2556 = vmax.f32 %v2428, 0.0
        %v2557 = vadd.f32 %v2429, 1e-05
        %v2558 = vadd.f32 %v2430, 1e-05
        %v2559 = vadd.f32 %v2431, 1e-05
        %v2560 = vadd.f32 %v2432, 1e-05
        %v2561 = vadd.f32 %v2433, 1e-05
        %v2562 = vadd.f32 %v2434, 1e-05
        %v2563 = vadd.f32 %v2435, 1e-05
        %v2564 = vadd.f32 %v2436, 1e-05
        %v2565 = vadd.f32 %v2437, 1e-05
        %v2566 = vadd.f32 %v2438, 1e-05
        %v2567 = vadd.f32 %v2439, 1e-05
        %v2568 = vadd.f32 %v2440, 1e-05
        %v2569 = vadd.f32 %v2441, 1e-05
        %v2570 = vadd.f32 %v2442, 1e-05
        %v2571 = vadd.f32 %v2443, 1e-05
        %v2572 = vadd.f32 %v2444, 1e-05
        %v2573 = vadd.f32 %v2445, 1e-05
        %v2574 = vadd.f32 %v2446, 1e-05
        %v2575 = vadd.f32 %v2447, 1e-05
        %v2576 = vadd.f32 %v2448, 1e-05
        %v2577 = vadd.f32 %v2449, 1e-05
        %v2578 = vadd.f32 %v2450, 1e-05
        %v2579 = vadd.f32 %v2451, 1e-05
        %v2580 = vadd.f32 %v2452, 1e-05
        %v2581 = vadd.f32 %v2453, 1e-05
        %v2582 = vadd.f32 %v2454, 1e-05
        %v2583 = vadd.f32 %v2455, 1e-05
        %v2584 = vadd.f32 %v2456, 1e-05
        %v2585 = vadd.f32 %v2457, 1e-05
        %v2586 = vadd.f32 %v2458, 1e-05
        %v2587 = vadd.f32 %v2459, 1e-05
        %v2588 = vadd.f32 %v2460, 1e-05
        %v2589 = vadd.f32 %v2461, 1e-05
        %v2590 = vadd.f32 %v2462, 1e-05
        %v2591 = vadd.f32 %v2463, 1e-05
        %v2592 = vadd.f32 %v2464, 1e-05
        %v2593 = vadd.f32 %v2465, 1e-05
        %v2594 = vadd.f32 %v2466, 1e-05
        %v2595 = vadd.f32 %v2467, 1e-05
        %v2596 = vadd.f32 %v2468, 1e-05
        %v2597 = vadd.f32 %v2469, 1e-05
        %v2598 = vadd.f32 %v2470, 1e-05
        %v2599 = vadd.f32 %v2471, 1e-05
        %v2600 = vadd.f32 %v2472, 1e-05
        %v2601 = vadd.f32 %v2473, 1e-05
        %v2602 = vadd.f32 %v2474, 1e-05
        %v2603 = vadd.f32 %v2475, 1e-05
        %v2604 = vadd.f32 %v2476, 1e-05
        %v2605 = vadd.f32 %v2477, 1e-05
        %v2606 = vadd.f32 %v2478, 1e-05
        %v2607 = vadd.f32 %v2479, 1e-05
        %v2608 = vadd.f32 %v2480, 1e-05
        %v2609 = vadd.f32 %v2481, 1e-05
        %v2610 = vadd.f32 %v2482, 1e-05
        %v2611 = vadd.f32 %v2483, 1e-05
        %v2612 = vadd.f32 %v2484, 1e-05
        %v2613 = vadd.f32 %v2485, 1e-05
        %v2614 = vadd.f32 %v2486, 1e-05
        %v2615 = vadd.f32 %v2487, 1e-05
        %v2616 = vadd.f32 %v2488, 1e-05
        %v2617 = vadd.f32 %v2489, 1e-05
        %v2618 = vadd.f32 %v2490, 1e-05
        %v2619 = vadd.f32 %v2491, 1e-05
        %v2620 = vadd.f32 %v2492, 1e-05
        %v2621 = vadd.f32 %v2493, 1e-05
        %v2622 = vadd.f32 %v2494, 1e-05
        %v2623 = vadd.f32 %v2495, 1e-05
        %v2624 = vadd.f32 %v2496, 1e-05
        %v2625 = vadd.f32 %v2497, 1e-05
        %v2626 = vadd.f32 %v2498, 1e-05
        %v2627 = vadd.f32 %v2499, 1e-05
        %v2628 = vadd.f32 %v2500, 1e-05
        %v2629 = vadd.f32 %v2501, 1e-05
        %v2630 = vadd.f32 %v2502, 1e-05
        %v2631 = vadd.f32 %v2503, 1e-05
        %v2632 = vadd.f32 %v2504, 1e-05
        %v2633 = vadd.f32 %v2505, 1e-05
        %v2634 = vadd.f32 %v2506, 1e-05
        %v2635 = vadd.f32 %v2507, 1e-05
        %v2636 = vadd.f32 %v2508, 1e-05
        %v2637 = vadd.f32 %v2509, 1e-05
        %v2638 = vadd.f32 %v2510, 1e-05
        %v2639 = vadd.f32 %v2511, 1e-05
        %v2640 = vadd.f32 %v2512, 1e-05
        %v2641 = vadd.f32 %v2513, 1e-05
        %v2642 = vadd.f32 %v2514, 1e-05
        %v2643 = vadd.f32 %v2515, 1e-05
        %v2644 = vadd.f32 %v2516, 1e-05
        %v2645 = vadd.f32 %v2517, 1e-05
        %v2646 = vadd.f32 %v2518, 1e-05
        %v2647 = vadd.f32 %v2519, 1e-05
        %v2648 = vadd.f32 %v2520, 1e-05
        %v2649 = vadd.f32 %v2521, 1e-05
        %v2650 = vadd.f32 %v2522, 1e-05
        %v2651 = vadd.f32 %v2523, 1e-05
        %v2652 = vadd.f32 %v2524, 1e-05
        %v2653 = vadd.f32 %v2525, 1e-05
        %v2654 = vadd.f32 %v2526, 1e-05
        %v2655 = vadd.f32 %v2527, 1e-05
        %v2656 = vadd.f32 %v2528, 1e-05
        %v2657 = vadd.f32 %v2529, 1e-05
        %v2658 = vadd.f32 %v2530, 1e-05
        %v2659 = vadd.f32 %v2531, 1e-05
        %v2660 = vadd.f32 %v2532, 1e-05
        %v2661 = vadd.f32 %v2533, 1e-05
        %v2662 = vadd.f32 %v2534, 1e-05
        %v2663 = vadd.f32 %v2535, 1e-05
        %v2664 = vadd.f32 %v2536, 1e-05
        %v2665 = vadd.f32 %v2537, 1e-05
        %v2666 = vadd.f32 %v2538, 1e-05
        %v2667 = vadd.f32 %v2539, 1e-05
        %v2668 = vadd.f32 %v2540, 1e-05
        %v2669 = vadd.f32 %v2541, 1e-05
        %v2670 = vadd.f32 %v2542, 1e-05
        %v2671 = vadd.f32 %v2543, 1e-05
        %v2672 = vadd.f32 %v2544, 1e-05
        %v2673 = vadd.f32 %v2545, 1e-05
        %v2674 = vadd.f32 %v2546, 1e-05
        %v2675 = vadd.f32 %v2547, 1e-05
        %v2676 = vadd.f32 %v2548, 1e-05
        %v2677 = vadd.f32 %v2549, 1e-05
        %v2678 = vadd.f32 %v2550, 1e-05
        %v2679 = vadd.f32 %v2551, 1e-05
        %v2680 = vadd.f32 %v2552, 1e-05
        %v2681 = vadd.f32 %v2553, 1e-05
        %v2682 = vadd.f32 %v2554, 1e-05
        %v2683 = vadd.f32 %v2555, 1e-05
        %v2684 = vadd.f32 %v2556, 1e-05
        %v2685 = vrsqrt.pop %v2557
        %v2686 = vmul.f32 %v2685, %v2557
        %v2687 = vmul.f32 %v2686, %v2685
        %v2688 = vmul.f32 0.5, %v2687
        %v2689 = vsub.f32 1.5, %v2688
        %v2690 = vmul.f32 %v2685, %v2689
        %vm2691 = vweird.f32 %v2557
        %vm2692 = vweird.f32 %v2685
        %vm2693 = vmor %vm2691, %vm2692
        %v2694 = vsel %vm2693, %v2685, %v2690
        %v2695 = vrsqrt.pop %v2558
        %v2696 = vmul.f32 %v2695, %v2558
        %v2697 = vmul.f32 %v2696, %v2695
        %v2698 = vmul.f32 0.5, %v2697
        %v2699 = vsub.f32 1.5, %v2698
        %v2700 = vmul.f32 %v2695, %v2699
        %vm2701 = vweird.f32 %v2558
        %vm2702 = vweird.f32 %v2695
        %vm2703 = vmor %vm2701, %vm2702
        %v2704 = vsel %vm2703, %v2695, %v2700
        %v2705 = vrsqrt.pop %v2559
        %v2706 = vmul.f32 %v2705, %v2559
        %v2707 = vmul.f32 %v2706, %v2705
        %v2708 = vmul.f32 0.5, %v2707
        %v2709 = vsub.f32 1.5, %v2708
        %v2710 = vmul.f32 %v2705, %v2709
        %vm2711 = vweird.f32 %v2559
        %vm2712 = vweird.f32 %v2705
        %vm2713 = vmor %vm2711, %vm2712
        %v2714 = vsel %vm2713, %v2705, %v2710
        %v2715 = vrsqrt.pop %v2560
        %v2716 = vmul.f32 %v2715, %v2560
        %v2717 = vmul.f32 %v2716, %v2715
        %v2718 = vmul.f32 0.5, %v2717
        %v2719 = vsub.f32 1.5, %v2718
        %v2720 = vmul.f32 %v2715, %v2719
        %vm2721 = vweird.f32 %v2560
        %vm2722 = vweird.f32 %v2715
        %vm2723 = vmor %vm2721, %vm2722
        %v2724 = vsel %vm2723, %v2715, %v2720
        %v2725 = vrsqrt.pop %v2561
        %v2726 = vmul.f32 %v2725, %v2561
        %v2727 = vmul.f32 %v2726, %v2725
        %v2728 = vmul.f32 0.5, %v2727
        %v2729 = vsub.f32 1.5, %v2728
        %v2730 = vmul.f32 %v2725, %v2729
        %vm2731 = vweird.f32 %v2561
        %vm2732 = vweird.f32 %v2725
        %vm2733 = vmor %vm2731, %vm2732
        %v2734 = vsel %vm2733, %v2725, %v2730
        %v2735 = vrsqrt.pop %v2562
        %v2736 = vmul.f32 %v2735, %v2562
        %v2737 = vmul.f32 %v2736, %v2735
        %v2738 = vmul.f32 0.5, %v2737
        %v2739 = vsub.f32 1.5, %v2738
        %v2740 = vmul.f32 %v2735, %v2739
        %vm2741 = vweird.f32 %v2562
        %vm2742 = vweird.f32 %v2735
        %vm2743 = vmor %vm2741, %vm2742
        %v2744 = vsel %vm2743, %v2735, %v2740
        %v2745 = vrsqrt.pop %v2563
        %v2746 = vmul.f32 %v2745, %v2563
        %v2747 = vmul.f32 %v2746, %v2745
        %v2748 = vmul.f32 0.5, %v2747
        %v2749 = vsub.f32 1.5, %v2748
        %v2750 = vmul.f32 %v2745, %v2749
        %vm2751 = vweird.f32 %v2563
        %vm2752 = vweird.f32 %v2745
        %vm2753 = vmor %vm2751, %vm2752
        %v2754 = vsel %vm2753, %v2745, %v2750
        %v2755 = vrsqrt.pop %v2564
        %v2756 = vmul.f32 %v2755, %v2564
        %v2757 = vmul.f32 %v2756, %v2755
        %v2758 = vmul.f32 0.5, %v2757
        %v2759 = vsub.f32 1.5, %v2758
        %v2760 = vmul.f32 %v2755, %v2759
        %vm2761 = vweird.f32 %v2564
        %vm2762 = vweird.f32 %v2755
        %vm2763 = vmor %vm2761, %vm2762
        %v2764 = vsel %vm2763, %v2755, %v2760
        %v2765 = vrsqrt.pop %v2565
        %v2766 = vmul.f32 %v2765, %v2565
        %v2767 = vmul.f32 %v2766, %v2765
        %v2768 = vmul.f32 0.5, %v2767
        %v2769 = vsub.f32 1.5, %v2768
        %v2770 = vmul.f32 %v2765, %v2769
        %vm2771 = vweird.f32 %v2565
        %vm2772 = vweird.f32 %v2765
        %vm2773 = vmor %vm2771, %vm2772
        %v2774 = vsel %vm2773, %v2765, %v2770
        %v2775 = vrsqrt.pop %v2566
        %v2776 = vmul.f32 %v2775, %v2566
        %v2777 = vmul.f32 %v2776, %v2775
        %v2778 = vmul.f32 0.5, %v2777
        %v2779 = vsub.f32 1.5, %v2778
        %v2780 = vmul.f32 %v2775, %v2779
        %vm2781 = vweird.f32 %v2566
        %vm2782 = vweird.f32 %v2775
        %vm2783 = vmor %vm2781, %vm2782
        %v2784 = vsel %vm2783, %v2775, %v2780
        %v2785 = vrsqrt.pop %v2567
        %v2786 = vmul.f32 %v2785, %v2567
        %v2787 = vmul.f32 %v2786, %v2785
        %v2788 = vmul.f32 0.5, %v2787
        %v2789 = vsub.f32 1.5, %v2788
        %v2790 = vmul.f32 %v2785, %v2789
        %vm2791 = vweird.f32 %v2567
        %vm2792 = vweird.f32 %v2785
        %vm2793 = vmor %vm2791, %vm2792
        %v2794 = vsel %vm2793, %v2785, %v2790
        %v2795 = vrsqrt.pop %v2568
        %v2796 = vmul.f32 %v2795, %v2568
        %v2797 = vmul.f32 %v2796, %v2795
        %v2798 = vmul.f32 0.5, %v2797
        %v2799 = vsub.f32 1.5, %v2798
        %v2800 = vmul.f32 %v2795, %v2799
        %vm2801 = vweird.f32 %v2568
        %vm2802 = vweird.f32 %v2795
        %vm2803 = vmor %vm2801, %vm2802
        %v2804 = vsel %vm2803, %v2795, %v2800
        %v2805 = vrsqrt.pop %v2569
        %v2806 = vmul.f32 %v2805, %v2569
        %v2807 = vmul.f32 %v2806, %v2805
        %v2808 = vmul.f32 0.5, %v2807
        %v2809 = vsub.f32 1.5, %v2808
        %v2810 = vmul.f32 %v2805, %v2809
        %vm2811 = vweird.f32 %v2569
        %vm2812 = vweird.f32 %v2805
        %vm2813 = vmor %vm2811, %vm2812
        %v2814 = vsel %vm2813, %v2805, %v2810
        %v2815 = vrsqrt.pop %v2570
        %v2816 = vmul.f32 %v2815, %v2570
        %v2817 = vmul.f32 %v2816, %v2815
        %v2818 = vmul.f32 0.5, %v2817
        %v2819 = vsub.f32 1.5, %v2818
        %v2820 = vmul.f32 %v2815, %v2819
        %vm2821 = vweird.f32 %v2570
        %vm2822 = vweird.f32 %v2815
        %vm2823 = vmor %vm2821, %vm2822
        %v2824 = vsel %vm2823, %v2815, %v2820
        %v2825 = vrsqrt.pop %v2571
        %v2826 = vmul.f32 %v2825, %v2571
        %v2827 = vmul.f32 %v2826, %v2825
        %v2828 = vmul.f32 0.5, %v2827
        %v2829 = vsub.f32 1.5, %v2828
        %v2830 = vmul.f32 %v2825, %v2829
        %vm2831 = vweird.f32 %v2571
        %vm2832 = vweird.f32 %v2825
        %vm2833 = vmor %vm2831, %vm2832
        %v2834 = vsel %vm2833, %v2825, %v2830
        %v2835 = vrsqrt.pop %v2572
        %v2836 = vmul.f32 %v2835, %v2572
        %v2837 = vmul.f32 %v2836, %v2835
        %v2838 = vmul.f32 0.5, %v2837
        %v2839 = vsub.f32 1.5, %v2838
        %v2840 = vmul.f32 %v2835, %v2839
        %vm2841 = vweird.f32 %v2572
        %vm2842 = vweird.f32 %v2835
        %vm2843 = vmor %vm2841, %vm2842
        %v2844 = vsel %vm2843, %v2835, %v2840
        %v2845 = vrsqrt.pop %v2573
        %v2846 = vmul.f32 %v2845, %v2573
        %v2847 = vmul.f32 %v2846, %v2845
        %v2848 = vmul.f32 0.5, %v2847
        %v2849 = vsub.f32 1.5, %v2848
        %v2850 = vmul.f32 %v2845, %v2849
        %vm2851 = vweird.f32 %v2573
        %vm2852 = vweird.f32 %v2845
        %vm2853 = vmor %vm2851, %vm2852
        %v2854 = vsel %vm2853, %v2845, %v2850
        %v2855 = vrsqrt.pop %v2574
        %v2856 = vmul.f32 %v2855, %v2574
        %v2857 = vmul.f32 %v2856, %v2855
        %v2858 = vmul.f32 0.5, %v2857
        %v2859 = vsub.f32 1.5, %v2858
        %v2860 = vmul.f32 %v2855, %v2859
        %vm2861 = vweird.f32 %v2574
        %vm2862 = vweird.f32 %v2855
        %vm2863 = vmor %vm2861, %vm2862
        %v2864 = vsel %vm2863, %v2855, %v2860
        %v2865 = vrsqrt.pop %v2575
        %v2866 = vmul.f32 %v2865, %v2575
        %v2867 = vmul.f32 %v2866, %v2865
        %v2868 = vmul.f32 0.5, %v2867
        %v2869 = vsub.f32 1.5, %v2868
        %v2870 = vmul.f32 %v2865, %v2869
        %vm2871 = vweird.f32 %v2575
        %vm2872 = vweird.f32 %v2865
        %vm2873 = vmor %vm2871, %vm2872
        %v2874 = vsel %vm2873, %v2865, %v2870
        %v2875 = vrsqrt.pop %v2576
        %v2876 = vmul.f32 %v2875, %v2576
        %v2877 = vmul.f32 %v2876, %v2875
        %v2878 = vmul.f32 0.5, %v2877
        %v2879 = vsub.f32 1.5, %v2878
        %v2880 = vmul.f32 %v2875, %v2879
        %vm2881 = vweird.f32 %v2576
        %vm2882 = vweird.f32 %v2875
        %vm2883 = vmor %vm2881, %vm2882
        %v2884 = vsel %vm2883, %v2875, %v2880
        %v2885 = vrsqrt.pop %v2577
        %v2886 = vmul.f32 %v2885, %v2577
        %v2887 = vmul.f32 %v2886, %v2885
        %v2888 = vmul.f32 0.5, %v2887
        %v2889 = vsub.f32 1.5, %v2888
        %v2890 = vmul.f32 %v2885, %v2889
        %vm2891 = vweird.f32 %v2577
        %vm2892 = vweird.f32 %v2885
        %vm2893 = vmor %vm2891, %vm2892
        %v2894 = vsel %vm2893, %v2885, %v2890
        %v2895 = vrsqrt.pop %v2578
        %v2896 = vmul.f32 %v2895, %v2578
        %v2897 = vmul.f32 %v2896, %v2895
        %v2898 = vmul.f32 0.5, %v2897
        %v2899 = vsub.f32 1.5, %v2898
        %v2900 = vmul.f32 %v2895, %v2899
        %vm2901 = vweird.f32 %v2578
        %vm2902 = vweird.f32 %v2895
        %vm2903 = vmor %vm2901, %vm2902
        %v2904 = vsel %vm2903, %v2895, %v2900
        %v2905 = vrsqrt.pop %v2579
        %v2906 = vmul.f32 %v2905, %v2579
        %v2907 = vmul.f32 %v2906, %v2905
        %v2908 = vmul.f32 0.5, %v2907
        %v2909 = vsub.f32 1.5, %v2908
        %v2910 = vmul.f32 %v2905, %v2909
        %vm2911 = vweird.f32 %v2579
        %vm2912 = vweird.f32 %v2905
        %vm2913 = vmor %vm2911, %vm2912
        %v2914 = vsel %vm2913, %v2905, %v2910
        %v2915 = vrsqrt.pop %v2580
        %v2916 = vmul.f32 %v2915, %v2580
        %v2917 = vmul.f32 %v2916, %v2915
        %v2918 = vmul.f32 0.5, %v2917
        %v2919 = vsub.f32 1.5, %v2918
        %v2920 = vmul.f32 %v2915, %v2919
        %vm2921 = vweird.f32 %v2580
        %vm2922 = vweird.f32 %v2915
        %vm2923 = vmor %vm2921, %vm2922
        %v2924 = vsel %vm2923, %v2915, %v2920
        %v2925 = vrsqrt.pop %v2581
        %v2926 = vmul.f32 %v2925, %v2581
        %v2927 = vmul.f32 %v2926, %v2925
        %v2928 = vmul.f32 0.5, %v2927
        %v2929 = vsub.f32 1.5, %v2928
        %v2930 = vmul.f32 %v2925, %v2929
        %vm2931 = vweird.f32 %v2581
        %vm2932 = vweird.f32 %v2925
        %vm2933 = vmor %vm2931, %vm2932
        %v2934 = vsel %vm2933, %v2925, %v2930
        %v2935 = vrsqrt.pop %v2582
        %v2936 = vmul.f32 %v2935, %v2582
        %v2937 = vmul.f32 %v2936, %v2935
        %v2938 = vmul.f32 0.5, %v2937
        %v2939 = vsub.f32 1.5, %v2938
        %v2940 = vmul.f32 %v2935, %v2939
        %vm2941 = vweird.f32 %v2582
        %vm2942 = vweird.f32 %v2935
        %vm2943 = vmor %vm2941, %vm2942
        %v2944 = vsel %vm2943, %v2935, %v2940
        %v2945 = vrsqrt.pop %v2583
        %v2946 = vmul.f32 %v2945, %v2583
        %v2947 = vmul.f32 %v2946, %v2945
        %v2948 = vmul.f32 0.5, %v2947
        %v2949 = vsub.f32 1.5, %v2948
        %v2950 = vmul.f32 %v2945, %v2949
        %vm2951 = vweird.f32 %v2583
        %vm2952 = vweird.f32 %v2945
        %vm2953 = vmor %vm2951, %vm2952
        %v2954 = vsel %vm2953, %v2945, %v2950
        %v2955 = vrsqrt.pop %v2584
        %v2956 = vmul.f32 %v2955, %v2584
        %v2957 = vmul.f32 %v2956, %v2955
        %v2958 = vmul.f32 0.5, %v2957
        %v2959 = vsub.f32 1.5, %v2958
        %v2960 = vmul.f32 %v2955, %v2959
        %vm2961 = vweird.f32 %v2584
        %vm2962 = vweird.f32 %v2955
        %vm2963 = vmor %vm2961, %vm2962
        %v2964 = vsel %vm2963, %v2955, %v2960
        %v2965 = vrsqrt.pop %v2585
        %v2966 = vmul.f32 %v2965, %v2585
        %v2967 = vmul.f32 %v2966, %v2965
        %v2968 = vmul.f32 0.5, %v2967
        %v2969 = vsub.f32 1.5, %v2968
        %v2970 = vmul.f32 %v2965, %v2969
        %vm2971 = vweird.f32 %v2585
        %vm2972 = vweird.f32 %v2965
        %vm2973 = vmor %vm2971, %vm2972
        %v2974 = vsel %vm2973, %v2965, %v2970
        %v2975 = vrsqrt.pop %v2586
        %v2976 = vmul.f32 %v2975, %v2586
        %v2977 = vmul.f32 %v2976, %v2975
        %v2978 = vmul.f32 0.5, %v2977
        %v2979 = vsub.f32 1.5, %v2978
        %v2980 = vmul.f32 %v2975, %v2979
        %vm2981 = vweird.f32 %v2586
        %vm2982 = vweird.f32 %v2975
        %vm2983 = vmor %vm2981, %vm2982
        %v2984 = vsel %vm2983, %v2975, %v2980
        %v2985 = vrsqrt.pop %v2587
        %v2986 = vmul.f32 %v2985, %v2587
        %v2987 = vmul.f32 %v2986, %v2985
        %v2988 = vmul.f32 0.5, %v2987
        %v2989 = vsub.f32 1.5, %v2988
        %v2990 = vmul.f32 %v2985, %v2989
        %vm2991 = vweird.f32 %v2587
        %vm2992 = vweird.f32 %v2985
        %vm2993 = vmor %vm2991, %vm2992
        %v2994 = vsel %vm2993, %v2985, %v2990
        %v2995 = vrsqrt.pop %v2588
        %v2996 = vmul.f32 %v2995, %v2588
        %v2997 = vmul.f32 %v2996, %v2995
        %v2998 = vmul.f32 0.5, %v2997
        %v2999 = vsub.f32 1.5, %v2998
        %v3000 = vmul.f32 %v2995, %v2999
        %vm3001 = vweird.f32 %v2588
        %vm3002 = vweird.f32 %v2995
        %vm3003 = vmor %vm3001, %vm3002
        %v3004 = vsel %vm3003, %v2995, %v3000
        %v3005 = vrsqrt.pop %v2589
        %v3006 = vmul.f32 %v3005, %v2589
        %v3007 = vmul.f32 %v3006, %v3005
        %v3008 = vmul.f32 0.5, %v3007
        %v3009 = vsub.f32 1.5, %v3008
        %v3010 = vmul.f32 %v3005, %v3009
        %vm3011 = vweird.f32 %v2589
        %vm3012 = vweird.f32 %v3005
        %vm3013 = vmor %vm3011, %vm3012
        %v3014 = vsel %vm3013, %v3005, %v3010
        %v3015 = vrsqrt.pop %v2590
        %v3016 = vmul.f32 %v3015, %v2590
        %v3017 = vmul.f32 %v3016, %v3015
        %v3018 = vmul.f32 0.5, %v3017
        %v3019 = vsub.f32 1.5, %v3018
        %v3020 = vmul.f32 %v3015, %v3019
        %vm3021 = vweird.f32 %v2590
        %vm3022 = vweird.f32 %v3015
        %vm3023 = vmor %vm3021, %vm3022
        %v3024 = vsel %vm3023, %v3015, %v3020
        %v3025 = vrsqrt.pop %v2591
        %v3026 = vmul.f32 %v3025, %v2591
        %v3027 = vmul.f32 %v3026, %v3025
        %v3028 = vmul.f32 0.5, %v3027
        %v3029 = vsub.f32 1.5, %v3028
        %v3030 = vmul.f32 %v3025, %v3029
        %vm3031 = vweird.f32 %v2591
        %vm3032 = vweird.f32 %v3025
        %vm3033 = vmor %vm3031, %vm3032
        %v3034 = vsel %vm3033, %v3025, %v3030
        %v3035 = vrsqrt.pop %v2592
        %v3036 = vmul.f32 %v3035, %v2592
        %v3037 = vmul.f32 %v3036, %v3035
        %v3038 = vmul.f32 0.5, %v3037
        %v3039 = vsub.f32 1.5, %v3038
        %v3040 = vmul.f32 %v3035, %v3039
        %vm3041 = vweird.f32 %v2592
        %vm3042 = vweird.f32 %v3035
        %vm3043 = vmor %vm3041, %vm3042
        %v3044 = vsel %vm3043, %v3035, %v3040
        %v3045 = vrsqrt.pop %v2593
        %v3046 = vmul.f32 %v3045, %v2593
        %v3047 = vmul.f32 %v3046, %v3045
        %v3048 = vmul.f32 0.5, %v3047
        %v3049 = vsub.f32 1.5, %v3048
        %v3050 = vmul.f32 %v3045, %v3049
        %vm3051 = vweird.f32 %v2593
        %vm3052 = vweird.f32 %v3045
        %vm3053 = vmor %vm3051, %vm3052
        %v3054 = vsel %vm3053, %v3045, %v3050
        %v3055 = vrsqrt.pop %v2594
        %v3056 = vmul.f32 %v3055, %v2594
        %v3057 = vmul.f32 %v3056, %v3055
        %v3058 = vmul.f32 0.5, %v3057
        %v3059 = vsub.f32 1.5, %v3058
        %v3060 = vmul.f32 %v3055, %v3059
        %vm3061 = vweird.f32 %v2594
        %vm3062 = vweird.f32 %v3055
        %vm3063 = vmor %vm3061, %vm3062
        %v3064 = vsel %vm3063, %v3055, %v3060
        %v3065 = vrsqrt.pop %v2595
        %v3066 = vmul.f32 %v3065, %v2595
        %v3067 = vmul.f32 %v3066, %v3065
        %v3068 = vmul.f32 0.5, %v3067
        %v3069 = vsub.f32 1.5, %v3068
        %v3070 = vmul.f32 %v3065, %v3069
        %vm3071 = vweird.f32 %v2595
        %vm3072 = vweird.f32 %v3065
        %vm3073 = vmor %vm3071, %vm3072
        %v3074 = vsel %vm3073, %v3065, %v3070
        %v3075 = vrsqrt.pop %v2596
        %v3076 = vmul.f32 %v3075, %v2596
        %v3077 = vmul.f32 %v3076, %v3075
        %v3078 = vmul.f32 0.5, %v3077
        %v3079 = vsub.f32 1.5, %v3078
        %v3080 = vmul.f32 %v3075, %v3079
        %vm3081 = vweird.f32 %v2596
        %vm3082 = vweird.f32 %v3075
        %vm3083 = vmor %vm3081, %vm3082
        %v3084 = vsel %vm3083, %v3075, %v3080
        %v3085 = vrsqrt.pop %v2597
        %v3086 = vmul.f32 %v3085, %v2597
        %v3087 = vmul.f32 %v3086, %v3085
        %v3088 = vmul.f32 0.5, %v3087
        %v3089 = vsub.f32 1.5, %v3088
        %v3090 = vmul.f32 %v3085, %v3089
        %vm3091 = vweird.f32 %v2597
        %vm3092 = vweird.f32 %v3085
        %vm3093 = vmor %vm3091, %vm3092
        %v3094 = vsel %vm3093, %v3085, %v3090
        %v3095 = vrsqrt.pop %v2598
        %v3096 = vmul.f32 %v3095, %v2598
        %v3097 = vmul.f32 %v3096, %v3095
        %v3098 = vmul.f32 0.5, %v3097
        %v3099 = vsub.f32 1.5, %v3098
        %v3100 = vmul.f32 %v3095, %v3099
        %vm3101 = vweird.f32 %v2598
        %vm3102 = vweird.f32 %v3095
        %vm3103 = vmor %vm3101, %vm3102
        %v3104 = vsel %vm3103, %v3095, %v3100
        %v3105 = vrsqrt.pop %v2599
        %v3106 = vmul.f32 %v3105, %v2599
        %v3107 = vmul.f32 %v3106, %v3105
        %v3108 = vmul.f32 0.5, %v3107
        %v3109 = vsub.f32 1.5, %v3108
        %v3110 = vmul.f32 %v3105, %v3109
        %vm3111 = vweird.f32 %v2599
        %vm3112 = vweird.f32 %v3105
        %vm3113 = vmor %vm3111, %vm3112
        %v3114 = vsel %vm3113, %v3105, %v3110
        %v3115 = vrsqrt.pop %v2600
        %v3116 = vmul.f32 %v3115, %v2600
        %v3117 = vmul.f32 %v3116, %v3115
        %v3118 = vmul.f32 0.5, %v3117
        %v3119 = vsub.f32 1.5, %v3118
        %v3120 = vmul.f32 %v3115, %v3119
        %vm3121 = vweird.f32 %v2600
        %vm3122 = vweird.f32 %v3115
        %vm3123 = vmor %vm3121, %vm3122
        %v3124 = vsel %vm3123, %v3115, %v3120
        %v3125 = vrsqrt.pop %v2601
        %v3126 = vmul.f32 %v3125, %v2601
        %v3127 = vmul.f32 %v3126, %v3125
        %v3128 = vmul.f32 0.5, %v3127
        %v3129 = vsub.f32 1.5, %v3128
        %v3130 = vmul.f32 %v3125, %v3129
        %vm3131 = vweird.f32 %v2601
        %vm3132 = vweird.f32 %v3125
        %vm3133 = vmor %vm3131, %vm3132
        %v3134 = vsel %vm3133, %v3125, %v3130
        %v3135 = vrsqrt.pop %v2602
        %v3136 = vmul.f32 %v3135, %v2602
        %v3137 = vmul.f32 %v3136, %v3135
        %v3138 = vmul.f32 0.5, %v3137
        %v3139 = vsub.f32 1.5, %v3138
        %v3140 = vmul.f32 %v3135, %v3139
        %vm3141 = vweird.f32 %v2602
        %vm3142 = vweird.f32 %v3135
        %vm3143 = vmor %vm3141, %vm3142
        %v3144 = vsel %vm3143, %v3135, %v3140
        %v3145 = vrsqrt.pop %v2603
        %v3146 = vmul.f32 %v3145, %v2603
        %v3147 = vmul.f32 %v3146, %v3145
        %v3148 = vmul.f32 0.5, %v3147
        %v3149 = vsub.f32 1.5, %v3148
        %v3150 = vmul.f32 %v3145, %v3149
        %vm3151 = vweird.f32 %v2603
        %vm3152 = vweird.f32 %v3145
        %vm3153 = vmor %vm3151, %vm3152
        %v3154 = vsel %vm3153, %v3145, %v3150
        %v3155 = vrsqrt.pop %v2604
        %v3156 = vmul.f32 %v3155, %v2604
        %v3157 = vmul.f32 %v3156, %v3155
        %v3158 = vmul.f32 0.5, %v3157
        %v3159 = vsub.f32 1.5, %v3158
        %v3160 = vmul.f32 %v3155, %v3159
        %vm3161 = vweird.f32 %v2604
        %vm3162 = vweird.f32 %v3155
        %vm3163 = vmor %vm3161, %vm3162
        %v3164 = vsel %vm3163, %v3155, %v3160
        %v3165 = vrsqrt.pop %v2605
        %v3166 = vmul.f32 %v3165, %v2605
        %v3167 = vmul.f32 %v3166, %v3165
        %v3168 = vmul.f32 0.5, %v3167
        %v3169 = vsub.f32 1.5, %v3168
        %v3170 = vmul.f32 %v3165, %v3169
        %vm3171 = vweird.f32 %v2605
        %vm3172 = vweird.f32 %v3165
        %vm3173 = vmor %vm3171, %vm3172
        %v3174 = vsel %vm3173, %v3165, %v3170
        %v3175 = vrsqrt.pop %v2606
        %v3176 = vmul.f32 %v3175, %v2606
        %v3177 = vmul.f32 %v3176, %v3175
        %v3178 = vmul.f32 0.5, %v3177
        %v3179 = vsub.f32 1.5, %v3178
        %v3180 = vmul.f32 %v3175, %v3179
        %vm3181 = vweird.f32 %v2606
        %vm3182 = vweird.f32 %v3175
        %vm3183 = vmor %vm3181, %vm3182
        %v3184 = vsel %vm3183, %v3175, %v3180
        %v3185 = vrsqrt.pop %v2607
        %v3186 = vmul.f32 %v3185, %v2607
        %v3187 = vmul.f32 %v3186, %v3185
        %v3188 = vmul.f32 0.5, %v3187
        %v3189 = vsub.f32 1.5, %v3188
        %v3190 = vmul.f32 %v3185, %v3189
        %vm3191 = vweird.f32 %v2607
        %vm3192 = vweird.f32 %v3185
        %vm3193 = vmor %vm3191, %vm3192
        %v3194 = vsel %vm3193, %v3185, %v3190
        %v3195 = vrsqrt.pop %v2608
        %v3196 = vmul.f32 %v3195, %v2608
        %v3197 = vmul.f32 %v3196, %v3195
        %v3198 = vmul.f32 0.5, %v3197
        %v3199 = vsub.f32 1.5, %v3198
        %v3200 = vmul.f32 %v3195, %v3199
        %vm3201 = vweird.f32 %v2608
        %vm3202 = vweird.f32 %v3195
        %vm3203 = vmor %vm3201, %vm3202
        %v3204 = vsel %vm3203, %v3195, %v3200
        %v3205 = vrsqrt.pop %v2609
        %v3206 = vmul.f32 %v3205, %v2609
        %v3207 = vmul.f32 %v3206, %v3205
        %v3208 = vmul.f32 0.5, %v3207
        %v3209 = vsub.f32 1.5, %v3208
        %v3210 = vmul.f32 %v3205, %v3209
        %vm3211 = vweird.f32 %v2609
        %vm3212 = vweird.f32 %v3205
        %vm3213 = vmor %vm3211, %vm3212
        %v3214 = vsel %vm3213, %v3205, %v3210
        %v3215 = vrsqrt.pop %v2610
        %v3216 = vmul.f32 %v3215, %v2610
        %v3217 = vmul.f32 %v3216, %v3215
        %v3218 = vmul.f32 0.5, %v3217
        %v3219 = vsub.f32 1.5, %v3218
        %v3220 = vmul.f32 %v3215, %v3219
        %vm3221 = vweird.f32 %v2610
        %vm3222 = vweird.f32 %v3215
        %vm3223 = vmor %vm3221, %vm3222
        %v3224 = vsel %vm3223, %v3215, %v3220
        %v3225 = vrsqrt.pop %v2611
        %v3226 = vmul.f32 %v3225, %v2611
        %v3227 = vmul.f32 %v3226, %v3225
        %v3228 = vmul.f32 0.5, %v3227
        %v3229 = vsub.f32 1.5, %v3228
        %v3230 = vmul.f32 %v3225, %v3229
        %vm3231 = vweird.f32 %v2611
        %vm3232 = vweird.f32 %v3225
        %vm3233 = vmor %vm3231, %vm3232
        %v3234 = vsel %vm3233, %v3225, %v3230
        %v3235 = vrsqrt.pop %v2612
        %v3236 = vmul.f32 %v3235, %v2612
        %v3237 = vmul.f32 %v3236, %v3235
        %v3238 = vmul.f32 0.5, %v3237
        %v3239 = vsub.f32 1.5, %v3238
        %v3240 = vmul.f32 %v3235, %v3239
        %vm3241 = vweird.f32 %v2612
        %vm3242 = vweird.f32 %v3235
        %vm3243 = vmor %vm3241, %vm3242
        %v3244 = vsel %vm3243, %v3235, %v3240
        %v3245 = vrsqrt.pop %v2613
        %v3246 = vmul.f32 %v3245, %v2613
        %v3247 = vmul.f32 %v3246, %v3245
        %v3248 = vmul.f32 0.5, %v3247
        %v3249 = vsub.f32 1.5, %v3248
        %v3250 = vmul.f32 %v3245, %v3249
        %vm3251 = vweird.f32 %v2613
        %vm3252 = vweird.f32 %v3245
        %vm3253 = vmor %vm3251, %vm3252
        %v3254 = vsel %vm3253, %v3245, %v3250
        %v3255 = vrsqrt.pop %v2614
        %v3256 = vmul.f32 %v3255, %v2614
        %v3257 = vmul.f32 %v3256, %v3255
        %v3258 = vmul.f32 0.5, %v3257
        %v3259 = vsub.f32 1.5, %v3258
        %v3260 = vmul.f32 %v3255, %v3259
        %vm3261 = vweird.f32 %v2614
        %vm3262 = vweird.f32 %v3255
        %vm3263 = vmor %vm3261, %vm3262
        %v3264 = vsel %vm3263, %v3255, %v3260
        %v3265 = vrsqrt.pop %v2615
        %v3266 = vmul.f32 %v3265, %v2615
        %v3267 = vmul.f32 %v3266, %v3265
        %v3268 = vmul.f32 0.5, %v3267
        %v3269 = vsub.f32 1.5, %v3268
        %v3270 = vmul.f32 %v3265, %v3269
        %vm3271 = vweird.f32 %v2615
        %vm3272 = vweird.f32 %v3265
        %vm3273 = vmor %vm3271, %vm3272
        %v3274 = vsel %vm3273, %v3265, %v3270
        %v3275 = vrsqrt.pop %v2616
        %v3276 = vmul.f32 %v3275, %v2616
        %v3277 = vmul.f32 %v3276, %v3275
        %v3278 = vmul.f32 0.5, %v3277
        %v3279 = vsub.f32 1.5, %v3278
        %v3280 = vmul.f32 %v3275, %v3279
        %vm3281 = vweird.f32 %v2616
        %vm3282 = vweird.f32 %v3275
        %vm3283 = vmor %vm3281, %vm3282
        %v3284 = vsel %vm3283, %v3275, %v3280
        %v3285 = vrsqrt.pop %v2617
        %v3286 = vmul.f32 %v3285, %v2617
        %v3287 = vmul.f32 %v3286, %v3285
        %v3288 = vmul.f32 0.5, %v3287
        %v3289 = vsub.f32 1.5, %v3288
        %v3290 = vmul.f32 %v3285, %v3289
        %vm3291 = vweird.f32 %v2617
        %vm3292 = vweird.f32 %v3285
        %vm3293 = vmor %vm3291, %vm3292
        %v3294 = vsel %vm3293, %v3285, %v3290
        %v3295 = vrsqrt.pop %v2618
        %v3296 = vmul.f32 %v3295, %v2618
        %v3297 = vmul.f32 %v3296, %v3295
        %v3298 = vmul.f32 0.5, %v3297
        %v3299 = vsub.f32 1.5, %v3298
        %v3300 = vmul.f32 %v3295, %v3299
        %vm3301 = vweird.f32 %v2618
        %vm3302 = vweird.f32 %v3295
        %vm3303 = vmor %vm3301, %vm3302
        %v3304 = vsel %vm3303, %v3295, %v3300
        %v3305 = vrsqrt.pop %v2619
        %v3306 = vmul.f32 %v3305, %v2619
        %v3307 = vmul.f32 %v3306, %v3305
        %v3308 = vmul.f32 0.5, %v3307
        %v3309 = vsub.f32 1.5, %v3308
        %v3310 = vmul.f32 %v3305, %v3309
        %vm3311 = vweird.f32 %v2619
        %vm3312 = vweird.f32 %v3305
        %vm3313 = vmor %vm3311, %vm3312
        %v3314 = vsel %vm3313, %v3305, %v3310
        %v3315 = vrsqrt.pop %v2620
        %v3316 = vmul.f32 %v3315, %v2620
        %v3317 = vmul.f32 %v3316, %v3315
        %v3318 = vmul.f32 0.5, %v3317
        %v3319 = vsub.f32 1.5, %v3318
        %v3320 = vmul.f32 %v3315, %v3319
        %vm3321 = vweird.f32 %v2620
        %vm3322 = vweird.f32 %v3315
        %vm3323 = vmor %vm3321, %vm3322
        %v3324 = vsel %vm3323, %v3315, %v3320
        %v3325 = vrsqrt.pop %v2621
        %v3326 = vmul.f32 %v3325, %v2621
        %v3327 = vmul.f32 %v3326, %v3325
        %v3328 = vmul.f32 0.5, %v3327
        %v3329 = vsub.f32 1.5, %v3328
        %v3330 = vmul.f32 %v3325, %v3329
        %vm3331 = vweird.f32 %v2621
        %vm3332 = vweird.f32 %v3325
        %vm3333 = vmor %vm3331, %vm3332
        %v3334 = vsel %vm3333, %v3325, %v3330
        %v3335 = vrsqrt.pop %v2622
        %v3336 = vmul.f32 %v3335, %v2622
        %v3337 = vmul.f32 %v3336, %v3335
        %v3338 = vmul.f32 0.5, %v3337
        %v3339 = vsub.f32 1.5, %v3338
        %v3340 = vmul.f32 %v3335, %v3339
        %vm3341 = vweird.f32 %v2622
        %vm3342 = vweird.f32 %v3335
        %vm3343 = vmor %vm3341, %vm3342
        %v3344 = vsel %vm3343, %v3335, %v3340
        %v3345 = vrsqrt.pop %v2623
        %v3346 = vmul.f32 %v3345, %v2623
        %v3347 = vmul.f32 %v3346, %v3345
        %v3348 = vmul.f32 0.5, %v3347
        %v3349 = vsub.f32 1.5, %v3348
        %v3350 = vmul.f32 %v3345, %v3349
        %vm3351 = vweird.f32 %v2623
        %vm3352 = vweird.f32 %v3345
        %vm3353 = vmor %vm3351, %vm3352
        %v3354 = vsel %vm3353, %v3345, %v3350
        %v3355 = vrsqrt.pop %v2624
        %v3356 = vmul.f32 %v3355, %v2624
        %v3357 = vmul.f32 %v3356, %v3355
        %v3358 = vmul.f32 0.5, %v3357
        %v3359 = vsub.f32 1.5, %v3358
        %v3360 = vmul.f32 %v3355, %v3359
        %vm3361 = vweird.f32 %v2624
        %vm3362 = vweird.f32 %v3355
        %vm3363 = vmor %vm3361, %vm3362
        %v3364 = vsel %vm3363, %v3355, %v3360
        %v3365 = vrsqrt.pop %v2625
        %v3366 = vmul.f32 %v3365, %v2625
        %v3367 = vmul.f32 %v3366, %v3365
        %v3368 = vmul.f32 0.5, %v3367
        %v3369 = vsub.f32 1.5, %v3368
        %v3370 = vmul.f32 %v3365, %v3369
        %vm3371 = vweird.f32 %v2625
        %vm3372 = vweird.f32 %v3365
        %vm3373 = vmor %vm3371, %vm3372
        %v3374 = vsel %vm3373, %v3365, %v3370
        %v3375 = vrsqrt.pop %v2626
        %v3376 = vmul.f32 %v3375, %v2626
        %v3377 = vmul.f32 %v3376, %v3375
        %v3378 = vmul.f32 0.5, %v3377
        %v3379 = vsub.f32 1.5, %v3378
        %v3380 = vmul.f32 %v3375, %v3379
        %vm3381 = vweird.f32 %v2626
        %vm3382 = vweird.f32 %v3375
        %vm3383 = vmor %vm3381, %vm3382
        %v3384 = vsel %vm3383, %v3375, %v3380
        %v3385 = vrsqrt.pop %v2627
        %v3386 = vmul.f32 %v3385, %v2627
        %v3387 = vmul.f32 %v3386, %v3385
        %v3388 = vmul.f32 0.5, %v3387
        %v3389 = vsub.f32 1.5, %v3388
        %v3390 = vmul.f32 %v3385, %v3389
        %vm3391 = vweird.f32 %v2627
        %vm3392 = vweird.f32 %v3385
        %vm3393 = vmor %vm3391, %vm3392
        %v3394 = vsel %vm3393, %v3385, %v3390
        %v3395 = vrsqrt.pop %v2628
        %v3396 = vmul.f32 %v3395, %v2628
        %v3397 = vmul.f32 %v3396, %v3395
        %v3398 = vmul.f32 0.5, %v3397
        %v3399 = vsub.f32 1.5, %v3398
        %v3400 = vmul.f32 %v3395, %v3399
        %vm3401 = vweird.f32 %v2628
        %vm3402 = vweird.f32 %v3395
        %vm3403 = vmor %vm3401, %vm3402
        %v3404 = vsel %vm3403, %v3395, %v3400
        %v3405 = vrsqrt.pop %v2629
        %v3406 = vmul.f32 %v3405, %v2629
        %v3407 = vmul.f32 %v3406, %v3405
        %v3408 = vmul.f32 0.5, %v3407
        %v3409 = vsub.f32 1.5, %v3408
        %v3410 = vmul.f32 %v3405, %v3409
        %vm3411 = vweird.f32 %v2629
        %vm3412 = vweird.f32 %v3405
        %vm3413 = vmor %vm3411, %vm3412
        %v3414 = vsel %vm3413, %v3405, %v3410
        %v3415 = vrsqrt.pop %v2630
        %v3416 = vmul.f32 %v3415, %v2630
        %v3417 = vmul.f32 %v3416, %v3415
        %v3418 = vmul.f32 0.5, %v3417
        %v3419 = vsub.f32 1.5, %v3418
        %v3420 = vmul.f32 %v3415, %v3419
        %vm3421 = vweird.f32 %v2630
        %vm3422 = vweird.f32 %v3415
        %vm3423 = vmor %vm3421, %vm3422
        %v3424 = vsel %vm3423, %v3415, %v3420
        %v3425 = vrsqrt.pop %v2631
        %v3426 = vmul.f32 %v3425, %v2631
        %v3427 = vmul.f32 %v3426, %v3425
        %v3428 = vmul.f32 0.5, %v3427
        %v3429 = vsub.f32 1.5, %v3428
        %v3430 = vmul.f32 %v3425, %v3429
        %vm3431 = vweird.f32 %v2631
        %vm3432 = vweird.f32 %v3425
        %vm3433 = vmor %vm3431, %vm3432
        %v3434 = vsel %vm3433, %v3425, %v3430
        %v3435 = vrsqrt.pop %v2632
        %v3436 = vmul.f32 %v3435, %v2632
        %v3437 = vmul.f32 %v3436, %v3435
        %v3438 = vmul.f32 0.5, %v3437
        %v3439 = vsub.f32 1.5, %v3438
        %v3440 = vmul.f32 %v3435, %v3439
        %vm3441 = vweird.f32 %v2632
        %vm3442 = vweird.f32 %v3435
        %vm3443 = vmor %vm3441, %vm3442
        %v3444 = vsel %vm3443, %v3435, %v3440
        %v3445 = vrsqrt.pop %v2633
        %v3446 = vmul.f32 %v3445, %v2633
        %v3447 = vmul.f32 %v3446, %v3445
        %v3448 = vmul.f32 0.5, %v3447
        %v3449 = vsub.f32 1.5, %v3448
        %v3450 = vmul.f32 %v3445, %v3449
        %vm3451 = vweird.f32 %v2633
        %vm3452 = vweird.f32 %v3445
        %vm3453 = vmor %vm3451, %vm3452
        %v3454 = vsel %vm3453, %v3445, %v3450
        %v3455 = vrsqrt.pop %v2634
        %v3456 = vmul.f32 %v3455, %v2634
        %v3457 = vmul.f32 %v3456, %v3455
        %v3458 = vmul.f32 0.5, %v3457
        %v3459 = vsub.f32 1.5, %v3458
        %v3460 = vmul.f32 %v3455, %v3459
        %vm3461 = vweird.f32 %v2634
        %vm3462 = vweird.f32 %v3455
        %vm3463 = vmor %vm3461, %vm3462
        %v3464 = vsel %vm3463, %v3455, %v3460
        %v3465 = vrsqrt.pop %v2635
        %v3466 = vmul.f32 %v3465, %v2635
        %v3467 = vmul.f32 %v3466, %v3465
        %v3468 = vmul.f32 0.5, %v3467
        %v3469 = vsub.f32 1.5, %v3468
        %v3470 = vmul.f32 %v3465, %v3469
        %vm3471 = vweird.f32 %v2635
        %vm3472 = vweird.f32 %v3465
        %vm3473 = vmor %vm3471, %vm3472
        %v3474 = vsel %vm3473, %v3465, %v3470
        %v3475 = vrsqrt.pop %v2636
        %v3476 = vmul.f32 %v3475, %v2636
        %v3477 = vmul.f32 %v3476, %v3475
        %v3478 = vmul.f32 0.5, %v3477
        %v3479 = vsub.f32 1.5, %v3478
        %v3480 = vmul.f32 %v3475, %v3479
        %vm3481 = vweird.f32 %v2636
        %vm3482 = vweird.f32 %v3475
        %vm3483 = vmor %vm3481, %vm3482
        %v3484 = vsel %vm3483, %v3475, %v3480
        %v3485 = vrsqrt.pop %v2637
        %v3486 = vmul.f32 %v3485, %v2637
        %v3487 = vmul.f32 %v3486, %v3485
        %v3488 = vmul.f32 0.5, %v3487
        %v3489 = vsub.f32 1.5, %v3488
        %v3490 = vmul.f32 %v3485, %v3489
        %vm3491 = vweird.f32 %v2637
        %vm3492 = vweird.f32 %v3485
        %vm3493 = vmor %vm3491, %vm3492
        %v3494 = vsel %vm3493, %v3485, %v3490
        %v3495 = vrsqrt.pop %v2638
        %v3496 = vmul.f32 %v3495, %v2638
        %v3497 = vmul.f32 %v3496, %v3495
        %v3498 = vmul.f32 0.5, %v3497
        %v3499 = vsub.f32 1.5, %v3498
        %v3500 = vmul.f32 %v3495, %v3499
        %vm3501 = vweird.f32 %v2638
        %vm3502 = vweird.f32 %v3495
        %vm3503 = vmor %vm3501, %vm3502
        %v3504 = vsel %vm3503, %v3495, %v3500
        %v3505 = vrsqrt.pop %v2639
        %v3506 = vmul.f32 %v3505, %v2639
        %v3507 = vmul.f32 %v3506, %v3505
        %v3508 = vmul.f32 0.5, %v3507
        %v3509 = vsub.f32 1.5, %v3508
        %v3510 = vmul.f32 %v3505, %v3509
        %vm3511 = vweird.f32 %v2639
        %vm3512 = vweird.f32 %v3505
        %vm3513 = vmor %vm3511, %vm3512
        %v3514 = vsel %vm3513, %v3505, %v3510
        %v3515 = vrsqrt.pop %v2640
        %v3516 = vmul.f32 %v3515, %v2640
        %v3517 = vmul.f32 %v3516, %v3515
        %v3518 = vmul.f32 0.5, %v3517
        %v3519 = vsub.f32 1.5, %v3518
        %v3520 = vmul.f32 %v3515, %v3519
        %vm3521 = vweird.f32 %v2640
        %vm3522 = vweird.f32 %v3515
        %vm3523 = vmor %vm3521, %vm3522
        %v3524 = vsel %vm3523, %v3515, %v3520
        %v3525 = vrsqrt.pop %v2641
        %v3526 = vmul.f32 %v3525, %v2641
        %v3527 = vmul.f32 %v3526, %v3525
        %v3528 = vmul.f32 0.5, %v3527
        %v3529 = vsub.f32 1.5, %v3528
        %v3530 = vmul.f32 %v3525, %v3529
        %vm3531 = vweird.f32 %v2641
        %vm3532 = vweird.f32 %v3525
        %vm3533 = vmor %vm3531, %vm3532
        %v3534 = vsel %vm3533, %v3525, %v3530
        %v3535 = vrsqrt.pop %v2642
        %v3536 = vmul.f32 %v3535, %v2642
        %v3537 = vmul.f32 %v3536, %v3535
        %v3538 = vmul.f32 0.5, %v3537
        %v3539 = vsub.f32 1.5, %v3538
        %v3540 = vmul.f32 %v3535, %v3539
        %vm3541 = vweird.f32 %v2642
        %vm3542 = vweird.f32 %v3535
        %vm3543 = vmor %vm3541, %vm3542
        %v3544 = vsel %vm3543, %v3535, %v3540
        %v3545 = vrsqrt.pop %v2643
        %v3546 = vmul.f32 %v3545, %v2643
        %v3547 = vmul.f32 %v3546, %v3545
        %v3548 = vmul.f32 0.5, %v3547
        %v3549 = vsub.f32 1.5, %v3548
        %v3550 = vmul.f32 %v3545, %v3549
        %vm3551 = vweird.f32 %v2643
        %vm3552 = vweird.f32 %v3545
        %vm3553 = vmor %vm3551, %vm3552
        %v3554 = vsel %vm3553, %v3545, %v3550
        %v3555 = vrsqrt.pop %v2644
        %v3556 = vmul.f32 %v3555, %v2644
        %v3557 = vmul.f32 %v3556, %v3555
        %v3558 = vmul.f32 0.5, %v3557
        %v3559 = vsub.f32 1.5, %v3558
        %v3560 = vmul.f32 %v3555, %v3559
        %vm3561 = vweird.f32 %v2644
        %vm3562 = vweird.f32 %v3555
        %vm3563 = vmor %vm3561, %vm3562
        %v3564 = vsel %vm3563, %v3555, %v3560
        %v3565 = vrsqrt.pop %v2645
        %v3566 = vmul.f32 %v3565, %v2645
        %v3567 = vmul.f32 %v3566, %v3565
        %v3568 = vmul.f32 0.5, %v3567
        %v3569 = vsub.f32 1.5, %v3568
        %v3570 = vmul.f32 %v3565, %v3569
        %vm3571 = vweird.f32 %v2645
        %vm3572 = vweird.f32 %v3565
        %vm3573 = vmor %vm3571, %vm3572
        %v3574 = vsel %vm3573, %v3565, %v3570
        %v3575 = vrsqrt.pop %v2646
        %v3576 = vmul.f32 %v3575, %v2646
        %v3577 = vmul.f32 %v3576, %v3575
        %v3578 = vmul.f32 0.5, %v3577
        %v3579 = vsub.f32 1.5, %v3578
        %v3580 = vmul.f32 %v3575, %v3579
        %vm3581 = vweird.f32 %v2646
        %vm3582 = vweird.f32 %v3575
        %vm3583 = vmor %vm3581, %vm3582
        %v3584 = vsel %vm3583, %v3575, %v3580
        %v3585 = vrsqrt.pop %v2647
        %v3586 = vmul.f32 %v3585, %v2647
        %v3587 = vmul.f32 %v3586, %v3585
        %v3588 = vmul.f32 0.5, %v3587
        %v3589 = vsub.f32 1.5, %v3588
        %v3590 = vmul.f32 %v3585, %v3589
        %vm3591 = vweird.f32 %v2647
        %vm3592 = vweird.f32 %v3585
        %vm3593 = vmor %vm3591, %vm3592
        %v3594 = vsel %vm3593, %v3585, %v3590
        %v3595 = vrsqrt.pop %v2648
        %v3596 = vmul.f32 %v3595, %v2648
        %v3597 = vmul.f32 %v3596, %v3595
        %v3598 = vmul.f32 0.5, %v3597
        %v3599 = vsub.f32 1.5, %v3598
        %v3600 = vmul.f32 %v3595, %v3599
        %vm3601 = vweird.f32 %v2648
        %vm3602 = vweird.f32 %v3595
        %vm3603 = vmor %vm3601, %vm3602
        %v3604 = vsel %vm3603, %v3595, %v3600
        %v3605 = vrsqrt.pop %v2649
        %v3606 = vmul.f32 %v3605, %v2649
        %v3607 = vmul.f32 %v3606, %v3605
        %v3608 = vmul.f32 0.5, %v3607
        %v3609 = vsub.f32 1.5, %v3608
        %v3610 = vmul.f32 %v3605, %v3609
        %vm3611 = vweird.f32 %v2649
        %vm3612 = vweird.f32 %v3605
        %vm3613 = vmor %vm3611, %vm3612
        %v3614 = vsel %vm3613, %v3605, %v3610
        %v3615 = vrsqrt.pop %v2650
        %v3616 = vmul.f32 %v3615, %v2650
        %v3617 = vmul.f32 %v3616, %v3615
        %v3618 = vmul.f32 0.5, %v3617
        %v3619 = vsub.f32 1.5, %v3618
        %v3620 = vmul.f32 %v3615, %v3619
        %vm3621 = vweird.f32 %v2650
        %vm3622 = vweird.f32 %v3615
        %vm3623 = vmor %vm3621, %vm3622
        %v3624 = vsel %vm3623, %v3615, %v3620
        %v3625 = vrsqrt.pop %v2651
        %v3626 = vmul.f32 %v3625, %v2651
        %v3627 = vmul.f32 %v3626, %v3625
        %v3628 = vmul.f32 0.5, %v3627
        %v3629 = vsub.f32 1.5, %v3628
        %v3630 = vmul.f32 %v3625, %v3629
        %vm3631 = vweird.f32 %v2651
        %vm3632 = vweird.f32 %v3625
        %vm3633 = vmor %vm3631, %vm3632
        %v3634 = vsel %vm3633, %v3625, %v3630
        %v3635 = vrsqrt.pop %v2652
        %v3636 = vmul.f32 %v3635, %v2652
        %v3637 = vmul.f32 %v3636, %v3635
        %v3638 = vmul.f32 0.5, %v3637
        %v3639 = vsub.f32 1.5, %v3638
        %v3640 = vmul.f32 %v3635, %v3639
        %vm3641 = vweird.f32 %v2652
        %vm3642 = vweird.f32 %v3635
        %vm3643 = vmor %vm3641, %vm3642
        %v3644 = vsel %vm3643, %v3635, %v3640
        %v3645 = vrsqrt.pop %v2653
        %v3646 = vmul.f32 %v3645, %v2653
        %v3647 = vmul.f32 %v3646, %v3645
        %v3648 = vmul.f32 0.5, %v3647
        %v3649 = vsub.f32 1.5, %v3648
        %v3650 = vmul.f32 %v3645, %v3649
        %vm3651 = vweird.f32 %v2653
        %vm3652 = vweird.f32 %v3645
        %vm3653 = vmor %vm3651, %vm3652
        %v3654 = vsel %vm3653, %v3645, %v3650
        %v3655 = vrsqrt.pop %v2654
        %v3656 = vmul.f32 %v3655, %v2654
        %v3657 = vmul.f32 %v3656, %v3655
        %v3658 = vmul.f32 0.5, %v3657
        %v3659 = vsub.f32 1.5, %v3658
        %v3660 = vmul.f32 %v3655, %v3659
        %vm3661 = vweird.f32 %v2654
        %vm3662 = vweird.f32 %v3655
        %vm3663 = vmor %vm3661, %vm3662
        %v3664 = vsel %vm3663, %v3655, %v3660
        %v3665 = vrsqrt.pop %v2655
        %v3666 = vmul.f32 %v3665, %v2655
        %v3667 = vmul.f32 %v3666, %v3665
        %v3668 = vmul.f32 0.5, %v3667
        %v3669 = vsub.f32 1.5, %v3668
        %v3670 = vmul.f32 %v3665, %v3669
        %vm3671 = vweird.f32 %v2655
        %vm3672 = vweird.f32 %v3665
        %vm3673 = vmor %vm3671, %vm3672
        %v3674 = vsel %vm3673, %v3665, %v3670
        %v3675 = vrsqrt.pop %v2656
        %v3676 = vmul.f32 %v3675, %v2656
        %v3677 = vmul.f32 %v3676, %v3675
        %v3678 = vmul.f32 0.5, %v3677
        %v3679 = vsub.f32 1.5, %v3678
        %v3680 = vmul.f32 %v3675, %v3679
        %vm3681 = vweird.f32 %v2656
        %vm3682 = vweird.f32 %v3675
        %vm3683 = vmor %vm3681, %vm3682
        %v3684 = vsel %vm3683, %v3675, %v3680
        %v3685 = vrsqrt.pop %v2657
        %v3686 = vmul.f32 %v3685, %v2657
        %v3687 = vmul.f32 %v3686, %v3685
        %v3688 = vmul.f32 0.5, %v3687
        %v3689 = vsub.f32 1.5, %v3688
        %v3690 = vmul.f32 %v3685, %v3689
        %vm3691 = vweird.f32 %v2657
        %vm3692 = vweird.f32 %v3685
        %vm3693 = vmor %vm3691, %vm3692
        %v3694 = vsel %vm3693, %v3685, %v3690
        %v3695 = vrsqrt.pop %v2658
        %v3696 = vmul.f32 %v3695, %v2658
        %v3697 = vmul.f32 %v3696, %v3695
        %v3698 = vmul.f32 0.5, %v3697
        %v3699 = vsub.f32 1.5, %v3698
        %v3700 = vmul.f32 %v3695, %v3699
        %vm3701 = vweird.f32 %v2658
        %vm3702 = vweird.f32 %v3695
        %vm3703 = vmor %vm3701, %vm3702
        %v3704 = vsel %vm3703, %v3695, %v3700
        %v3705 = vrsqrt.pop %v2659
        %v3706 = vmul.f32 %v3705, %v2659
        %v3707 = vmul.f32 %v3706, %v3705
        %v3708 = vmul.f32 0.5, %v3707
        %v3709 = vsub.f32 1.5, %v3708
        %v3710 = vmul.f32 %v3705, %v3709
        %vm3711 = vweird.f32 %v2659
        %vm3712 = vweird.f32 %v3705
        %vm3713 = vmor %vm3711, %vm3712
        %v3714 = vsel %vm3713, %v3705, %v3710
        %v3715 = vrsqrt.pop %v2660
        %v3716 = vmul.f32 %v3715, %v2660
        %v3717 = vmul.f32 %v3716, %v3715
        %v3718 = vmul.f32 0.5, %v3717
        %v3719 = vsub.f32 1.5, %v3718
        %v3720 = vmul.f32 %v3715, %v3719
        %vm3721 = vweird.f32 %v2660
        %vm3722 = vweird.f32 %v3715
        %vm3723 = vmor %vm3721, %vm3722
        %v3724 = vsel %vm3723, %v3715, %v3720
        %v3725 = vrsqrt.pop %v2661
        %v3726 = vmul.f32 %v3725, %v2661
        %v3727 = vmul.f32 %v3726, %v3725
        %v3728 = vmul.f32 0.5, %v3727
        %v3729 = vsub.f32 1.5, %v3728
        %v3730 = vmul.f32 %v3725, %v3729
        %vm3731 = vweird.f32 %v2661
        %vm3732 = vweird.f32 %v3725
        %vm3733 = vmor %vm3731, %vm3732
        %v3734 = vsel %vm3733, %v3725, %v3730
        %v3735 = vrsqrt.pop %v2662
        %v3736 = vmul.f32 %v3735, %v2662
        %v3737 = vmul.f32 %v3736, %v3735
        %v3738 = vmul.f32 0.5, %v3737
        %v3739 = vsub.f32 1.5, %v3738
        %v3740 = vmul.f32 %v3735, %v3739
        %vm3741 = vweird.f32 %v2662
        %vm3742 = vweird.f32 %v3735
        %vm3743 = vmor %vm3741, %vm3742
        %v3744 = vsel %vm3743, %v3735, %v3740
        %v3745 = vrsqrt.pop %v2663
        %v3746 = vmul.f32 %v3745, %v2663
        %v3747 = vmul.f32 %v3746, %v3745
        %v3748 = vmul.f32 0.5, %v3747
        %v3749 = vsub.f32 1.5, %v3748
        %v3750 = vmul.f32 %v3745, %v3749
        %vm3751 = vweird.f32 %v2663
        %vm3752 = vweird.f32 %v3745
        %vm3753 = vmor %vm3751, %vm3752
        %v3754 = vsel %vm3753, %v3745, %v3750
        %v3755 = vrsqrt.pop %v2664
        %v3756 = vmul.f32 %v3755, %v2664
        %v3757 = vmul.f32 %v3756, %v3755
        %v3758 = vmul.f32 0.5, %v3757
        %v3759 = vsub.f32 1.5, %v3758
        %v3760 = vmul.f32 %v3755, %v3759
        %vm3761 = vweird.f32 %v2664
        %vm3762 = vweird.f32 %v3755
        %vm3763 = vmor %vm3761, %vm3762
        %v3764 = vsel %vm3763, %v3755, %v3760
        %v3765 = vrsqrt.pop %v2665
        %v3766 = vmul.f32 %v3765, %v2665
        %v3767 = vmul.f32 %v3766, %v3765
        %v3768 = vmul.f32 0.5, %v3767
        %v3769 = vsub.f32 1.5, %v3768
        %v3770 = vmul.f32 %v3765, %v3769
        %vm3771 = vweird.f32 %v2665
        %vm3772 = vweird.f32 %v3765
        %vm3773 = vmor %vm3771, %vm3772
        %v3774 = vsel %vm3773, %v3765, %v3770
        %v3775 = vrsqrt.pop %v2666
        %v3776 = vmul.f32 %v3775, %v2666
        %v3777 = vmul.f32 %v3776, %v3775
        %v3778 = vmul.f32 0.5, %v3777
        %v3779 = vsub.f32 1.5, %v3778
        %v3780 = vmul.f32 %v3775, %v3779
        %vm3781 = vweird.f32 %v2666
        %vm3782 = vweird.f32 %v3775
        %vm3783 = vmor %vm3781, %vm3782
        %v3784 = vsel %vm3783, %v3775, %v3780
        %v3785 = vrsqrt.pop %v2667
        %v3786 = vmul.f32 %v3785, %v2667
        %v3787 = vmul.f32 %v3786, %v3785
        %v3788 = vmul.f32 0.5, %v3787
        %v3789 = vsub.f32 1.5, %v3788
        %v3790 = vmul.f32 %v3785, %v3789
        %vm3791 = vweird.f32 %v2667
        %vm3792 = vweird.f32 %v3785
        %vm3793 = vmor %vm3791, %vm3792
        %v3794 = vsel %vm3793, %v3785, %v3790
        %v3795 = vrsqrt.pop %v2668
        %v3796 = vmul.f32 %v3795, %v2668
        %v3797 = vmul.f32 %v3796, %v3795
        %v3798 = vmul.f32 0.5, %v3797
        %v3799 = vsub.f32 1.5, %v3798
        %v3800 = vmul.f32 %v3795, %v3799
        %vm3801 = vweird.f32 %v2668
        %vm3802 = vweird.f32 %v3795
        %vm3803 = vmor %vm3801, %vm3802
        %v3804 = vsel %vm3803, %v3795, %v3800
        %v3805 = vrsqrt.pop %v2669
        %v3806 = vmul.f32 %v3805, %v2669
        %v3807 = vmul.f32 %v3806, %v3805
        %v3808 = vmul.f32 0.5, %v3807
        %v3809 = vsub.f32 1.5, %v3808
        %v3810 = vmul.f32 %v3805, %v3809
        %vm3811 = vweird.f32 %v2669
        %vm3812 = vweird.f32 %v3805
        %vm3813 = vmor %vm3811, %vm3812
        %v3814 = vsel %vm3813, %v3805, %v3810
        %v3815 = vrsqrt.pop %v2670
        %v3816 = vmul.f32 %v3815, %v2670
        %v3817 = vmul.f32 %v3816, %v3815
        %v3818 = vmul.f32 0.5, %v3817
        %v3819 = vsub.f32 1.5, %v3818
        %v3820 = vmul.f32 %v3815, %v3819
        %vm3821 = vweird.f32 %v2670
        %vm3822 = vweird.f32 %v3815
        %vm3823 = vmor %vm3821, %vm3822
        %v3824 = vsel %vm3823, %v3815, %v3820
        %v3825 = vrsqrt.pop %v2671
        %v3826 = vmul.f32 %v3825, %v2671
        %v3827 = vmul.f32 %v3826, %v3825
        %v3828 = vmul.f32 0.5, %v3827
        %v3829 = vsub.f32 1.5, %v3828
        %v3830 = vmul.f32 %v3825, %v3829
        %vm3831 = vweird.f32 %v2671
        %vm3832 = vweird.f32 %v3825
        %vm3833 = vmor %vm3831, %vm3832
        %v3834 = vsel %vm3833, %v3825, %v3830
        %v3835 = vrsqrt.pop %v2672
        %v3836 = vmul.f32 %v3835, %v2672
        %v3837 = vmul.f32 %v3836, %v3835
        %v3838 = vmul.f32 0.5, %v3837
        %v3839 = vsub.f32 1.5, %v3838
        %v3840 = vmul.f32 %v3835, %v3839
        %vm3841 = vweird.f32 %v2672
        %vm3842 = vweird.f32 %v3835
        %vm3843 = vmor %vm3841, %vm3842
        %v3844 = vsel %vm3843, %v3835, %v3840
        %v3845 = vrsqrt.pop %v2673
        %v3846 = vmul.f32 %v3845, %v2673
        %v3847 = vmul.f32 %v3846, %v3845
        %v3848 = vmul.f32 0.5, %v3847
        %v3849 = vsub.f32 1.5, %v3848
        %v3850 = vmul.f32 %v3845, %v3849
        %vm3851 = vweird.f32 %v2673
        %vm3852 = vweird.f32 %v3845
        %vm3853 = vmor %vm3851, %vm3852
        %v3854 = vsel %vm3853, %v3845, %v3850
        %v3855 = vrsqrt.pop %v2674
        %v3856 = vmul.f32 %v3855, %v2674
        %v3857 = vmul.f32 %v3856, %v3855
        %v3858 = vmul.f32 0.5, %v3857
        %v3859 = vsub.f32 1.5, %v3858
        %v3860 = vmul.f32 %v3855, %v3859
        %vm3861 = vweird.f32 %v2674
        %vm3862 = vweird.f32 %v3855
        %vm3863 = vmor %vm3861, %vm3862
        %v3864 = vsel %vm3863, %v3855, %v3860
        %v3865 = vrsqrt.pop %v2675
        %v3866 = vmul.f32 %v3865, %v2675
        %v3867 = vmul.f32 %v3866, %v3865
        %v3868 = vmul.f32 0.5, %v3867
        %v3869 = vsub.f32 1.5, %v3868
        %v3870 = vmul.f32 %v3865, %v3869
        %vm3871 = vweird.f32 %v2675
        %vm3872 = vweird.f32 %v3865
        %vm3873 = vmor %vm3871, %vm3872
        %v3874 = vsel %vm3873, %v3865, %v3870
        %v3875 = vrsqrt.pop %v2676
        %v3876 = vmul.f32 %v3875, %v2676
        %v3877 = vmul.f32 %v3876, %v3875
        %v3878 = vmul.f32 0.5, %v3877
        %v3879 = vsub.f32 1.5, %v3878
        %v3880 = vmul.f32 %v3875, %v3879
        %vm3881 = vweird.f32 %v2676
        %vm3882 = vweird.f32 %v3875
        %vm3883 = vmor %vm3881, %vm3882
        %v3884 = vsel %vm3883, %v3875, %v3880
        %v3885 = vrsqrt.pop %v2677
        %v3886 = vmul.f32 %v3885, %v2677
        %v3887 = vmul.f32 %v3886, %v3885
        %v3888 = vmul.f32 0.5, %v3887
        %v3889 = vsub.f32 1.5, %v3888
        %v3890 = vmul.f32 %v3885, %v3889
        %vm3891 = vweird.f32 %v2677
        %vm3892 = vweird.f32 %v3885
        %vm3893 = vmor %vm3891, %vm3892
        %v3894 = vsel %vm3893, %v3885, %v3890
        %v3895 = vrsqrt.pop %v2678
        %v3896 = vmul.f32 %v3895, %v2678
        %v3897 = vmul.f32 %v3896, %v3895
        %v3898 = vmul.f32 0.5, %v3897
        %v3899 = vsub.f32 1.5, %v3898
        %v3900 = vmul.f32 %v3895, %v3899
        %vm3901 = vweird.f32 %v2678
        %vm3902 = vweird.f32 %v3895
        %vm3903 = vmor %vm3901, %vm3902
        %v3904 = vsel %vm3903, %v3895, %v3900
        %v3905 = vrsqrt.pop %v2679
        %v3906 = vmul.f32 %v3905, %v2679
        %v3907 = vmul.f32 %v3906, %v3905
        %v3908 = vmul.f32 0.5, %v3907
        %v3909 = vsub.f32 1.5, %v3908
        %v3910 = vmul.f32 %v3905, %v3909
        %vm3911 = vweird.f32 %v2679
        %vm3912 = vweird.f32 %v3905
        %vm3913 = vmor %vm3911, %vm3912
        %v3914 = vsel %vm3913, %v3905, %v3910
        %v3915 = vrsqrt.pop %v2680
        %v3916 = vmul.f32 %v3915, %v2680
        %v3917 = vmul.f32 %v3916, %v3915
        %v3918 = vmul.f32 0.5, %v3917
        %v3919 = vsub.f32 1.5, %v3918
        %v3920 = vmul.f32 %v3915, %v3919
        %vm3921 = vweird.f32 %v2680
        %vm3922 = vweird.f32 %v3915
        %vm3923 = vmor %vm3921, %vm3922
        %v3924 = vsel %vm3923, %v3915, %v3920
        %v3925 = vrsqrt.pop %v2681
        %v3926 = vmul.f32 %v3925, %v2681
        %v3927 = vmul.f32 %v3926, %v3925
        %v3928 = vmul.f32 0.5, %v3927
        %v3929 = vsub.f32 1.5, %v3928
        %v3930 = vmul.f32 %v3925, %v3929
        %vm3931 = vweird.f32 %v2681
        %vm3932 = vweird.f32 %v3925
        %vm3933 = vmor %vm3931, %vm3932
        %v3934 = vsel %vm3933, %v3925, %v3930
        %v3935 = vrsqrt.pop %v2682
        %v3936 = vmul.f32 %v3935, %v2682
        %v3937 = vmul.f32 %v3936, %v3935
        %v3938 = vmul.f32 0.5, %v3937
        %v3939 = vsub.f32 1.5, %v3938
        %v3940 = vmul.f32 %v3935, %v3939
        %vm3941 = vweird.f32 %v2682
        %vm3942 = vweird.f32 %v3935
        %vm3943 = vmor %vm3941, %vm3942
        %v3944 = vsel %vm3943, %v3935, %v3940
        %v3945 = vrsqrt.pop %v2683
        %v3946 = vmul.f32 %v3945, %v2683
        %v3947 = vmul.f32 %v3946, %v3945
        %v3948 = vmul.f32 0.5, %v3947
        %v3949 = vsub.f32 1.5, %v3948
        %v3950 = vmul.f32 %v3945, %v3949
        %vm3951 = vweird.f32 %v2683
        %vm3952 = vweird.f32 %v3945
        %vm3953 = vmor %vm3951, %vm3952
        %v3954 = vsel %vm3953, %v3945, %v3950
        %v3955 = vrsqrt.pop %v2684
        %v3956 = vmul.f32 %v3955, %v2684
        %v3957 = vmul.f32 %v3956, %v3955
        %v3958 = vmul.f32 0.5, %v3957
        %v3959 = vsub.f32 1.5, %v3958
        %v3960 = vmul.f32 %v3955, %v3959
        %vm3961 = vweird.f32 %v2684
        %vm3962 = vweird.f32 %v3955
        %vm3963 = vmor %vm3961, %vm3962
        %v3964 = vsel %vm3963, %v3955, %v3960
        %v3965 = vmul.f32 %v1406, %v2694
        %v3966 = vmul.f32 %v1409, %v2704
        %v3967 = vmul.f32 %v1412, %v2714
        %v3968 = vmul.f32 %v1415, %v2724
        %v3969 = vmul.f32 %v1418, %v2734
        %v3970 = vmul.f32 %v1421, %v2744
        %v3971 = vmul.f32 %v1424, %v2754
        %v3972 = vmul.f32 %v1427, %v2764
        %v3973 = vmul.f32 %v1430, %v2774
        %v3974 = vmul.f32 %v1433, %v2784
        %v3975 = vmul.f32 %v1436, %v2794
        %v3976 = vmul.f32 %v1439, %v2804
        %v3977 = vmul.f32 %v1442, %v2814
        %v3978 = vmul.f32 %v1445, %v2824
        %v3979 = vmul.f32 %v1448, %v2834
        %v3980 = vmul.f32 %v1451, %v2844
        %v3981 = vmul.f32 %v1454, %v2854
        %v3982 = vmul.f32 %v1457, %v2864
        %v3983 = vmul.f32 %v1460, %v2874
        %v3984 = vmul.f32 %v1463, %v2884
        %v3985 = vmul.f32 %v1466, %v2894
        %v3986 = vmul.f32 %v1469, %v2904
        %v3987 = vmul.f32 %v1472, %v2914
        %v3988 = vmul.f32 %v1475, %v2924
        %v3989 = vmul.f32 %v1478, %v2934
        %v3990 = vmul.f32 %v1481, %v2944
        %v3991 = vmul.f32 %v1484, %v2954
        %v3992 = vmul.f32 %v1487, %v2964
        %v3993 = vmul.f32 %v1490, %v2974
        %v3994 = vmul.f32 %v1493, %v2984
        %v3995 = vmul.f32 %v1496, %v2994
        %v3996 = vmul.f32 %v1499, %v3004
        %v3997 = vmul.f32 %v1502, %v3014
        %v3998 = vmul.f32 %v1505, %v3024
        %v3999 = vmul.f32 %v1508, %v3034
        %v4000 = vmul.f32 %v1511, %v3044
        %v4001 = vmul.f32 %v1514, %v3054
        %v4002 = vmul.f32 %v1517, %v3064
        %v4003 = vmul.f32 %v1520, %v3074
        %v4004 = vmul.f32 %v1523, %v3084
        %v4005 = vmul.f32 %v1526, %v3094
        %v4006 = vmul.f32 %v1529, %v3104
        %v4007 = vmul.f32 %v1532, %v3114
        %v4008 = vmul.f32 %v1535, %v3124
        %v4009 = vmul.f32 %v1538, %v3134
        %v4010 = vmul.f32 %v1541, %v3144
        %v4011 = vmul.f32 %v1544, %v3154
        %v4012 = vmul.f32 %v1547, %v3164
        %v4013 = vmul.f32 %v1550, %v3174
        %v4014 = vmul.f32 %v1553, %v3184
        %v4015 = vmul.f32 %v1556, %v3194
        %v4016 = vmul.f32 %v1559, %v3204
        %v4017 = vmul.f32 %v1562, %v3214
        %v4018 = vmul.f32 %v1565, %v3224
        %v4019 = vmul.f32 %v1568, %v3234
        %v4020 = vmul.f32 %v1571, %v3244
        %v4021 = vmul.f32 %v1574, %v3254
        %v4022 = vmul.f32 %v1577, %v3264
        %v4023 = vmul.f32 %v1580, %v3274
        %v4024 = vmul.f32 %v1583, %v3284
        %v4025 = vmul.f32 %v1586, %v3294
        %v4026 = vmul.f32 %v1589, %v3304
        %v4027 = vmul.f32 %v1592, %v3314
        %v4028 = vmul.f32 %v1595, %v3324
        %v4029 = vmul.f32 %v1598, %v3334
        %v4030 = vmul.f32 %v1601, %v3344
        %v4031 = vmul.f32 %v1604, %v3354
        %v4032 = vmul.f32 %v1607, %v3364
        %v4033 = vmul.f32 %v1610, %v3374
        %v4034 = vmul.f32 %v1613, %v3384
        %v4035 = vmul.f32 %v1616, %v3394
        %v4036 = vmul.f32 %v1619, %v3404
        %v4037 = vmul.f32 %v1622, %v3414
        %v4038 = vmul.f32 %v1625, %v3424
        %v4039 = vmul.f32 %v1628, %v3434
        %v4040 = vmul.f32 %v1631, %v3444
        %v4041 = vmul.f32 %v1634, %v3454
        %v4042 = vmul.f32 %v1637, %v3464
        %v4043 = vmul.f32 %v1640, %v3474
        %v4044 = vmul.f32 %v1643, %v3484
        %v4045 = vmul.f32 %v1646, %v3494
        %v4046 = vmul.f32 %v1649, %v3504
        %v4047 = vmul.f32 %v1652, %v3514
        %v4048 = vmul.f32 %v1655, %v3524
        %v4049 = vmul.f32 %v1658, %v3534
        %v4050 = vmul.f32 %v1661, %v3544
        %v4051 = vmul.f32 %v1664, %v3554
        %v4052 = vmul.f32 %v1667, %v3564
        %v4053 = vmul.f32 %v1670, %v3574
        %v4054 = vmul.f32 %v1673, %v3584
        %v4055 = vmul.f32 %v1676, %v3594
        %v4056 = vmul.f32 %v1679, %v3604
        %v4057 = vmul.f32 %v1682, %v3614
        %v4058 = vmul.f32 %v1685, %v3624
        %v4059 = vmul.f32 %v1688, %v3634
        %v4060 = vmul.f32 %v1691, %v3644
        %v4061 = vmul.f32 %v1694, %v3654
        %v4062 = vmul.f32 %v1697, %v3664
        %v4063 = vmul.f32 %v1700, %v3674
        %v4064 = vmul.f32 %v1703, %v3684
        %v4065 = vmul.f32 %v1706, %v3694
        %v4066 = vmul.f32 %v1709, %v3704
        %v4067 = vmul.f32 %v1712, %v3714
        %v4068 = vmul.f32 %v1715, %v3724
        %v4069 = vmul.f32 %v1718, %v3734
        %v4070 = vmul.f32 %v1721, %v3744
        %v4071 = vmul.f32 %v1724, %v3754
        %v4072 = vmul.f32 %v1727, %v3764
        %v4073 = vmul.f32 %v1730, %v3774
        %v4074 = vmul.f32 %v1733, %v3784
        %v4075 = vmul.f32 %v1736, %v3794
        %v4076 = vmul.f32 %v1739, %v3804
        %v4077 = vmul.f32 %v1742, %v3814
        %v4078 = vmul.f32 %v1745, %v3824
        %v4079 = vmul.f32 %v1748, %v3834
        %v4080 = vmul.f32 %v1751, %v3844
        %v4081 = vmul.f32 %v1754, %v3854
        %v4082 = vmul.f32 %v1757, %v3864
        %v4083 = vmul.f32 %v1760, %v3874
        %v4084 = vmul.f32 %v1763, %v3884
        %v4085 = vmul.f32 %v1766, %v3894
        %v4086 = vmul.f32 %v1769, %v3904
        %v4087 = vmul.f32 %v1772, %v3914
        %v4088 = vmul.f32 %v1775, %v3924
        %v4089 = vmul.f32 %v1778, %v3934
        %v4090 = vmul.f32 %v1781, %v3944
        %v4091 = vmul.f32 %v1784, %v3954
        %v4092 = vmul.f32 %v1787, %v3964
        %v4093 = vld [vmem:[%s5] sm:$0xff]
        %v4094 = vld [vmem:[%s5 + $0x8] sm:$0xff]
        %vm4095 = vcmask 130048
        %v4097 = vsel %vm4095, %v2694, 0
        %v4100 = vsel %vm4095, %v2704, 0
        %v4103 = vsel %vm4095, %v2714, 0
        %v4106 = vsel %vm4095, %v2724, 0
        %v4109 = vsel %vm4095, %v2734, 0
        %v4112 = vsel %vm4095, %v2744, 0
        %v4115 = vsel %vm4095, %v2754, 0
        %v4118 = vsel %vm4095, %v2764, 0
        %v4121 = vsel %vm4095, %v2774, 0
        %v4124 = vsel %vm4095, %v2784, 0
        %v4127 = vsel %vm4095, %v2794, 0
        %v4130 = vsel %vm4095, %v2804, 0
        %v4133 = vsel %vm4095, %v2814, 0
        %v4136 = vsel %vm4095, %v2824, 0
        %v4139 = vsel %vm4095, %v2834, 0
        %v4142 = vsel %vm4095, %v2844, 0
        %v4145 = vsel %vm4095, %v2854, 0
        %v4148 = vsel %vm4095, %v2864, 0
        %v4151 = vsel %vm4095, %v2874, 0
        %v4154 = vsel %vm4095, %v2884, 0
        %v4157 = vsel %vm4095, %v2894, 0
        %v4160 = vsel %vm4095, %v2904, 0
        %v4163 = vsel %vm4095, %v2914, 0
        %v4166 = vsel %vm4095, %v2924, 0
        %v4169 = vsel %vm4095, %v2934, 0
        %v4172 = vsel %vm4095, %v2944, 0
        %v4175 = vsel %vm4095, %v2954, 0
        %v4178 = vsel %vm4095, %v2964, 0
        %v4181 = vsel %vm4095, %v2974, 0
        %v4184 = vsel %vm4095, %v2984, 0
        %v4187 = vsel %vm4095, %v2994, 0
        %v4190 = vsel %vm4095, %v3004, 0
        %v4193 = vsel %vm4095, %v3014, 0
        %v4196 = vsel %vm4095, %v3024, 0
        %v4199 = vsel %vm4095, %v3034, 0
        %v4202 = vsel %vm4095, %v3044, 0
        %v4205 = vsel %vm4095, %v3054, 0
        %v4208 = vsel %vm4095, %v3064, 0
        %v4211 = vsel %vm4095, %v3074, 0
        %v4214 = vsel %vm4095, %v3084, 0
        %v4217 = vsel %vm4095, %v3094, 0
        %v4220 = vsel %vm4095, %v3104, 0
        %v4223 = vsel %vm4095, %v3114, 0
        %v4226 = vsel %vm4095, %v3124, 0
        %v4229 = vsel %vm4095, %v3134, 0
        %v4232 = vsel %vm4095, %v3144, 0
        %v4235 = vsel %vm4095, %v3154, 0
        %v4238 = vsel %vm4095, %v3164, 0
        %v4241 = vsel %vm4095, %v3174, 0
        %v4244 = vsel %vm4095, %v3184, 0
        %v4247 = vsel %vm4095, %v3194, 0
        %v4250 = vsel %vm4095, %v3204, 0
        %v4253 = vsel %vm4095, %v3214, 0
        %v4256 = vsel %vm4095, %v3224, 0
        %v4259 = vsel %vm4095, %v3234, 0
        %v4262 = vsel %vm4095, %v3244, 0
        %v4265 = vsel %vm4095, %v3254, 0
        %v4268 = vsel %vm4095, %v3264, 0
        %v4271 = vsel %vm4095, %v3274, 0
        %v4274 = vsel %vm4095, %v3284, 0
        %v4277 = vsel %vm4095, %v3294, 0
        %v4280 = vsel %vm4095, %v3304, 0
        %v4283 = vsel %vm4095, %v3314, 0
        %v4286 = vsel %vm4095, %v3324, 0
        %v4289 = vsel %vm4095, %v3334, 0
        %v4292 = vsel %vm4095, %v3344, 0
        %v4295 = vsel %vm4095, %v3354, 0
        %v4298 = vsel %vm4095, %v3364, 0
        %v4301 = vsel %vm4095, %v3374, 0
        %v4304 = vsel %vm4095, %v3384, 0
        %v4307 = vsel %vm4095, %v3394, 0
        %v4310 = vsel %vm4095, %v3404, 0
        %v4313 = vsel %vm4095, %v3414, 0
        %v4316 = vsel %vm4095, %v3424, 0
        %v4319 = vsel %vm4095, %v3434, 0
        %v4322 = vsel %vm4095, %v3444, 0
        %v4325 = vsel %vm4095, %v3454, 0
        %v4328 = vsel %vm4095, %v3464, 0
        %v4331 = vsel %vm4095, %v3474, 0
        %v4334 = vsel %vm4095, %v3484, 0
        %v4337 = vsel %vm4095, %v3494, 0
        %v4340 = vsel %vm4095, %v3504, 0
        %v4343 = vsel %vm4095, %v3514, 0
        %v4346 = vsel %vm4095, %v3524, 0
        %v4349 = vsel %vm4095, %v3534, 0
        %v4352 = vsel %vm4095, %v3544, 0
        %v4355 = vsel %vm4095, %v3554, 0
        %v4358 = vsel %vm4095, %v3564, 0
        %v4361 = vsel %vm4095, %v3574, 0
        %v4364 = vsel %vm4095, %v3584, 0
        %v4367 = vsel %vm4095, %v3594, 0
        %v4370 = vsel %vm4095, %v3604, 0
        %v4373 = vsel %vm4095, %v3614, 0
        %v4376 = vsel %vm4095, %v3624, 0
        %v4379 = vsel %vm4095, %v3634, 0
        %v4382 = vsel %vm4095, %v3644, 0
        %v4385 = vsel %vm4095, %v3654, 0
        %v4388 = vsel %vm4095, %v3664, 0
        %v4391 = vsel %vm4095, %v3674, 0
        %v4394 = vsel %vm4095, %v3684, 0
        %v4397 = vsel %vm4095, %v3694, 0
        %v4400 = vsel %vm4095, %v3704, 0
        %v4403 = vsel %vm4095, %v3714, 0
        %v4406 = vsel %vm4095, %v3724, 0
        %v4409 = vsel %vm4095, %v3734, 0
        %v4412 = vsel %vm4095, %v3744, 0
        %v4415 = vsel %vm4095, %v3754, 0
        %v4418 = vsel %vm4095, %v3764, 0
        %v4421 = vsel %vm4095, %v3774, 0
        %v4424 = vsel %vm4095, %v3784, 0
        %v4427 = vsel %vm4095, %v3794, 0
        %v4430 = vsel %vm4095, %v3804, 0
        %v4433 = vsel %vm4095, %v3814, 0
        %v4436 = vsel %vm4095, %v3824, 0
        %v4439 = vsel %vm4095, %v3834, 0
        %v4442 = vsel %vm4095, %v3844, 0
        %v4445 = vsel %vm4095, %v3854, 0
        %v4448 = vsel %vm4095, %v3864, 0
        %v4451 = vsel %vm4095, %v3874, 0
        %v4454 = vsel %vm4095, %v3884, 0
        %v4457 = vsel %vm4095, %v3894, 0
        %v4460 = vsel %vm4095, %v3904, 0
        %v4463 = vsel %vm4095, %v3914, 0
        %v4466 = vsel %vm4095, %v3924, 0
        %v4469 = vsel %vm4095, %v3934, 0
        %v4472 = vsel %vm4095, %v3944, 0
        %v4475 = vsel %vm4095, %v3954, 0
        %v4478 = vsel %vm4095, %v3964, 0
        %v4481 = vsel %vm4095, %v3965, 0
        %v4484 = vsel %vm4095, %v3966, 0
        %v4487 = vsel %vm4095, %v3967, 0
        %v4490 = vsel %vm4095, %v3968, 0
        %v4493 = vsel %vm4095, %v3969, 0
        %v4496 = vsel %vm4095, %v3970, 0
        %v4499 = vsel %vm4095, %v3971, 0
        %v4502 = vsel %vm4095, %v3972, 0
        %v4505 = vsel %vm4095, %v3973, 0
        %v4508 = vsel %vm4095, %v3974, 0
        %v4511 = vsel %vm4095, %v3975, 0
        %v4514 = vsel %vm4095, %v3976, 0
        %v4517 = vsel %vm4095, %v3977, 0
        %v4520 = vsel %vm4095, %v3978, 0
        %v4523 = vsel %vm4095, %v3979, 0
        %v4526 = vsel %vm4095, %v3980, 0
        %v4529 = vsel %vm4095, %v3981, 0
        %v4532 = vsel %vm4095, %v3982, 0
        %v4535 = vsel %vm4095, %v3983, 0
        %v4538 = vsel %vm4095, %v3984, 0
        %v4541 = vsel %vm4095, %v3985, 0
        %v4544 = vsel %vm4095, %v3986, 0
        %v4547 = vsel %vm4095, %v3987, 0
        %v4550 = vsel %vm4095, %v3988, 0
        %v4553 = vsel %vm4095, %v3989, 0
        %v4556 = vsel %vm4095, %v3990, 0
        %v4559 = vsel %vm4095, %v3991, 0
        %v4562 = vsel %vm4095, %v3992, 0
        %v4565 = vsel %vm4095, %v3993, 0
        %v4568 = vsel %vm4095, %v3994, 0
        %v4571 = vsel %vm4095, %v3995, 0
        %v4574 = vsel %vm4095, %v3996, 0
        %v4577 = vsel %vm4095, %v3997, 0
        %v4580 = vsel %vm4095, %v3998, 0
        %v4583 = vsel %vm4095, %v3999, 0
        %v4586 = vsel %vm4095, %v4000, 0
        %v4589 = vsel %vm4095, %v4001, 0
        %v4592 = vsel %vm4095, %v4002, 0
        %v4595 = vsel %vm4095, %v4003, 0
        %v4598 = vsel %vm4095, %v4004, 0
        %v4601 = vsel %vm4095, %v4005, 0
        %v4604 = vsel %vm4095, %v4006, 0
        %v4607 = vsel %vm4095, %v4007, 0
        %v4610 = vsel %vm4095, %v4008, 0
        %v4613 = vsel %vm4095, %v4009, 0
        %v4616 = vsel %vm4095, %v4010, 0
        %v4619 = vsel %vm4095, %v4011, 0
        %v4622 = vsel %vm4095, %v4012, 0
        %v4625 = vsel %vm4095, %v4013, 0
        %v4628 = vsel %vm4095, %v4014, 0
        %v4631 = vsel %vm4095, %v4015, 0
        %v4634 = vsel %vm4095, %v4016, 0
        %v4637 = vsel %vm4095, %v4017, 0
        %v4640 = vsel %vm4095, %v4018, 0
        %v4643 = vsel %vm4095, %v4019, 0
        %v4646 = vsel %vm4095, %v4020, 0
        %v4649 = vsel %vm4095, %v4021, 0
        %v4652 = vsel %vm4095, %v4022, 0
        %v4655 = vsel %vm4095, %v4023, 0
        %v4658 = vsel %vm4095, %v4024, 0
        %v4661 = vsel %vm4095, %v4025, 0
        %v4664 = vsel %vm4095, %v4026, 0
        %v4667 = vsel %vm4095, %v4027, 0
        %v4670 = vsel %vm4095, %v4028, 0
        %v4673 = vsel %vm4095, %v4029, 0
        %v4676 = vsel %vm4095, %v4030, 0
        %v4679 = vsel %vm4095, %v4031, 0
        %v4682 = vsel %vm4095, %v4032, 0
        %v4685 = vsel %vm4095, %v4033, 0
        %v4688 = vsel %vm4095, %v4034, 0
        %v4691 = vsel %vm4095, %v4035, 0
        %v4694 = vsel %vm4095, %v4036, 0
        %v4697 = vsel %vm4095, %v4037, 0
        %v4700 = vsel %vm4095, %v4038, 0
        %v4703 = vsel %vm4095, %v4039, 0
        %v4706 = vsel %vm4095, %v4040, 0
        %v4709 = vsel %vm4095, %v4041, 0
        %v4712 = vsel %vm4095, %v4042, 0
        %v4715 = vsel %vm4095, %v4043, 0
        %v4718 = vsel %vm4095, %v4044, 0
        %v4721 = vsel %vm4095, %v4045, 0
        %v4724 = vsel %vm4095, %v4046, 0
        %v4727 = vsel %vm4095, %v4047, 0
        %v4730 = vsel %vm4095, %v4048, 0
        %v4733 = vsel %vm4095, %v4049, 0
        %v4736 = vsel %vm4095, %v4050, 0
        %v4739 = vsel %vm4095, %v4051, 0
        %v4742 = vsel %vm4095, %v4052, 0
        %v4745 = vsel %vm4095, %v4053, 0
        %v4748 = vsel %vm4095, %v4054, 0
        %v4751 = vsel %vm4095, %v4055, 0
        %v4754 = vsel %vm4095, %v4056, 0
        %v4757 = vsel %vm4095, %v4057, 0
        %v4760 = vsel %vm4095, %v4058, 0
        %v4763 = vsel %vm4095, %v4059, 0
        %v4766 = vsel %vm4095, %v4060, 0
        %v4769 = vsel %vm4095, %v4061, 0
        %v4772 = vsel %vm4095, %v4062, 0
        %v4775 = vsel %vm4095, %v4063, 0
        %v4778 = vsel %vm4095, %v4064, 0
        %v4781 = vsel %vm4095, %v4065, 0
        %v4784 = vsel %vm4095, %v4066, 0
        %v4787 = vsel %vm4095, %v4067, 0
        %v4790 = vsel %vm4095, %v4068, 0
        %v4793 = vsel %vm4095, %v4069, 0
        %v4796 = vsel %vm4095, %v4070, 0
        %v4799 = vsel %vm4095, %v4071, 0
        %v4802 = vsel %vm4095, %v4072, 0
        %v4805 = vsel %vm4095, %v4073, 0
        %v4808 = vsel %vm4095, %v4074, 0
        %v4811 = vsel %vm4095, %v4075, 0
        %v4814 = vsel %vm4095, %v4076, 0
        %v4817 = vsel %vm4095, %v4077, 0
        %v4820 = vsel %vm4095, %v4078, 0
        %v4823 = vsel %vm4095, %v4079, 0
        %v4826 = vsel %vm4095, %v4080, 0
        %v4829 = vsel %vm4095, %v4081, 0
        %v4832 = vsel %vm4095, %v4082, 0
        %v4835 = vsel %vm4095, %v4083, 0
        %v4838 = vsel %vm4095, %v4084, 0
        %v4841 = vsel %vm4095, %v4085, 0
        %v4844 = vsel %vm4095, %v4086, 0
        %v4847 = vsel %vm4095, %v4087, 0
        %v4850 = vsel %vm4095, %v4088, 0
        %v4853 = vsel %vm4095, %v4089, 0
        %v4856 = vsel %vm4095, %v4090, 0
        %v4859 = vsel %vm4095, %v4091, 0
        %v4862 = vsel %vm4095, %v4092, 0
        %4864 = vmatpush.msra.mxu0 0.0
        %4865 = vmatpush.msra.mxu0 0.0
        %4866 = vmatpush.msra.mxu0 0.0
        %4867 = vmatpush.msra.mxu0 0.0
        %4868 = vmatpush.msra.mxu0 0.0
        %4869 = vmatpush.msra.mxu0 0.0
        %4870 = vmatpush.msra.mxu0 0.0
        %4871 = vmatpush.msra.mxu0 0.0
        %4872 = vmatpush.msra.mxu0 0.0
        %4873 = vmatpush.msra.mxu0 0.0
        %4874 = vmatpush.msra.mxu0 0.0
        %4875 = vmatpush.msra.mxu0 0.0
        %4876 = vmatpush.msra.mxu0 0.0
        %4877 = vmatpush.msra.mxu0 0.0
        %4878 = vmatpush.msra.mxu0 %v4094
        %4879 = vmatpush.msra.mxu0 %v4093
        %4880 = vmatmul.f32.gmra.mxu0 %v4097
        %v4881 = vpop.f32.mrf.mxu0
        %v4882 = vadd.f32 0.0, %v4881
        %4883 = vmatmul.f32.gmra.mxu0 %v4100
        %v4884 = vpop.f32.mrf.mxu0
        %v4885 = vadd.f32 0.0, %v4884
        %4886 = vmatmul.f32.gmra.mxu0 %v4103
        %v4887 = vpop.f32.mrf.mxu0
        %v4888 = vadd.f32 0.0, %v4887
        %4889 = vmatmul.f32.gmra.mxu0 %v4106
        %v4890 = vpop.f32.mrf.mxu0
        %v4891 = vadd.f32 0.0, %v4890
        %4892 = vmatmul.f32.gmra.mxu0 %v4109
        %v4893 = vpop.f32.mrf.mxu0
        %v4894 = vadd.f32 0.0, %v4893
        %4895 = vmatmul.f32.gmra.mxu0 %v4112
        %v4896 = vpop.f32.mrf.mxu0
        %v4897 = vadd.f32 0.0, %v4896
        %4898 = vmatmul.f32.gmra.mxu0 %v4115
        %v4899 = vpop.f32.mrf.mxu0
        %v4900 = vadd.f32 0.0, %v4899
        %4901 = vmatmul.f32.gmra.mxu0 %v4118
        %v4902 = vpop.f32.mrf.mxu0
        %v4903 = vadd.f32 0.0, %v4902
        %4904 = vmatmul.f32.gmra.mxu0 %v4121
        %v4905 = vpop.f32.mrf.mxu0
        %v4906 = vadd.f32 0.0, %v4905
        %4907 = vmatmul.f32.gmra.mxu0 %v4124
        %v4908 = vpop.f32.mrf.mxu0
        %v4909 = vadd.f32 0.0, %v4908
        %4910 = vmatmul.f32.gmra.mxu0 %v4127
        %v4911 = vpop.f32.mrf.mxu0
        %v4912 = vadd.f32 0.0, %v4911
        %4913 = vmatmul.f32.gmra.mxu0 %v4130
        %v4914 = vpop.f32.mrf.mxu0
        %v4915 = vadd.f32 0.0, %v4914
        %4916 = vmatmul.f32.gmra.mxu0 %v4133
        %v4917 = vpop.f32.mrf.mxu0
        %v4918 = vadd.f32 0.0, %v4917
        %4919 = vmatmul.f32.gmra.mxu0 %v4136
        %v4920 = vpop.f32.mrf.mxu0
        %v4921 = vadd.f32 0.0, %v4920
        %4922 = vmatmul.f32.gmra.mxu0 %v4139
        %v4923 = vpop.f32.mrf.mxu0
        %v4924 = vadd.f32 0.0, %v4923
        %4925 = vmatmul.f32.gmra.mxu0 %v4142
        %v4926 = vpop.f32.mrf.mxu0
        %v4927 = vadd.f32 0.0, %v4926
        %4928 = vmatmul.f32.gmra.mxu0 %v4145
        %v4929 = vpop.f32.mrf.mxu0
        %v4930 = vadd.f32 0.0, %v4929
        %4931 = vmatmul.f32.gmra.mxu0 %v4148
        %v4932 = vpop.f32.mrf.mxu0
        %v4933 = vadd.f32 0.0, %v4932
        %4934 = vmatmul.f32.gmra.mxu0 %v4151
        %v4935 = vpop.f32.mrf.mxu0
        %v4936 = vadd.f32 0.0, %v4935
        %4937 = vmatmul.f32.gmra.mxu0 %v4154
        %v4938 = vpop.f32.mrf.mxu0
        %v4939 = vadd.f32 0.0, %v4938
        %4940 = vmatmul.f32.gmra.mxu0 %v4157
        %v4941 = vpop.f32.mrf.mxu0
        %v4942 = vadd.f32 0.0, %v4941
        %4943 = vmatmul.f32.gmra.mxu0 %v4160
        %v4944 = vpop.f32.mrf.mxu0
        %v4945 = vadd.f32 0.0, %v4944
        %4946 = vmatmul.f32.gmra.mxu0 %v4163
        %v4947 = vpop.f32.mrf.mxu0
        %v4948 = vadd.f32 0.0, %v4947
        %4949 = vmatmul.f32.gmra.mxu0 %v4166
        %v4950 = vpop.f32.mrf.mxu0
        %v4951 = vadd.f32 0.0, %v4950
        %4952 = vmatmul.f32.gmra.mxu0 %v4169
        %v4953 = vpop.f32.mrf.mxu0
        %v4954 = vadd.f32 0.0, %v4953
        %4955 = vmatmul.f32.gmra.mxu0 %v4172
        %v4956 = vpop.f32.mrf.mxu0
        %v4957 = vadd.f32 0.0, %v4956
        %4958 = vmatmul.f32.gmra.mxu0 %v4175
        %v4959 = vpop.f32.mrf.mxu0
        %v4960 = vadd.f32 0.0, %v4959
        %4961 = vmatmul.f32.gmra.mxu0 %v4178
        %v4962 = vpop.f32.mrf.mxu0
        %v4963 = vadd.f32 0.0, %v4962
        %4964 = vmatmul.f32.gmra.mxu0 %v4181
        %v4965 = vpop.f32.mrf.mxu0
        %v4966 = vadd.f32 0.0, %v4965
        %4967 = vmatmul.f32.gmra.mxu0 %v4184
        %v4968 = vpop.f32.mrf.mxu0
        %v4969 = vadd.f32 0.0, %v4968
        %4970 = vmatmul.f32.gmra.mxu0 %v4187
        %v4971 = vpop.f32.mrf.mxu0
        %v4972 = vadd.f32 0.0, %v4971
        %4973 = vmatmul.f32.gmra.mxu0 %v4190
        %v4974 = vpop.f32.mrf.mxu0
        %v4975 = vadd.f32 0.0, %v4974
        %4976 = vmatmul.f32.gmra.mxu0 %v4193
        %v4977 = vpop.f32.mrf.mxu0
        %v4978 = vadd.f32 0.0, %v4977
        %4979 = vmatmul.f32.gmra.mxu0 %v4196
        %v4980 = vpop.f32.mrf.mxu0
        %v4981 = vadd.f32 0.0, %v4980
        %4982 = vmatmul.f32.gmra.mxu0 %v4199
        %v4983 = vpop.f32.mrf.mxu0
        %v4984 = vadd.f32 0.0, %v4983
        %4985 = vmatmul.f32.gmra.mxu0 %v4202
        %v4986 = vpop.f32.mrf.mxu0
        %v4987 = vadd.f32 0.0, %v4986
        %4988 = vmatmul.f32.gmra.mxu0 %v4205
        %v4989 = vpop.f32.mrf.mxu0
        %v4990 = vadd.f32 0.0, %v4989
        %4991 = vmatmul.f32.gmra.mxu0 %v4208
        %v4992 = vpop.f32.mrf.mxu0
        %v4993 = vadd.f32 0.0, %v4992
        %4994 = vmatmul.f32.gmra.mxu0 %v4211
        %v4995 = vpop.f32.mrf.mxu0
        %v4996 = vadd.f32 0.0, %v4995
        %4997 = vmatmul.f32.gmra.mxu0 %v4214
        %v4998 = vpop.f32.mrf.mxu0
        %v4999 = vadd.f32 0.0, %v4998
        %5000 = vmatmul.f32.gmra.mxu0 %v4217
        %v5001 = vpop.f32.mrf.mxu0
        %v5002 = vadd.f32 0.0, %v5001
        %5003 = vmatmul.f32.gmra.mxu0 %v4220
        %v5004 = vpop.f32.mrf.mxu0
        %v5005 = vadd.f32 0.0, %v5004
        %5006 = vmatmul.f32.gmra.mxu0 %v4223
        %v5007 = vpop.f32.mrf.mxu0
        %v5008 = vadd.f32 0.0, %v5007
        %5009 = vmatmul.f32.gmra.mxu0 %v4226
        %v5010 = vpop.f32.mrf.mxu0
        %v5011 = vadd.f32 0.0, %v5010
        %5012 = vmatmul.f32.gmra.mxu0 %v4229
        %v5013 = vpop.f32.mrf.mxu0
        %v5014 = vadd.f32 0.0, %v5013
        %5015 = vmatmul.f32.gmra.mxu0 %v4232
        %v5016 = vpop.f32.mrf.mxu0
        %v5017 = vadd.f32 0.0, %v5016
        %5018 = vmatmul.f32.gmra.mxu0 %v4235
        %v5019 = vpop.f32.mrf.mxu0
        %v5020 = vadd.f32 0.0, %v5019
        %5021 = vmatmul.f32.gmra.mxu0 %v4238
        %v5022 = vpop.f32.mrf.mxu0
        %v5023 = vadd.f32 0.0, %v5022
        %5024 = vmatmul.f32.gmra.mxu0 %v4241
        %v5025 = vpop.f32.mrf.mxu0
        %v5026 = vadd.f32 0.0, %v5025
        %5027 = vmatmul.f32.gmra.mxu0 %v4244
        %v5028 = vpop.f32.mrf.mxu0
        %v5029 = vadd.f32 0.0, %v5028
        %5030 = vmatmul.f32.gmra.mxu0 %v4247
        %v5031 = vpop.f32.mrf.mxu0
        %v5032 = vadd.f32 0.0, %v5031
        %5033 = vmatmul.f32.gmra.mxu0 %v4250
        %v5034 = vpop.f32.mrf.mxu0
        %v5035 = vadd.f32 0.0, %v5034
        %5036 = vmatmul.f32.gmra.mxu0 %v4253
        %v5037 = vpop.f32.mrf.mxu0
        %v5038 = vadd.f32 0.0, %v5037
        %5039 = vmatmul.f32.gmra.mxu0 %v4256
        %v5040 = vpop.f32.mrf.mxu0
        %v5041 = vadd.f32 0.0, %v5040
        %5042 = vmatmul.f32.gmra.mxu0 %v4259
        %v5043 = vpop.f32.mrf.mxu0
        %v5044 = vadd.f32 0.0, %v5043
        %5045 = vmatmul.f32.gmra.mxu0 %v4262
        %v5046 = vpop.f32.mrf.mxu0
        %v5047 = vadd.f32 0.0, %v5046
        %5048 = vmatmul.f32.gmra.mxu0 %v4265
        %v5049 = vpop.f32.mrf.mxu0
        %v5050 = vadd.f32 0.0, %v5049
        %5051 = vmatmul.f32.gmra.mxu0 %v4268
        %v5052 = vpop.f32.mrf.mxu0
        %v5053 = vadd.f32 0.0, %v5052
        %5054 = vmatmul.f32.gmra.mxu0 %v4271
        %v5055 = vpop.f32.mrf.mxu0
        %v5056 = vadd.f32 0.0, %v5055
        %5057 = vmatmul.f32.gmra.mxu0 %v4274
        %v5058 = vpop.f32.mrf.mxu0
        %v5059 = vadd.f32 0.0, %v5058
        %5060 = vmatmul.f32.gmra.mxu0 %v4277
        %v5061 = vpop.f32.mrf.mxu0
        %v5062 = vadd.f32 0.0, %v5061
        %5063 = vmatmul.f32.gmra.mxu0 %v4280
        %v5064 = vpop.f32.mrf.mxu0
        %v5065 = vadd.f32 0.0, %v5064
        %5066 = vmatmul.f32.gmra.mxu0 %v4283
        %v5067 = vpop.f32.mrf.mxu0
        %v5068 = vadd.f32 0.0, %v5067
        %5069 = vmatmul.f32.gmra.mxu0 %v4286
        %v5070 = vpop.f32.mrf.mxu0
        %v5071 = vadd.f32 0.0, %v5070
        %5072 = vmatmul.f32.gmra.mxu0 %v4289
        %v5073 = vpop.f32.mrf.mxu0
        %v5074 = vadd.f32 0.0, %v5073
        %5075 = vmatmul.f32.gmra.mxu0 %v4292
        %v5076 = vpop.f32.mrf.mxu0
        %v5077 = vadd.f32 0.0, %v5076
        %5078 = vmatmul.f32.gmra.mxu0 %v4295
        %v5079 = vpop.f32.mrf.mxu0
        %v5080 = vadd.f32 0.0, %v5079
        %5081 = vmatmul.f32.gmra.mxu0 %v4298
        %v5082 = vpop.f32.mrf.mxu0
        %v5083 = vadd.f32 0.0, %v5082
        %5084 = vmatmul.f32.gmra.mxu0 %v4301
        %v5085 = vpop.f32.mrf.mxu0
        %v5086 = vadd.f32 0.0, %v5085
        %5087 = vmatmul.f32.gmra.mxu0 %v4304
        %v5088 = vpop.f32.mrf.mxu0
        %v5089 = vadd.f32 0.0, %v5088
        %5090 = vmatmul.f32.gmra.mxu0 %v4307
        %v5091 = vpop.f32.mrf.mxu0
        %v5092 = vadd.f32 0.0, %v5091
        %5093 = vmatmul.f32.gmra.mxu0 %v4310
        %v5094 = vpop.f32.mrf.mxu0
        %v5095 = vadd.f32 0.0, %v5094
        %5096 = vmatmul.f32.gmra.mxu0 %v4313
        %v5097 = vpop.f32.mrf.mxu0
        %v5098 = vadd.f32 0.0, %v5097
        %5099 = vmatmul.f32.gmra.mxu0 %v4316
        %v5100 = vpop.f32.mrf.mxu0
        %v5101 = vadd.f32 0.0, %v5100
        %5102 = vmatmul.f32.gmra.mxu0 %v4319
        %v5103 = vpop.f32.mrf.mxu0
        %v5104 = vadd.f32 0.0, %v5103
        %5105 = vmatmul.f32.gmra.mxu0 %v4322
        %v5106 = vpop.f32.mrf.mxu0
        %v5107 = vadd.f32 0.0, %v5106
        %5108 = vmatmul.f32.gmra.mxu0 %v4325
        %v5109 = vpop.f32.mrf.mxu0
        %v5110 = vadd.f32 0.0, %v5109
        %5111 = vmatmul.f32.gmra.mxu0 %v4328
        %v5112 = vpop.f32.mrf.mxu0
        %v5113 = vadd.f32 0.0, %v5112
        %5114 = vmatmul.f32.gmra.mxu0 %v4331
        %v5115 = vpop.f32.mrf.mxu0
        %v5116 = vadd.f32 0.0, %v5115
        %5117 = vmatmul.f32.gmra.mxu0 %v4334
        %v5118 = vpop.f32.mrf.mxu0
        %v5119 = vadd.f32 0.0, %v5118
        %5120 = vmatmul.f32.gmra.mxu0 %v4337
        %v5121 = vpop.f32.mrf.mxu0
        %v5122 = vadd.f32 0.0, %v5121
        %5123 = vmatmul.f32.gmra.mxu0 %v4340
        %v5124 = vpop.f32.mrf.mxu0
        %v5125 = vadd.f32 0.0, %v5124
        %5126 = vmatmul.f32.gmra.mxu0 %v4343
        %v5127 = vpop.f32.mrf.mxu0
        %v5128 = vadd.f32 0.0, %v5127
        %5129 = vmatmul.f32.gmra.mxu0 %v4346
        %v5130 = vpop.f32.mrf.mxu0
        %v5131 = vadd.f32 0.0, %v5130
        %5132 = vmatmul.f32.gmra.mxu0 %v4349
        %v5133 = vpop.f32.mrf.mxu0
        %v5134 = vadd.f32 0.0, %v5133
        %5135 = vmatmul.f32.gmra.mxu0 %v4352
        %v5136 = vpop.f32.mrf.mxu0
        %v5137 = vadd.f32 0.0, %v5136
        %5138 = vmatmul.f32.gmra.mxu0 %v4355
        %v5139 = vpop.f32.mrf.mxu0
        %v5140 = vadd.f32 0.0, %v5139
        %5141 = vmatmul.f32.gmra.mxu0 %v4358
        %v5142 = vpop.f32.mrf.mxu0
        %v5143 = vadd.f32 0.0, %v5142
        %5144 = vmatmul.f32.gmra.mxu0 %v4361
        %v5145 = vpop.f32.mrf.mxu0
        %v5146 = vadd.f32 0.0, %v5145
        %5147 = vmatmul.f32.gmra.mxu0 %v4364
        %v5148 = vpop.f32.mrf.mxu0
        %v5149 = vadd.f32 0.0, %v5148
        %5150 = vmatmul.f32.gmra.mxu0 %v4367
        %v5151 = vpop.f32.mrf.mxu0
        %v5152 = vadd.f32 0.0, %v5151
        %5153 = vmatmul.f32.gmra.mxu0 %v4370
        %v5154 = vpop.f32.mrf.mxu0
        %v5155 = vadd.f32 0.0, %v5154
        %5156 = vmatmul.f32.gmra.mxu0 %v4373
        %v5157 = vpop.f32.mrf.mxu0
        %v5158 = vadd.f32 0.0, %v5157
        %5159 = vmatmul.f32.gmra.mxu0 %v4376
        %v5160 = vpop.f32.mrf.mxu0
        %v5161 = vadd.f32 0.0, %v5160
        %5162 = vmatmul.f32.gmra.mxu0 %v4379
        %v5163 = vpop.f32.mrf.mxu0
        %v5164 = vadd.f32 0.0, %v5163
        %5165 = vmatmul.f32.gmra.mxu0 %v4382
        %v5166 = vpop.f32.mrf.mxu0
        %v5167 = vadd.f32 0.0, %v5166
        %5168 = vmatmul.f32.gmra.mxu0 %v4385
        %v5169 = vpop.f32.mrf.mxu0
        %v5170 = vadd.f32 0.0, %v5169
        %5171 = vmatmul.f32.gmra.mxu0 %v4388
        %v5172 = vpop.f32.mrf.mxu0
        %v5173 = vadd.f32 0.0, %v5172
        %5174 = vmatmul.f32.gmra.mxu0 %v4391
        %v5175 = vpop.f32.mrf.mxu0
        %v5176 = vadd.f32 0.0, %v5175
        %5177 = vmatmul.f32.gmra.mxu0 %v4394
        %v5178 = vpop.f32.mrf.mxu0
        %v5179 = vadd.f32 0.0, %v5178
        %5180 = vmatmul.f32.gmra.mxu0 %v4397
        %v5181 = vpop.f32.mrf.mxu0
        %v5182 = vadd.f32 0.0, %v5181
        %5183 = vmatmul.f32.gmra.mxu0 %v4400
        %v5184 = vpop.f32.mrf.mxu0
        %v5185 = vadd.f32 0.0, %v5184
        %5186 = vmatmul.f32.gmra.mxu0 %v4403
        %v5187 = vpop.f32.mrf.mxu0
        %v5188 = vadd.f32 0.0, %v5187
        %5189 = vmatmul.f32.gmra.mxu0 %v4406
        %v5190 = vpop.f32.mrf.mxu0
        %v5191 = vadd.f32 0.0, %v5190
        %5192 = vmatmul.f32.gmra.mxu0 %v4409
        %v5193 = vpop.f32.mrf.mxu0
        %v5194 = vadd.f32 0.0, %v5193
        %5195 = vmatmul.f32.gmra.mxu0 %v4412
        %v5196 = vpop.f32.mrf.mxu0
        %v5197 = vadd.f32 0.0, %v5196
        %5198 = vmatmul.f32.gmra.mxu0 %v4415
        %v5199 = vpop.f32.mrf.mxu0
        %v5200 = vadd.f32 0.0, %v5199
        %5201 = vmatmul.f32.gmra.mxu0 %v4418
        %v5202 = vpop.f32.mrf.mxu0
        %v5203 = vadd.f32 0.0, %v5202
        %5204 = vmatmul.f32.gmra.mxu0 %v4421
        %v5205 = vpop.f32.mrf.mxu0
        %v5206 = vadd.f32 0.0, %v5205
        %5207 = vmatmul.f32.gmra.mxu0 %v4424
        %v5208 = vpop.f32.mrf.mxu0
        %v5209 = vadd.f32 0.0, %v5208
        %5210 = vmatmul.f32.gmra.mxu0 %v4427
        %v5211 = vpop.f32.mrf.mxu0
        %v5212 = vadd.f32 0.0, %v5211
        %5213 = vmatmul.f32.gmra.mxu0 %v4430
        %v5214 = vpop.f32.mrf.mxu0
        %v5215 = vadd.f32 0.0, %v5214
        %5216 = vmatmul.f32.gmra.mxu0 %v4433
        %v5217 = vpop.f32.mrf.mxu0
        %v5218 = vadd.f32 0.0, %v5217
        %5219 = vmatmul.f32.gmra.mxu0 %v4436
        %v5220 = vpop.f32.mrf.mxu0
        %v5221 = vadd.f32 0.0, %v5220
        %5222 = vmatmul.f32.gmra.mxu0 %v4439
        %v5223 = vpop.f32.mrf.mxu0
        %v5224 = vadd.f32 0.0, %v5223
        %5225 = vmatmul.f32.gmra.mxu0 %v4442
        %v5226 = vpop.f32.mrf.mxu0
        %v5227 = vadd.f32 0.0, %v5226
        %5228 = vmatmul.f32.gmra.mxu0 %v4445
        %v5229 = vpop.f32.mrf.mxu0
        %v5230 = vadd.f32 0.0, %v5229
        %5231 = vmatmul.f32.gmra.mxu0 %v4448
        %v5232 = vpop.f32.mrf.mxu0
        %v5233 = vadd.f32 0.0, %v5232
        %5234 = vmatmul.f32.gmra.mxu0 %v4451
        %v5235 = vpop.f32.mrf.mxu0
        %v5236 = vadd.f32 0.0, %v5235
        %5237 = vmatmul.f32.gmra.mxu0 %v4454
        %v5238 = vpop.f32.mrf.mxu0
        %v5239 = vadd.f32 0.0, %v5238
        %5240 = vmatmul.f32.gmra.mxu0 %v4457
        %v5241 = vpop.f32.mrf.mxu0
        %v5242 = vadd.f32 0.0, %v5241
        %5243 = vmatmul.f32.gmra.mxu0 %v4460
        %v5244 = vpop.f32.mrf.mxu0
        %v5245 = vadd.f32 0.0, %v5244
        %5246 = vmatmul.f32.gmra.mxu0 %v4463
        %v5247 = vpop.f32.mrf.mxu0
        %v5248 = vadd.f32 0.0, %v5247
        %5249 = vmatmul.f32.gmra.mxu0 %v4466
        %v5250 = vpop.f32.mrf.mxu0
        %v5251 = vadd.f32 0.0, %v5250
        %5252 = vmatmul.f32.gmra.mxu0 %v4469
        %v5253 = vpop.f32.mrf.mxu0
        %v5254 = vadd.f32 0.0, %v5253
        %5255 = vmatmul.f32.gmra.mxu0 %v4472
        %v5256 = vpop.f32.mrf.mxu0
        %v5257 = vadd.f32 0.0, %v5256
        %5258 = vmatmul.f32.gmra.mxu0 %v4475
        %v5259 = vpop.f32.mrf.mxu0
        %v5260 = vadd.f32 0.0, %v5259
        %5261 = vmatmul.f32.gmra.mxu0 %v4478
        %v5262 = vpop.f32.mrf.mxu0
        %v5263 = vadd.f32 0.0, %v5262
        %5264 = vmatmul.f32.gmra.mxu0 %v4481
        %v5265 = vpop.f32.mrf.mxu0
        %v5266 = vadd.f32 0.0, %v5265
        %5267 = vmatmul.f32.gmra.mxu0 %v4484
        %v5268 = vpop.f32.mrf.mxu0
        %v5269 = vadd.f32 0.0, %v5268
        %5270 = vmatmul.f32.gmra.mxu0 %v4487
        %v5271 = vpop.f32.mrf.mxu0
        %v5272 = vadd.f32 0.0, %v5271
        %5273 = vmatmul.f32.gmra.mxu0 %v4490
        %v5274 = vpop.f32.mrf.mxu0
        %v5275 = vadd.f32 0.0, %v5274
        %5276 = vmatmul.f32.gmra.mxu0 %v4493
        %v5277 = vpop.f32.mrf.mxu0
        %v5278 = vadd.f32 0.0, %v5277
        %5279 = vmatmul.f32.gmra.mxu0 %v4496
        %v5280 = vpop.f32.mrf.mxu0
        %v5281 = vadd.f32 0.0, %v5280
        %5282 = vmatmul.f32.gmra.mxu0 %v4499
        %v5283 = vpop.f32.mrf.mxu0
        %v5284 = vadd.f32 0.0, %v5283
        %5285 = vmatmul.f32.gmra.mxu0 %v4502
        %v5286 = vpop.f32.mrf.mxu0
        %v5287 = vadd.f32 0.0, %v5286
        %5288 = vmatmul.f32.gmra.mxu0 %v4505
        %v5289 = vpop.f32.mrf.mxu0
        %v5290 = vadd.f32 0.0, %v5289
        %5291 = vmatmul.f32.gmra.mxu0 %v4508
        %v5292 = vpop.f32.mrf.mxu0
        %v5293 = vadd.f32 0.0, %v5292
        %5294 = vmatmul.f32.gmra.mxu0 %v4511
        %v5295 = vpop.f32.mrf.mxu0
        %v5296 = vadd.f32 0.0, %v5295
        %5297 = vmatmul.f32.gmra.mxu0 %v4514
        %v5298 = vpop.f32.mrf.mxu0
        %v5299 = vadd.f32 0.0, %v5298
        %5300 = vmatmul.f32.gmra.mxu0 %v4517
        %v5301 = vpop.f32.mrf.mxu0
        %v5302 = vadd.f32 0.0, %v5301
        %5303 = vmatmul.f32.gmra.mxu0 %v4520
        %v5304 = vpop.f32.mrf.mxu0
        %v5305 = vadd.f32 0.0, %v5304
        %5306 = vmatmul.f32.gmra.mxu0 %v4523
        %v5307 = vpop.f32.mrf.mxu0
        %v5308 = vadd.f32 0.0, %v5307
        %5309 = vmatmul.f32.gmra.mxu0 %v4526
        %v5310 = vpop.f32.mrf.mxu0
        %v5311 = vadd.f32 0.0, %v5310
        %5312 = vmatmul.f32.gmra.mxu0 %v4529
        %v5313 = vpop.f32.mrf.mxu0
        %v5314 = vadd.f32 0.0, %v5313
        %5315 = vmatmul.f32.gmra.mxu0 %v4532
        %v5316 = vpop.f32.mrf.mxu0
        %v5317 = vadd.f32 0.0, %v5316
        %5318 = vmatmul.f32.gmra.mxu0 %v4535
        %v5319 = vpop.f32.mrf.mxu0
        %v5320 = vadd.f32 0.0, %v5319
        %5321 = vmatmul.f32.gmra.mxu0 %v4538
        %v5322 = vpop.f32.mrf.mxu0
        %v5323 = vadd.f32 0.0, %v5322
        %5324 = vmatmul.f32.gmra.mxu0 %v4541
        %v5325 = vpop.f32.mrf.mxu0
        %v5326 = vadd.f32 0.0, %v5325
        %5327 = vmatmul.f32.gmra.mxu0 %v4544
        %v5328 = vpop.f32.mrf.mxu0
        %v5329 = vadd.f32 0.0, %v5328
        %5330 = vmatmul.f32.gmra.mxu0 %v4547
        %v5331 = vpop.f32.mrf.mxu0
        %v5332 = vadd.f32 0.0, %v5331
        %5333 = vmatmul.f32.gmra.mxu0 %v4550
        %v5334 = vpop.f32.mrf.mxu0
        %v5335 = vadd.f32 0.0, %v5334
        %5336 = vmatmul.f32.gmra.mxu0 %v4553
        %v5337 = vpop.f32.mrf.mxu0
        %v5338 = vadd.f32 0.0, %v5337
        %5339 = vmatmul.f32.gmra.mxu0 %v4556
        %v5340 = vpop.f32.mrf.mxu0
        %v5341 = vadd.f32 0.0, %v5340
        %5342 = vmatmul.f32.gmra.mxu0 %v4559
        %v5343 = vpop.f32.mrf.mxu0
        %v5344 = vadd.f32 0.0, %v5343
        %5345 = vmatmul.f32.gmra.mxu0 %v4562
        %v5346 = vpop.f32.mrf.mxu0
        %v5347 = vadd.f32 0.0, %v5346
        %5348 = vmatmul.f32.gmra.mxu0 %v4565
        %v5349 = vpop.f32.mrf.mxu0
        %v5350 = vadd.f32 0.0, %v5349
        %5351 = vmatmul.f32.gmra.mxu0 %v4568
        %v5352 = vpop.f32.mrf.mxu0
        %v5353 = vadd.f32 0.0, %v5352
        %5354 = vmatmul.f32.gmra.mxu0 %v4571
        %v5355 = vpop.f32.mrf.mxu0
        %v5356 = vadd.f32 0.0, %v5355
        %5357 = vmatmul.f32.gmra.mxu0 %v4574
        %v5358 = vpop.f32.mrf.mxu0
        %v5359 = vadd.f32 0.0, %v5358
        %5360 = vmatmul.f32.gmra.mxu0 %v4577
        %v5361 = vpop.f32.mrf.mxu0
        %v5362 = vadd.f32 0.0, %v5361
        %5363 = vmatmul.f32.gmra.mxu0 %v4580
        %v5364 = vpop.f32.mrf.mxu0
        %v5365 = vadd.f32 0.0, %v5364
        %5366 = vmatmul.f32.gmra.mxu0 %v4583
        %v5367 = vpop.f32.mrf.mxu0
        %v5368 = vadd.f32 0.0, %v5367
        %5369 = vmatmul.f32.gmra.mxu0 %v4586
        %v5370 = vpop.f32.mrf.mxu0
        %v5371 = vadd.f32 0.0, %v5370
        %5372 = vmatmul.f32.gmra.mxu0 %v4589
        %v5373 = vpop.f32.mrf.mxu0
        %v5374 = vadd.f32 0.0, %v5373
        %5375 = vmatmul.f32.gmra.mxu0 %v4592
        %v5376 = vpop.f32.mrf.mxu0
        %v5377 = vadd.f32 0.0, %v5376
        %5378 = vmatmul.f32.gmra.mxu0 %v4595
        %v5379 = vpop.f32.mrf.mxu0
        %v5380 = vadd.f32 0.0, %v5379
        %5381 = vmatmul.f32.gmra.mxu0 %v4598
        %v5382 = vpop.f32.mrf.mxu0
        %v5383 = vadd.f32 0.0, %v5382
        %5384 = vmatmul.f32.gmra.mxu0 %v4601
        %v5385 = vpop.f32.mrf.mxu0
        %v5386 = vadd.f32 0.0, %v5385
        %5387 = vmatmul.f32.gmra.mxu0 %v4604
        %v5388 = vpop.f32.mrf.mxu0
        %v5389 = vadd.f32 0.0, %v5388
        %5390 = vmatmul.f32.gmra.mxu0 %v4607
        %v5391 = vpop.f32.mrf.mxu0
        %v5392 = vadd.f32 0.0, %v5391
        %5393 = vmatmul.f32.gmra.mxu0 %v4610
        %v5394 = vpop.f32.mrf.mxu0
        %v5395 = vadd.f32 0.0, %v5394
        %5396 = vmatmul.f32.gmra.mxu0 %v4613
        %v5397 = vpop.f32.mrf.mxu0
        %v5398 = vadd.f32 0.0, %v5397
        %5399 = vmatmul.f32.gmra.mxu0 %v4616
        %v5400 = vpop.f32.mrf.mxu0
        %v5401 = vadd.f32 0.0, %v5400
        %5402 = vmatmul.f32.gmra.mxu0 %v4619
        %v5403 = vpop.f32.mrf.mxu0
        %v5404 = vadd.f32 0.0, %v5403
        %5405 = vmatmul.f32.gmra.mxu0 %v4622
        %v5406 = vpop.f32.mrf.mxu0
        %v5407 = vadd.f32 0.0, %v5406
        %5408 = vmatmul.f32.gmra.mxu0 %v4625
        %v5409 = vpop.f32.mrf.mxu0
        %v5410 = vadd.f32 0.0, %v5409
        %5411 = vmatmul.f32.gmra.mxu0 %v4628
        %v5412 = vpop.f32.mrf.mxu0
        %v5413 = vadd.f32 0.0, %v5412
        %5414 = vmatmul.f32.gmra.mxu0 %v4631
        %v5415 = vpop.f32.mrf.mxu0
        %v5416 = vadd.f32 0.0, %v5415
        %5417 = vmatmul.f32.gmra.mxu0 %v4634
        %v5418 = vpop.f32.mrf.mxu0
        %v5419 = vadd.f32 0.0, %v5418
        %5420 = vmatmul.f32.gmra.mxu0 %v4637
        %v5421 = vpop.f32.mrf.mxu0
        %v5422 = vadd.f32 0.0, %v5421
        %5423 = vmatmul.f32.gmra.mxu0 %v4640
        %v5424 = vpop.f32.mrf.mxu0
        %v5425 = vadd.f32 0.0, %v5424
        %5426 = vmatmul.f32.gmra.mxu0 %v4643
        %v5427 = vpop.f32.mrf.mxu0
        %v5428 = vadd.f32 0.0, %v5427
        %5429 = vmatmul.f32.gmra.mxu0 %v4646
        %v5430 = vpop.f32.mrf.mxu0
        %v5431 = vadd.f32 0.0, %v5430
        %5432 = vmatmul.f32.gmra.mxu0 %v4649
        %v5433 = vpop.f32.mrf.mxu0
        %v5434 = vadd.f32 0.0, %v5433
        %5435 = vmatmul.f32.gmra.mxu0 %v4652
        %v5436 = vpop.f32.mrf.mxu0
        %v5437 = vadd.f32 0.0, %v5436
        %5438 = vmatmul.f32.gmra.mxu0 %v4655
        %v5439 = vpop.f32.mrf.mxu0
        %v5440 = vadd.f32 0.0, %v5439
        %5441 = vmatmul.f32.gmra.mxu0 %v4658
        %v5442 = vpop.f32.mrf.mxu0
        %v5443 = vadd.f32 0.0, %v5442
        %5444 = vmatmul.f32.gmra.mxu0 %v4661
        %v5445 = vpop.f32.mrf.mxu0
        %v5446 = vadd.f32 0.0, %v5445
        %5447 = vmatmul.f32.gmra.mxu0 %v4664
        %v5448 = vpop.f32.mrf.mxu0
        %v5449 = vadd.f32 0.0, %v5448
        %5450 = vmatmul.f32.gmra.mxu0 %v4667
        %v5451 = vpop.f32.mrf.mxu0
        %v5452 = vadd.f32 0.0, %v5451
        %5453 = vmatmul.f32.gmra.mxu0 %v4670
        %v5454 = vpop.f32.mrf.mxu0
        %v5455 = vadd.f32 0.0, %v5454
        %5456 = vmatmul.f32.gmra.mxu0 %v4673
        %v5457 = vpop.f32.mrf.mxu0
        %v5458 = vadd.f32 0.0, %v5457
        %5459 = vmatmul.f32.gmra.mxu0 %v4676
        %v5460 = vpop.f32.mrf.mxu0
        %v5461 = vadd.f32 0.0, %v5460
        %5462 = vmatmul.f32.gmra.mxu0 %v4679
        %v5463 = vpop.f32.mrf.mxu0
        %v5464 = vadd.f32 0.0, %v5463
        %5465 = vmatmul.f32.gmra.mxu0 %v4682
        %v5466 = vpop.f32.mrf.mxu0
        %v5467 = vadd.f32 0.0, %v5466
        %5468 = vmatmul.f32.gmra.mxu0 %v4685
        %v5469 = vpop.f32.mrf.mxu0
        %v5470 = vadd.f32 0.0, %v5469
        %5471 = vmatmul.f32.gmra.mxu0 %v4688
        %v5472 = vpop.f32.mrf.mxu0
        %v5473 = vadd.f32 0.0, %v5472
        %5474 = vmatmul.f32.gmra.mxu0 %v4691
        %v5475 = vpop.f32.mrf.mxu0
        %v5476 = vadd.f32 0.0, %v5475
        %5477 = vmatmul.f32.gmra.mxu0 %v4694
        %v5478 = vpop.f32.mrf.mxu0
        %v5479 = vadd.f32 0.0, %v5478
        %5480 = vmatmul.f32.gmra.mxu0 %v4697
        %v5481 = vpop.f32.mrf.mxu0
        %v5482 = vadd.f32 0.0, %v5481
        %5483 = vmatmul.f32.gmra.mxu0 %v4700
        %v5484 = vpop.f32.mrf.mxu0
        %v5485 = vadd.f32 0.0, %v5484
        %5486 = vmatmul.f32.gmra.mxu0 %v4703
        %v5487 = vpop.f32.mrf.mxu0
        %v5488 = vadd.f32 0.0, %v5487
        %5489 = vmatmul.f32.gmra.mxu0 %v4706
        %v5490 = vpop.f32.mrf.mxu0
        %v5491 = vadd.f32 0.0, %v5490
        %5492 = vmatmul.f32.gmra.mxu0 %v4709
        %v5493 = vpop.f32.mrf.mxu0
        %v5494 = vadd.f32 0.0, %v5493
        %5495 = vmatmul.f32.gmra.mxu0 %v4712
        %v5496 = vpop.f32.mrf.mxu0
        %v5497 = vadd.f32 0.0, %v5496
        %5498 = vmatmul.f32.gmra.mxu0 %v4715
        %v5499 = vpop.f32.mrf.mxu0
        %v5500 = vadd.f32 0.0, %v5499
        %5501 = vmatmul.f32.gmra.mxu0 %v4718
        %v5502 = vpop.f32.mrf.mxu0
        %v5503 = vadd.f32 0.0, %v5502
        %5504 = vmatmul.f32.gmra.mxu0 %v4721
        %v5505 = vpop.f32.mrf.mxu0
        %v5506 = vadd.f32 0.0, %v5505
        %5507 = vmatmul.f32.gmra.mxu0 %v4724
        %v5508 = vpop.f32.mrf.mxu0
        %v5509 = vadd.f32 0.0, %v5508
        %5510 = vmatmul.f32.gmra.mxu0 %v4727
        %v5511 = vpop.f32.mrf.mxu0
        %v5512 = vadd.f32 0.0, %v5511
        %5513 = vmatmul.f32.gmra.mxu0 %v4730
        %v5514 = vpop.f32.mrf.mxu0
        %v5515 = vadd.f32 0.0, %v5514
        %5516 = vmatmul.f32.gmra.mxu0 %v4733
        %v5517 = vpop.f32.mrf.mxu0
        %v5518 = vadd.f32 0.0, %v5517
        %5519 = vmatmul.f32.gmra.mxu0 %v4736
        %v5520 = vpop.f32.mrf.mxu0
        %v5521 = vadd.f32 0.0, %v5520
        %5522 = vmatmul.f32.gmra.mxu0 %v4739
        %v5523 = vpop.f32.mrf.mxu0
        %v5524 = vadd.f32 0.0, %v5523
        %5525 = vmatmul.f32.gmra.mxu0 %v4742
        %v5526 = vpop.f32.mrf.mxu0
        %v5527 = vadd.f32 0.0, %v5526
        %5528 = vmatmul.f32.gmra.mxu0 %v4745
        %v5529 = vpop.f32.mrf.mxu0
        %v5530 = vadd.f32 0.0, %v5529
        %5531 = vmatmul.f32.gmra.mxu0 %v4748
        %v5532 = vpop.f32.mrf.mxu0
        %v5533 = vadd.f32 0.0, %v5532
        %5534 = vmatmul.f32.gmra.mxu0 %v4751
        %v5535 = vpop.f32.mrf.mxu0
        %v5536 = vadd.f32 0.0, %v5535
        %5537 = vmatmul.f32.gmra.mxu0 %v4754
        %v5538 = vpop.f32.mrf.mxu0
        %v5539 = vadd.f32 0.0, %v5538
        %5540 = vmatmul.f32.gmra.mxu0 %v4757
        %v5541 = vpop.f32.mrf.mxu0
        %v5542 = vadd.f32 0.0, %v5541
        %5543 = vmatmul.f32.gmra.mxu0 %v4760
        %v5544 = vpop.f32.mrf.mxu0
        %v5545 = vadd.f32 0.0, %v5544
        %5546 = vmatmul.f32.gmra.mxu0 %v4763
        %v5547 = vpop.f32.mrf.mxu0
        %v5548 = vadd.f32 0.0, %v5547
        %5549 = vmatmul.f32.gmra.mxu0 %v4766
        %v5550 = vpop.f32.mrf.mxu0
        %v5551 = vadd.f32 0.0, %v5550
        %5552 = vmatmul.f32.gmra.mxu0 %v4769
        %v5553 = vpop.f32.mrf.mxu0
        %v5554 = vadd.f32 0.0, %v5553
        %5555 = vmatmul.f32.gmra.mxu0 %v4772
        %v5556 = vpop.f32.mrf.mxu0
        %v5557 = vadd.f32 0.0, %v5556
        %5558 = vmatmul.f32.gmra.mxu0 %v4775
        %v5559 = vpop.f32.mrf.mxu0
        %v5560 = vadd.f32 0.0, %v5559
        %5561 = vmatmul.f32.gmra.mxu0 %v4778
        %v5562 = vpop.f32.mrf.mxu0
        %v5563 = vadd.f32 0.0, %v5562
        %5564 = vmatmul.f32.gmra.mxu0 %v4781
        %v5565 = vpop.f32.mrf.mxu0
        %v5566 = vadd.f32 0.0, %v5565
        %5567 = vmatmul.f32.gmra.mxu0 %v4784
        %v5568 = vpop.f32.mrf.mxu0
        %v5569 = vadd.f32 0.0, %v5568
        %5570 = vmatmul.f32.gmra.mxu0 %v4787
        %v5571 = vpop.f32.mrf.mxu0
        %v5572 = vadd.f32 0.0, %v5571
        %5573 = vmatmul.f32.gmra.mxu0 %v4790
        %v5574 = vpop.f32.mrf.mxu0
        %v5575 = vadd.f32 0.0, %v5574
        %5576 = vmatmul.f32.gmra.mxu0 %v4793
        %v5577 = vpop.f32.mrf.mxu0
        %v5578 = vadd.f32 0.0, %v5577
        %5579 = vmatmul.f32.gmra.mxu0 %v4796
        %v5580 = vpop.f32.mrf.mxu0
        %v5581 = vadd.f32 0.0, %v5580
        %5582 = vmatmul.f32.gmra.mxu0 %v4799
        %v5583 = vpop.f32.mrf.mxu0
        %v5584 = vadd.f32 0.0, %v5583
        %5585 = vmatmul.f32.gmra.mxu0 %v4802
        %v5586 = vpop.f32.mrf.mxu0
        %v5587 = vadd.f32 0.0, %v5586
        %5588 = vmatmul.f32.gmra.mxu0 %v4805
        %v5589 = vpop.f32.mrf.mxu0
        %v5590 = vadd.f32 0.0, %v5589
        %5591 = vmatmul.f32.gmra.mxu0 %v4808
        %v5592 = vpop.f32.mrf.mxu0
        %v5593 = vadd.f32 0.0, %v5592
        %5594 = vmatmul.f32.gmra.mxu0 %v4811
        %v5595 = vpop.f32.mrf.mxu0
        %v5596 = vadd.f32 0.0, %v5595
        %5597 = vmatmul.f32.gmra.mxu0 %v4814
        %v5598 = vpop.f32.mrf.mxu0
        %v5599 = vadd.f32 0.0, %v5598
        %5600 = vmatmul.f32.gmra.mxu0 %v4817
        %v5601 = vpop.f32.mrf.mxu0
        %v5602 = vadd.f32 0.0, %v5601
        %5603 = vmatmul.f32.gmra.mxu0 %v4820
        %v5604 = vpop.f32.mrf.mxu0
        %v5605 = vadd.f32 0.0, %v5604
        %5606 = vmatmul.f32.gmra.mxu0 %v4823
        %v5607 = vpop.f32.mrf.mxu0
        %v5608 = vadd.f32 0.0, %v5607
        %5609 = vmatmul.f32.gmra.mxu0 %v4826
        %v5610 = vpop.f32.mrf.mxu0
        %v5611 = vadd.f32 0.0, %v5610
        %5612 = vmatmul.f32.gmra.mxu0 %v4829
        %v5613 = vpop.f32.mrf.mxu0
        %v5614 = vadd.f32 0.0, %v5613
        %5615 = vmatmul.f32.gmra.mxu0 %v4832
        %v5616 = vpop.f32.mrf.mxu0
        %v5617 = vadd.f32 0.0, %v5616
        %5618 = vmatmul.f32.gmra.mxu0 %v4835
        %v5619 = vpop.f32.mrf.mxu0
        %v5620 = vadd.f32 0.0, %v5619
        %5621 = vmatmul.f32.gmra.mxu0 %v4838
        %v5622 = vpop.f32.mrf.mxu0
        %v5623 = vadd.f32 0.0, %v5622
        %5624 = vmatmul.f32.gmra.mxu0 %v4841
        %v5625 = vpop.f32.mrf.mxu0
        %v5626 = vadd.f32 0.0, %v5625
        %5627 = vmatmul.f32.gmra.mxu0 %v4844
        %v5628 = vpop.f32.mrf.mxu0
        %v5629 = vadd.f32 0.0, %v5628
        %5630 = vmatmul.f32.gmra.mxu0 %v4847
        %v5631 = vpop.f32.mrf.mxu0
        %v5632 = vadd.f32 0.0, %v5631
        %5633 = vmatmul.f32.gmra.mxu0 %v4850
        %v5634 = vpop.f32.mrf.mxu0
        %v5635 = vadd.f32 0.0, %v5634
        %5636 = vmatmul.f32.gmra.mxu0 %v4853
        %v5637 = vpop.f32.mrf.mxu0
        %v5638 = vadd.f32 0.0, %v5637
        %5639 = vmatmul.f32.gmra.mxu0 %v4856
        %v5640 = vpop.f32.mrf.mxu0
        %v5641 = vadd.f32 0.0, %v5640
        %5642 = vmatmul.f32.gmra.mxu0 %v4859
        %v5643 = vpop.f32.mrf.mxu0
        %v5644 = vadd.f32 0.0, %v5643
        %5645 = vmatmul.f32.gmra.mxu0 %v4862
        %v5646 = vpop.f32.mrf.mxu0
        %v5647 = vadd.f32 0.0, %v5646
        %5648 = vdwg.mxu0
        %v5649 = vmul.f32 %v925, %v4882
        %v5650 = vmul.f32 %v927, %v4885
        %v5651 = vmul.f32 %v930, %v4888
        %v5652 = vmul.f32 %v932, %v4891
        %v5653 = vmul.f32 %v935, %v4894
        %v5654 = vmul.f32 %v937, %v4897
        %v5655 = vmul.f32 %v940, %v4900
        %v5656 = vmul.f32 %v942, %v4903
        %v5657 = vmul.f32 %v945, %v4906
        %v5658 = vmul.f32 %v947, %v4909
        %v5659 = vmul.f32 %v950, %v4912
        %v5660 = vmul.f32 %v952, %v4915
        %v5661 = vmul.f32 %v955, %v4918
        %v5662 = vmul.f32 %v957, %v4921
        %v5663 = vmul.f32 %v960, %v4924
        %v5664 = vmul.f32 %v962, %v4927
        %v5665 = vmul.f32 %v965, %v4930
        %v5666 = vmul.f32 %v967, %v4933
        %v5667 = vmul.f32 %v970, %v4936
        %v5668 = vmul.f32 %v972, %v4939
        %v5669 = vmul.f32 %v975, %v4942
        %v5670 = vmul.f32 %v977, %v4945
        %v5671 = vmul.f32 %v980, %v4948
        %v5672 = vmul.f32 %v982, %v4951
        %v5673 = vmul.f32 %v985, %v4954
        %v5674 = vmul.f32 %v987, %v4957
        %v5675 = vmul.f32 %v990, %v4960
        %v5676 = vmul.f32 %v992, %v4963
        %v5677 = vmul.f32 %v995, %v4966
        %v5678 = vmul.f32 %v997, %v4969
        %v5679 = vmul.f32 %v1000, %v4972
        %v5680 = vmul.f32 %v1002, %v4975
        %v5681 = vmul.f32 %v1005, %v4978
        %v5682 = vmul.f32 %v1007, %v4981
        %v5683 = vmul.f32 %v1010, %v4984
        %v5684 = vmul.f32 %v1012, %v4987
        %v5685 = vmul.f32 %v1015, %v4990
        %v5686 = vmul.f32 %v1017, %v4993
        %v5687 = vmul.f32 %v1020, %v4996
        %v5688 = vmul.f32 %v1022, %v4999
        %v5689 = vmul.f32 %v1025, %v5002
        %v5690 = vmul.f32 %v1027, %v5005
        %v5691 = vmul.f32 %v1030, %v5008
        %v5692 = vmul.f32 %v1032, %v5011
        %v5693 = vmul.f32 %v1035, %v5014
        %v5694 = vmul.f32 %v1037, %v5017
        %v5695 = vmul.f32 %v1040, %v5020
        %v5696 = vmul.f32 %v1042, %v5023
        %v5697 = vmul.f32 %v1045, %v5026
        %v5698 = vmul.f32 %v1047, %v5029
        %v5699 = vmul.f32 %v1050, %v5032
        %v5700 = vmul.f32 %v1052, %v5035
        %v5701 = vmul.f32 %v1055, %v5038
        %v5702 = vmul.f32 %v1057, %v5041
        %v5703 = vmul.f32 %v1060, %v5044
        %v5704 = vmul.f32 %v1062, %v5047
        %v5705 = vmul.f32 %v1065, %v5050
        %v5706 = vmul.f32 %v1067, %v5053
        %v5707 = vmul.f32 %v1070, %v5056
        %v5708 = vmul.f32 %v1072, %v5059
        %v5709 = vmul.f32 %v1075, %v5062
        %v5710 = vmul.f32 %v1077, %v5065
        %v5711 = vmul.f32 %v1080, %v5068
        %v5712 = vmul.f32 %v1082, %v5071
        %v5713 = vmul.f32 %v1085, %v5074
        %v5714 = vmul.f32 %v1087, %v5077
        %v5715 = vmul.f32 %v1090, %v5080
        %v5716 = vmul.f32 %v1092, %v5083
        %v5717 = vmul.f32 %v1095, %v5086
        %v5718 = vmul.f32 %v1097, %v5089
        %v5719 = vmul.f32 %v1100, %v5092
        %v5720 = vmul.f32 %v1102, %v5095
        %v5721 = vmul.f32 %v1105, %v5098
        %v5722 = vmul.f32 %v1107, %v5101
        %v5723 = vmul.f32 %v1110, %v5104
        %v5724 = vmul.f32 %v1112, %v5107
        %v5725 = vmul.f32 %v1115, %v5110
        %v5726 = vmul.f32 %v1117, %v5113
        %v5727 = vmul.f32 %v1120, %v5116
        %v5728 = vmul.f32 %v1122, %v5119
        %v5729 = vmul.f32 %v1125, %v5122
        %v5730 = vmul.f32 %v1127, %v5125
        %v5731 = vmul.f32 %v1130, %v5128
        %v5732 = vmul.f32 %v1132, %v5131
        %v5733 = vmul.f32 %v1135, %v5134
        %v5734 = vmul.f32 %v1137, %v5137
        %v5735 = vmul.f32 %v1140, %v5140
        %v5736 = vmul.f32 %v1142, %v5143
        %v5737 = vmul.f32 %v1145, %v5146
        %v5738 = vmul.f32 %v1147, %v5149
        %v5739 = vmul.f32 %v1150, %v5152
        %v5740 = vmul.f32 %v1152, %v5155
        %v5741 = vmul.f32 %v1155, %v5158
        %v5742 = vmul.f32 %v1157, %v5161
        %v5743 = vmul.f32 %v1160, %v5164
        %v5744 = vmul.f32 %v1162, %v5167
        %v5745 = vmul.f32 %v1165, %v5170
        %v5746 = vmul.f32 %v1167, %v5173
        %v5747 = vmul.f32 %v1170, %v5176
        %v5748 = vmul.f32 %v1172, %v5179
        %v5749 = vmul.f32 %v1175, %v5182
        %v5750 = vmul.f32 %v1177, %v5185
        %v5751 = vmul.f32 %v1180, %v5188
        %v5752 = vmul.f32 %v1182, %v5191
        %v5753 = vmul.f32 %v1185, %v5194
        %v5754 = vmul.f32 %v1187, %v5197
        %v5755 = vmul.f32 %v1190, %v5200
        %v5756 = vmul.f32 %v1192, %v5203
        %v5757 = vmul.f32 %v1195, %v5206
        %v5758 = vmul.f32 %v1197, %v5209
        %v5759 = vmul.f32 %v1200, %v5212
        %v5760 = vmul.f32 %v1202, %v5215
        %v5761 = vmul.f32 %v1205, %v5218
        %v5762 = vmul.f32 %v1207, %v5221
        %v5763 = vmul.f32 %v1210, %v5224
        %v5764 = vmul.f32 %v1212, %v5227
        %v5765 = vmul.f32 %v1215, %v5230
        %v5766 = vmul.f32 %v1217, %v5233
        %v5767 = vmul.f32 %v1220, %v5236
        %v5768 = vmul.f32 %v1222, %v5239
        %v5769 = vmul.f32 %v1225, %v5242
        %v5770 = vmul.f32 %v1227, %v5245
        %v5771 = vmul.f32 %v1230, %v5248
        %v5772 = vmul.f32 %v1232, %v5251
        %v5773 = vmul.f32 %v1235, %v5254
        %v5774 = vmul.f32 %v1237, %v5257
        %v5775 = vmul.f32 %v1240, %v5260
        %v5776 = vmul.f32 %v1242, %v5263
        %v5777 = vsub.f32 %v5649, %v5266
        %v5778 = vsub.f32 %v5650, %v5269
        %v5779 = vsub.f32 %v5651, %v5272
        %v5780 = vsub.f32 %v5652, %v5275
        %v5781 = vsub.f32 %v5653, %v5278
        %v5782 = vsub.f32 %v5654, %v5281
        %v5783 = vsub.f32 %v5655, %v5284
        %v5784 = vsub.f32 %v5656, %v5287
        %v5785 = vsub.f32 %v5657, %v5290
        %v5786 = vsub.f32 %v5658, %v5293
        %v5787 = vsub.f32 %v5659, %v5296
        %v5788 = vsub.f32 %v5660, %v5299
        %v5789 = vsub.f32 %v5661, %v5302
        %v5790 = vsub.f32 %v5662, %v5305
        %v5791 = vsub.f32 %v5663, %v5308
        %v5792 = vsub.f32 %v5664, %v5311
        %v5793 = vsub.f32 %v5665, %v5314
        %v5794 = vsub.f32 %v5666, %v5317
        %v5795 = vsub.f32 %v5667, %v5320
        %v5796 = vsub.f32 %v5668, %v5323
        %v5797 = vsub.f32 %v5669, %v5326
        %v5798 = vsub.f32 %v5670, %v5329
        %v5799 = vsub.f32 %v5671, %v5332
        %v5800 = vsub.f32 %v5672, %v5335
        %v5801 = vsub.f32 %v5673, %v5338
        %v5802 = vsub.f32 %v5674, %v5341
        %v5803 = vsub.f32 %v5675, %v5344
        %v5804 = vsub.f32 %v5676, %v5347
        %v5805 = vsub.f32 %v5677, %v5350
        %v5806 = vsub.f32 %v5678, %v5353
        %v5807 = vsub.f32 %v5679, %v5356
        %v5808 = vsub.f32 %v5680, %v5359
        %v5809 = vsub.f32 %v5681, %v5362
        %v5810 = vsub.f32 %v5682, %v5365
        %v5811 = vsub.f32 %v5683, %v5368
        %v5812 = vsub.f32 %v5684, %v5371
        %v5813 = vsub.f32 %v5685, %v5374
        %v5814 = vsub.f32 %v5686, %v5377
        %v5815 = vsub.f32 %v5687, %v5380
        %v5816 = vsub.f32 %v5688, %v5383
        %v5817 = vsub.f32 %v5689, %v5386
        %v5818 = vsub.f32 %v5690, %v5389
        %v5819 = vsub.f32 %v5691, %v5392
        %v5820 = vsub.f32 %v5692, %v5395
        %v5821 = vsub.f32 %v5693, %v5398
        %v5822 = vsub.f32 %v5694, %v5401
        %v5823 = vsub.f32 %v5695, %v5404
        %v5824 = vsub.f32 %v5696, %v5407
        %v5825 = vsub.f32 %v5697, %v5410
        %v5826 = vsub.f32 %v5698, %v5413
        %v5827 = vsub.f32 %v5699, %v5416
        %v5828 = vsub.f32 %v5700, %v5419
        %v5829 = vsub.f32 %v5701, %v5422
        %v5830 = vsub.f32 %v5702, %v5425
        %v5831 = vsub.f32 %v5703, %v5428
        %v5832 = vsub.f32 %v5704, %v5431
        %v5833 = vsub.f32 %v5705, %v5434
        %v5834 = vsub.f32 %v5706, %v5437
        %v5835 = vsub.f32 %v5707, %v5440
        %v5836 = vsub.f32 %v5708, %v5443
        %v5837 = vsub.f32 %v5709, %v5446
        %v5838 = vsub.f32 %v5710, %v5449
        %v5839 = vsub.f32 %v5711, %v5452
        %v5840 = vsub.f32 %v5712, %v5455
        %v5841 = vsub.f32 %v5713, %v5458
        %v5842 = vsub.f32 %v5714, %v5461
        %v5843 = vsub.f32 %v5715, %v5464
        %v5844 = vsub.f32 %v5716, %v5467
        %v5845 = vsub.f32 %v5717, %v5470
        %v5846 = vsub.f32 %v5718, %v5473
        %v5847 = vsub.f32 %v5719, %v5476
        %v5848 = vsub.f32 %v5720, %v5479
        %v5849 = vsub.f32 %v5721, %v5482
        %v5850 = vsub.f32 %v5722, %v5485
        %v5851 = vsub.f32 %v5723, %v5488
        %v5852 = vsub.f32 %v5724, %v5491
        %v5853 = vsub.f32 %v5725, %v5494
        %v5854 = vsub.f32 %v5726, %v5497
        %v5855 = vsub.f32 %v5727, %v5500
        %v5856 = vsub.f32 %v5728, %v5503
        %v5857 = vsub.f32 %v5729, %v5506
        %v5858 = vsub.f32 %v5730, %v5509
        %v5859 = vsub.f32 %v5731, %v5512
        %v5860 = vsub.f32 %v5732, %v5515
        %v5861 = vsub.f32 %v5733, %v5518
        %v5862 = vsub.f32 %v5734, %v5521
        %v5863 = vsub.f32 %v5735, %v5524
        %v5864 = vsub.f32 %v5736, %v5527
        %v5865 = vsub.f32 %v5737, %v5530
        %v5866 = vsub.f32 %v5738, %v5533
        %v5867 = vsub.f32 %v5739, %v5536
        %v5868 = vsub.f32 %v5740, %v5539
        %v5869 = vsub.f32 %v5741, %v5542
        %v5870 = vsub.f32 %v5742, %v5545
        %v5871 = vsub.f32 %v5743, %v5548
        %v5872 = vsub.f32 %v5744, %v5551
        %v5873 = vsub.f32 %v5745, %v5554
        %v5874 = vsub.f32 %v5746, %v5557
        %v5875 = vsub.f32 %v5747, %v5560
        %v5876 = vsub.f32 %v5748, %v5563
        %v5877 = vsub.f32 %v5749, %v5566
        %v5878 = vsub.f32 %v5750, %v5569
        %v5879 = vsub.f32 %v5751, %v5572
        %v5880 = vsub.f32 %v5752, %v5575
        %v5881 = vsub.f32 %v5753, %v5578
        %v5882 = vsub.f32 %v5754, %v5581
        %v5883 = vsub.f32 %v5755, %v5584
        %v5884 = vsub.f32 %v5756, %v5587
        %v5885 = vsub.f32 %v5757, %v5590
        %v5886 = vsub.f32 %v5758, %v5593
        %v5887 = vsub.f32 %v5759, %v5596
        %v5888 = vsub.f32 %v5760, %v5599
        %v5889 = vsub.f32 %v5761, %v5602
        %v5890 = vsub.f32 %v5762, %v5605
        %v5891 = vsub.f32 %v5763, %v5608
        %v5892 = vsub.f32 %v5764, %v5611
        %v5893 = vsub.f32 %v5765, %v5614
        %v5894 = vsub.f32 %v5766, %v5617
        %v5895 = vsub.f32 %v5767, %v5620
        %v5896 = vsub.f32 %v5768, %v5623
        %v5897 = vsub.f32 %v5769, %v5626
        %v5898 = vsub.f32 %v5770, %v5629
        %v5899 = vsub.f32 %v5771, %v5632
        %v5900 = vsub.f32 %v5772, %v5635
        %v5901 = vsub.f32 %v5773, %v5638
        %v5902 = vsub.f32 %v5774, %v5641
        %v5903 = vsub.f32 %v5775, %v5644
        %v5904 = vsub.f32 %v5776, %v5647
        %v5905 = vld [vmem:[%s3] sm:$0x1]
        %v5907 = vperm.slane %v5905, 0
        %v5909 = vadd.f32 %v5777, %v5907
        %v5910 = vadd.f32 %v5778, %v5907
        %v5911 = vadd.f32 %v5779, %v5907
        %v5912 = vadd.f32 %v5780, %v5907
        %v5913 = vadd.f32 %v5781, %v5907
        %v5914 = vadd.f32 %v5782, %v5907
        %v5915 = vadd.f32 %v5783, %v5907
        %v5916 = vadd.f32 %v5784, %v5907
        %v5917 = vadd.f32 %v5785, %v5907
        %v5918 = vadd.f32 %v5786, %v5907
        %v5919 = vadd.f32 %v5787, %v5907
        %v5920 = vadd.f32 %v5788, %v5907
        %v5921 = vadd.f32 %v5789, %v5907
        %v5922 = vadd.f32 %v5790, %v5907
        %v5923 = vadd.f32 %v5791, %v5907
        %v5924 = vadd.f32 %v5792, %v5907
        %v5925 = vadd.f32 %v5793, %v5907
        %v5926 = vadd.f32 %v5794, %v5907
        %v5927 = vadd.f32 %v5795, %v5907
        %v5928 = vadd.f32 %v5796, %v5907
        %v5929 = vadd.f32 %v5797, %v5907
        %v5930 = vadd.f32 %v5798, %v5907
        %v5931 = vadd.f32 %v5799, %v5907
        %v5932 = vadd.f32 %v5800, %v5907
        %v5933 = vadd.f32 %v5801, %v5907
        %v5934 = vadd.f32 %v5802, %v5907
        %v5935 = vadd.f32 %v5803, %v5907
        %v5936 = vadd.f32 %v5804, %v5907
        %v5937 = vadd.f32 %v5805, %v5907
        %v5938 = vadd.f32 %v5806, %v5907
        %v5939 = vadd.f32 %v5807, %v5907
        %v5940 = vadd.f32 %v5808, %v5907
        %v5941 = vadd.f32 %v5809, %v5907
        %v5942 = vadd.f32 %v5810, %v5907
        %v5943 = vadd.f32 %v5811, %v5907
        %v5944 = vadd.f32 %v5812, %v5907
        %v5945 = vadd.f32 %v5813, %v5907
        %v5946 = vadd.f32 %v5814, %v5907
        %v5947 = vadd.f32 %v5815, %v5907
        %v5948 = vadd.f32 %v5816, %v5907
        %v5949 = vadd.f32 %v5817, %v5907
        %v5950 = vadd.f32 %v5818, %v5907
        %v5951 = vadd.f32 %v5819, %v5907
        %v5952 = vadd.f32 %v5820, %v5907
        %v5953 = vadd.f32 %v5821, %v5907
        %v5954 = vadd.f32 %v5822, %v5907
        %v5955 = vadd.f32 %v5823, %v5907
        %v5956 = vadd.f32 %v5824, %v5907
        %v5957 = vadd.f32 %v5825, %v5907
        %v5958 = vadd.f32 %v5826, %v5907
        %v5959 = vadd.f32 %v5827, %v5907
        %v5960 = vadd.f32 %v5828, %v5907
        %v5961 = vadd.f32 %v5829, %v5907
        %v5962 = vadd.f32 %v5830, %v5907
        %v5963 = vadd.f32 %v5831, %v5907
        %v5964 = vadd.f32 %v5832, %v5907
        %v5965 = vadd.f32 %v5833, %v5907
        %v5966 = vadd.f32 %v5834, %v5907
        %v5967 = vadd.f32 %v5835, %v5907
        %v5968 = vadd.f32 %v5836, %v5907
        %v5969 = vadd.f32 %v5837, %v5907
        %v5970 = vadd.f32 %v5838, %v5907
        %v5971 = vadd.f32 %v5839, %v5907
        %v5972 = vadd.f32 %v5840, %v5907
        %v5973 = vadd.f32 %v5841, %v5907
        %v5974 = vadd.f32 %v5842, %v5907
        %v5975 = vadd.f32 %v5843, %v5907
        %v5976 = vadd.f32 %v5844, %v5907
        %v5977 = vadd.f32 %v5845, %v5907
        %v5978 = vadd.f32 %v5846, %v5907
        %v5979 = vadd.f32 %v5847, %v5907
        %v5980 = vadd.f32 %v5848, %v5907
        %v5981 = vadd.f32 %v5849, %v5907
        %v5982 = vadd.f32 %v5850, %v5907
        %v5983 = vadd.f32 %v5851, %v5907
        %v5984 = vadd.f32 %v5852, %v5907
        %v5985 = vadd.f32 %v5853, %v5907
        %v5986 = vadd.f32 %v5854, %v5907
        %v5987 = vadd.f32 %v5855, %v5907
        %v5988 = vadd.f32 %v5856, %v5907
        %v5989 = vadd.f32 %v5857, %v5907
        %v5990 = vadd.f32 %v5858, %v5907
        %v5991 = vadd.f32 %v5859, %v5907
        %v5992 = vadd.f32 %v5860, %v5907
        %v5993 = vadd.f32 %v5861, %v5907
        %v5994 = vadd.f32 %v5862, %v5907
        %v5995 = vadd.f32 %v5863, %v5907
        %v5996 = vadd.f32 %v5864, %v5907
        %v5997 = vadd.f32 %v5865, %v5907
        %v5998 = vadd.f32 %v5866, %v5907
        %v5999 = vadd.f32 %v5867, %v5907
        %v6000 = vadd.f32 %v5868, %v5907
        %v6001 = vadd.f32 %v5869, %v5907
        %v6002 = vadd.f32 %v5870, %v5907
        %v6003 = vadd.f32 %v5871, %v5907
        %v6004 = vadd.f32 %v5872, %v5907
        %v6005 = vadd.f32 %v5873, %v5907
        %v6006 = vadd.f32 %v5874, %v5907
        %v6007 = vadd.f32 %v5875, %v5907
        %v6008 = vadd.f32 %v5876, %v5907
        %v6009 = vadd.f32 %v5877, %v5907
        %v6010 = vadd.f32 %v5878, %v5907
        %v6011 = vadd.f32 %v5879, %v5907
        %v6012 = vadd.f32 %v5880, %v5907
        %v6013 = vadd.f32 %v5881, %v5907
        %v6014 = vadd.f32 %v5882, %v5907
        %v6015 = vadd.f32 %v5883, %v5907
        %v6016 = vadd.f32 %v5884, %v5907
        %v6017 = vadd.f32 %v5885, %v5907
        %v6018 = vadd.f32 %v5886, %v5907
        %v6019 = vadd.f32 %v5887, %v5907
        %v6020 = vadd.f32 %v5888, %v5907
        %v6021 = vadd.f32 %v5889, %v5907
        %v6022 = vadd.f32 %v5890, %v5907
        %v6023 = vadd.f32 %v5891, %v5907
        %v6024 = vadd.f32 %v5892, %v5907
        %v6025 = vadd.f32 %v5893, %v5907
        %v6026 = vadd.f32 %v5894, %v5907
        %v6027 = vadd.f32 %v5895, %v5907
        %v6028 = vadd.f32 %v5896, %v5907
        %v6029 = vadd.f32 %v5897, %v5907
        %v6030 = vadd.f32 %v5898, %v5907
        %v6031 = vadd.f32 %v5899, %v5907
        %v6032 = vadd.f32 %v5900, %v5907
        %v6033 = vadd.f32 %v5901, %v5907
        %v6034 = vadd.f32 %v5902, %v5907
        %v6035 = vadd.f32 %v5903, %v5907
        %v6036 = vadd.f32 %v5904, %v5907
        %v6037 = vpack.c.bf16 %v5909, %v5909
        %v6038 = vpack.c.bf16 %v5910, %v5910
        %v6039 = vpack.c.bf16 %v5911, %v5911
        %v6040 = vpack.c.bf16 %v5912, %v5912
        %v6041 = vpack.c.bf16 %v5913, %v5913
        %v6042 = vpack.c.bf16 %v5914, %v5914
        %v6043 = vpack.c.bf16 %v5915, %v5915
        %v6044 = vpack.c.bf16 %v5916, %v5916
        %v6045 = vpack.c.bf16 %v5917, %v5917
        %v6046 = vpack.c.bf16 %v5918, %v5918
        %v6047 = vpack.c.bf16 %v5919, %v5919
        %v6048 = vpack.c.bf16 %v5920, %v5920
        %v6049 = vpack.c.bf16 %v5921, %v5921
        %v6050 = vpack.c.bf16 %v5922, %v5922
        %v6051 = vpack.c.bf16 %v5923, %v5923
        %v6052 = vpack.c.bf16 %v5924, %v5924
        %v6053 = vpack.c.bf16 %v5925, %v5925
        %v6054 = vpack.c.bf16 %v5926, %v5926
        %v6055 = vpack.c.bf16 %v5927, %v5927
        %v6056 = vpack.c.bf16 %v5928, %v5928
        %v6057 = vpack.c.bf16 %v5929, %v5929
        %v6058 = vpack.c.bf16 %v5930, %v5930
        %v6059 = vpack.c.bf16 %v5931, %v5931
        %v6060 = vpack.c.bf16 %v5932, %v5932
        %v6061 = vpack.c.bf16 %v5933, %v5933
        %v6062 = vpack.c.bf16 %v5934, %v5934
        %v6063 = vpack.c.bf16 %v5935, %v5935
        %v6064 = vpack.c.bf16 %v5936, %v5936
        %v6065 = vpack.c.bf16 %v5937, %v5937
        %v6066 = vpack.c.bf16 %v5938, %v5938
        %v6067 = vpack.c.bf16 %v5939, %v5939
        %v6068 = vpack.c.bf16 %v5940, %v5940
        %v6069 = vpack.c.bf16 %v5941, %v5941
        %v6070 = vpack.c.bf16 %v5942, %v5942
        %v6071 = vpack.c.bf16 %v5943, %v5943
        %v6072 = vpack.c.bf16 %v5944, %v5944
        %v6073 = vpack.c.bf16 %v5945, %v5945
        %v6074 = vpack.c.bf16 %v5946, %v5946
        %v6075 = vpack.c.bf16 %v5947, %v5947
        %v6076 = vpack.c.bf16 %v5948, %v5948
        %v6077 = vpack.c.bf16 %v5949, %v5949
        %v6078 = vpack.c.bf16 %v5950, %v5950
        %v6079 = vpack.c.bf16 %v5951, %v5951
        %v6080 = vpack.c.bf16 %v5952, %v5952
        %v6081 = vpack.c.bf16 %v5953, %v5953
        %v6082 = vpack.c.bf16 %v5954, %v5954
        %v6083 = vpack.c.bf16 %v5955, %v5955
        %v6084 = vpack.c.bf16 %v5956, %v5956
        %v6085 = vpack.c.bf16 %v5957, %v5957
        %v6086 = vpack.c.bf16 %v5958, %v5958
        %v6087 = vpack.c.bf16 %v5959, %v5959
        %v6088 = vpack.c.bf16 %v5960, %v5960
        %v6089 = vpack.c.bf16 %v5961, %v5961
        %v6090 = vpack.c.bf16 %v5962, %v5962
        %v6091 = vpack.c.bf16 %v5963, %v5963
        %v6092 = vpack.c.bf16 %v5964, %v5964
        %v6093 = vpack.c.bf16 %v5965, %v5965
        %v6094 = vpack.c.bf16 %v5966, %v5966
        %v6095 = vpack.c.bf16 %v5967, %v5967
        %v6096 = vpack.c.bf16 %v5968, %v5968
        %v6097 = vpack.c.bf16 %v5969, %v5969
        %v6098 = vpack.c.bf16 %v5970, %v5970
        %v6099 = vpack.c.bf16 %v5971, %v5971
        %v6100 = vpack.c.bf16 %v5972, %v5972
        %v6101 = vpack.c.bf16 %v5973, %v5973
        %v6102 = vpack.c.bf16 %v5974, %v5974
        %v6103 = vpack.c.bf16 %v5975, %v5975
        %v6104 = vpack.c.bf16 %v5976, %v5976
        %v6105 = vpack.c.bf16 %v5977, %v5977
        %v6106 = vpack.c.bf16 %v5978, %v5978
        %v6107 = vpack.c.bf16 %v5979, %v5979
        %v6108 = vpack.c.bf16 %v5980, %v5980
        %v6109 = vpack.c.bf16 %v5981, %v5981
        %v6110 = vpack.c.bf16 %v5982, %v5982
        %v6111 = vpack.c.bf16 %v5983, %v5983
        %v6112 = vpack.c.bf16 %v5984, %v5984
        %v6113 = vpack.c.bf16 %v5985, %v5985
        %v6114 = vpack.c.bf16 %v5986, %v5986
        %v6115 = vpack.c.bf16 %v5987, %v5987
        %v6116 = vpack.c.bf16 %v5988, %v5988
        %v6117 = vpack.c.bf16 %v5989, %v5989
        %v6118 = vpack.c.bf16 %v5990, %v5990
        %v6119 = vpack.c.bf16 %v5991, %v5991
        %v6120 = vpack.c.bf16 %v5992, %v5992
        %v6121 = vpack.c.bf16 %v5993, %v5993
        %v6122 = vpack.c.bf16 %v5994, %v5994
        %v6123 = vpack.c.bf16 %v5995, %v5995
        %v6124 = vpack.c.bf16 %v5996, %v5996
        %v6125 = vpack.c.bf16 %v5997, %v5997
        %v6126 = vpack.c.bf16 %v5998, %v5998
        %v6127 = vpack.c.bf16 %v5999, %v5999
        %v6128 = vpack.c.bf16 %v6000, %v6000
        %v6129 = vpack.c.bf16 %v6001, %v6001
        %v6130 = vpack.c.bf16 %v6002, %v6002
        %v6131 = vpack.c.bf16 %v6003, %v6003
        %v6132 = vpack.c.bf16 %v6004, %v6004
        %v6133 = vpack.c.bf16 %v6005, %v6005
        %v6134 = vpack.c.bf16 %v6006, %v6006
        %v6135 = vpack.c.bf16 %v6007, %v6007
        %v6136 = vpack.c.bf16 %v6008, %v6008
        %v6137 = vpack.c.bf16 %v6009, %v6009
        %v6138 = vpack.c.bf16 %v6010, %v6010
        %v6139 = vpack.c.bf16 %v6011, %v6011
        %v6140 = vpack.c.bf16 %v6012, %v6012
        %v6141 = vpack.c.bf16 %v6013, %v6013
        %v6142 = vpack.c.bf16 %v6014, %v6014
        %v6143 = vpack.c.bf16 %v6015, %v6015
        %v6144 = vpack.c.bf16 %v6016, %v6016
        %v6145 = vpack.c.bf16 %v6017, %v6017
        %v6146 = vpack.c.bf16 %v6018, %v6018
        %v6147 = vpack.c.bf16 %v6019, %v6019
        %v6148 = vpack.c.bf16 %v6020, %v6020
        %v6149 = vpack.c.bf16 %v6021, %v6021
        %v6150 = vpack.c.bf16 %v6022, %v6022
        %v6151 = vpack.c.bf16 %v6023, %v6023
        %v6152 = vpack.c.bf16 %v6024, %v6024
        %v6153 = vpack.c.bf16 %v6025, %v6025
        %v6154 = vpack.c.bf16 %v6026, %v6026
        %v6155 = vpack.c.bf16 %v6027, %v6027
        %v6156 = vpack.c.bf16 %v6028, %v6028
        %v6157 = vpack.c.bf16 %v6029, %v6029
        %v6158 = vpack.c.bf16 %v6030, %v6030
        %v6159 = vpack.c.bf16 %v6031, %v6031
        %v6160 = vpack.c.bf16 %v6032, %v6032
        %v6161 = vpack.c.bf16 %v6033, %v6033
        %v6162 = vpack.c.bf16 %v6034, %v6034
        %v6163 = vpack.c.bf16 %v6035, %v6035
        %v6164 = vpack.c.bf16 %v6036, %v6036
        %6165 = vst [vmem:[%s245] sm:$0xf] %v6037
        %6166 = vst [vmem:[%s245 + $0x4] sm:$0xf] %v6038
        %6167 = vst [vmem:[%s245 + $0x8] sm:$0xf] %v6039
        %6168 = vst [vmem:[%s245 + $0xc] sm:$0xf] %v6040
        %6169 = vst [vmem:[%s245 + $0x10] sm:$0xf] %v6041
        %6170 = vst [vmem:[%s245 + $0x14] sm:$0xf] %v6042
        %6171 = vst [vmem:[%s245 + $0x18] sm:$0xf] %v6043
        %6172 = vst [vmem:[%s245 + $0x1c] sm:$0xf] %v6044
        %6173 = vst [vmem:[%s245 + $0x20] sm:$0xf] %v6045
        %6174 = vst [vmem:[%s245 + $0x24] sm:$0xf] %v6046
        %6175 = vst [vmem:[%s245 + $0x28] sm:$0xf] %v6047
        %6176 = vst [vmem:[%s245 + $0x2c] sm:$0xf] %v6048
        %6177 = vst [vmem:[%s245 + $0x30] sm:$0xf] %v6049
        %6178 = vst [vmem:[%s245 + $0x34] sm:$0xf] %v6050
        %6179 = vst [vmem:[%s245 + $0x38] sm:$0xf] %v6051
        %6180 = vst [vmem:[%s245 + $0x3c] sm:$0xf] %v6052
        %6181 = vst [vmem:[%s245 + $0x40] sm:$0xf] %v6053
        %6182 = vst [vmem:[%s245 + $0x44] sm:$0xf] %v6054
        %6183 = vst [vmem:[%s245 + $0x48] sm:$0xf] %v6055
        %6184 = vst [vmem:[%s245 + $0x4c] sm:$0xf] %v6056
        %6185 = vst [vmem:[%s245 + $0x50] sm:$0xf] %v6057
        %6186 = vst [vmem:[%s245 + $0x54] sm:$0xf] %v6058
        %6187 = vst [vmem:[%s245 + $0x58] sm:$0xf] %v6059
        %6188 = vst [vmem:[%s245 + $0x5c] sm:$0xf] %v6060
        %6189 = vst [vmem:[%s245 + $0x60] sm:$0xf] %v6061
        %6190 = vst [vmem:[%s245 + $0x64] sm:$0xf] %v6062
        %6191 = vst [vmem:[%s245 + $0x68] sm:$0xf] %v6063
        %6192 = vst [vmem:[%s245 + $0x6c] sm:$0xf] %v6064
        %6193 = vst [vmem:[%s245 + $0x70] sm:$0xf] %v6065
        %6194 = vst [vmem:[%s245 + $0x74] sm:$0xf] %v6066
        %6195 = vst [vmem:[%s245 + $0x78] sm:$0xf] %v6067
        %6196 = vst [vmem:[%s245 + $0x7c] sm:$0xf] %v6068
        %6197 = vst [vmem:[%s245 + $0x80] sm:$0xf] %v6069
        %6198 = vst [vmem:[%s245 + $0x84] sm:$0xf] %v6070
        %6199 = vst [vmem:[%s245 + $0x88] sm:$0xf] %v6071
        %6200 = vst [vmem:[%s245 + $0x8c] sm:$0xf] %v6072
        %6201 = vst [vmem:[%s245 + $0x90] sm:$0xf] %v6073
        %6202 = vst [vmem:[%s245 + $0x94] sm:$0xf] %v6074
        %6203 = vst [vmem:[%s245 + $0x98] sm:$0xf] %v6075
        %6204 = vst [vmem:[%s245 + $0x9c] sm:$0xf] %v6076
        %6205 = vst [vmem:[%s245 + $0xa0] sm:$0xf] %v6077
        %6206 = vst [vmem:[%s245 + $0xa4] sm:$0xf] %v6078
        %6207 = vst [vmem:[%s245 + $0xa8] sm:$0xf] %v6079
        %6208 = vst [vmem:[%s245 + $0xac] sm:$0xf] %v6080
        %6209 = vst [vmem:[%s245 + $0xb0] sm:$0xf] %v6081
        %6210 = vst [vmem:[%s245 + $0xb4] sm:$0xf] %v6082
        %6211 = vst [vmem:[%s245 + $0xb8] sm:$0xf] %v6083
        %6212 = vst [vmem:[%s245 + $0xbc] sm:$0xf] %v6084
        %6213 = vst [vmem:[%s245 + $0xc0] sm:$0xf] %v6085
        %6214 = vst [vmem:[%s245 + $0xc4] sm:$0xf] %v6086
        %6215 = vst [vmem:[%s245 + $0xc8] sm:$0xf] %v6087
        %6216 = vst [vmem:[%s245 + $0xcc] sm:$0xf] %v6088
        %6217 = vst [vmem:[%s245 + $0xd0] sm:$0xf] %v6089
        %6218 = vst [vmem:[%s245 + $0xd4] sm:$0xf] %v6090
        %6219 = vst [vmem:[%s245 + $0xd8] sm:$0xf] %v6091
        %6220 = vst [vmem:[%s245 + $0xdc] sm:$0xf] %v6092
        %6221 = vst [vmem:[%s245 + $0xe0] sm:$0xf] %v6093
        %6222 = vst [vmem:[%s245 + $0xe4] sm:$0xf] %v6094
        %6223 = vst [vmem:[%s245 + $0xe8] sm:$0xf] %v6095
        %6224 = vst [vmem:[%s245 + $0xec] sm:$0xf] %v6096
        %6225 = vst [vmem:[%s245 + $0xf0] sm:$0xf] %v6097
        %6226 = vst [vmem:[%s245 + $0xf4] sm:$0xf] %v6098
        %6227 = vst [vmem:[%s245 + $0xf8] sm:$0xf] %v6099
        %6228 = vst [vmem:[%s245 + $0xfc] sm:$0xf] %v6100
        %6229 = vst [vmem:[%s245 + $0x100] sm:$0xf] %v6101
        %6230 = vst [vmem:[%s245 + $0x104] sm:$0xf] %v6102
        %6231 = vst [vmem:[%s245 + $0x108] sm:$0xf] %v6103
        %6232 = vst [vmem:[%s245 + $0x10c] sm:$0xf] %v6104
        %6233 = vst [vmem:[%s245 + $0x110] sm:$0xf] %v6105
        %6234 = vst [vmem:[%s245 + $0x114] sm:$0xf] %v6106
        %6235 = vst [vmem:[%s245 + $0x118] sm:$0xf] %v6107
        %6236 = vst [vmem:[%s245 + $0x11c] sm:$0xf] %v6108
        %6237 = vst [vmem:[%s245 + $0x120] sm:$0xf] %v6109
        %6238 = vst [vmem:[%s245 + $0x124] sm:$0xf] %v6110
        %6239 = vst [vmem:[%s245 + $0x128] sm:$0xf] %v6111
        %6240 = vst [vmem:[%s245 + $0x12c] sm:$0xf] %v6112
        %6241 = vst [vmem:[%s245 + $0x130] sm:$0xf] %v6113
        %6242 = vst [vmem:[%s245 + $0x134] sm:$0xf] %v6114
        %6243 = vst [vmem:[%s245 + $0x138] sm:$0xf] %v6115
        %6244 = vst [vmem:[%s245 + $0x13c] sm:$0xf] %v6116
        %6245 = vst [vmem:[%s245 + $0x140] sm:$0xf] %v6117
        %6246 = vst [vmem:[%s245 + $0x144] sm:$0xf] %v6118
        %6247 = vst [vmem:[%s245 + $0x148] sm:$0xf] %v6119
        %6248 = vst [vmem:[%s245 + $0x14c] sm:$0xf] %v6120
        %6249 = vst [vmem:[%s245 + $0x150] sm:$0xf] %v6121
        %6250 = vst [vmem:[%s245 + $0x154] sm:$0xf] %v6122
        %6251 = vst [vmem:[%s245 + $0x158] sm:$0xf] %v6123
        %6252 = vst [vmem:[%s245 + $0x15c] sm:$0xf] %v6124
        %6253 = vst [vmem:[%s245 + $0x160] sm:$0xf] %v6125
        %6254 = vst [vmem:[%s245 + $0x164] sm:$0xf] %v6126
        %6255 = vst [vmem:[%s245 + $0x168] sm:$0xf] %v6127
        %6256 = vst [vmem:[%s245 + $0x16c] sm:$0xf] %v6128
        %6257 = vst [vmem:[%s245 + $0x170] sm:$0xf] %v6129
        %6258 = vst [vmem:[%s245 + $0x174] sm:$0xf] %v6130
        %6259 = vst [vmem:[%s245 + $0x178] sm:$0xf] %v6131
        %6260 = vst [vmem:[%s245 + $0x17c] sm:$0xf] %v6132
        %6261 = vst [vmem:[%s245 + $0x180] sm:$0xf] %v6133
        %6262 = vst [vmem:[%s245 + $0x184] sm:$0xf] %v6134
        %6263 = vst [vmem:[%s245 + $0x188] sm:$0xf] %v6135
        %6264 = vst [vmem:[%s245 + $0x18c] sm:$0xf] %v6136
        %6265 = vst [vmem:[%s245 + $0x190] sm:$0xf] %v6137
        %6266 = vst [vmem:[%s245 + $0x194] sm:$0xf] %v6138
        %6267 = vst [vmem:[%s245 + $0x198] sm:$0xf] %v6139
        %6268 = vst [vmem:[%s245 + $0x19c] sm:$0xf] %v6140
        %6269 = vst [vmem:[%s245 + $0x1a0] sm:$0xf] %v6141
        %6270 = vst [vmem:[%s245 + $0x1a4] sm:$0xf] %v6142
        %6271 = vst [vmem:[%s245 + $0x1a8] sm:$0xf] %v6143
        %6272 = vst [vmem:[%s245 + $0x1ac] sm:$0xf] %v6144
        %6273 = vst [vmem:[%s245 + $0x1b0] sm:$0xf] %v6145
        %6274 = vst [vmem:[%s245 + $0x1b4] sm:$0xf] %v6146
        %6275 = vst [vmem:[%s245 + $0x1b8] sm:$0xf] %v6147
        %6276 = vst [vmem:[%s245 + $0x1bc] sm:$0xf] %v6148
        %6277 = vst [vmem:[%s245 + $0x1c0] sm:$0xf] %v6149
        %6278 = vst [vmem:[%s245 + $0x1c4] sm:$0xf] %v6150
        %6279 = vst [vmem:[%s245 + $0x1c8] sm:$0xf] %v6151
        %6280 = vst [vmem:[%s245 + $0x1cc] sm:$0xf] %v6152
        %6281 = vst [vmem:[%s245 + $0x1d0] sm:$0xf] %v6153
        %6282 = vst [vmem:[%s245 + $0x1d4] sm:$0xf] %v6154
        %6283 = vst [vmem:[%s245 + $0x1d8] sm:$0xf] %v6155
        %6284 = vst [vmem:[%s245 + $0x1dc] sm:$0xf] %v6156
        %6285 = vst [vmem:[%s245 + $0x1e0] sm:$0xf] %v6157
        %6286 = vst [vmem:[%s245 + $0x1e4] sm:$0xf] %v6158
        %6287 = vst [vmem:[%s245 + $0x1e8] sm:$0xf] %v6159
        %6288 = vst [vmem:[%s245 + $0x1ec] sm:$0xf] %v6160
        %6289 = vst [vmem:[%s245 + $0x1f0] sm:$0xf] %v6161
        %6290 = vst [vmem:[%s245 + $0x1f4] sm:$0xf] %v6162
        %6291 = vst [vmem:[%s245 + $0x1f8] sm:$0xf] %v6163
        %6292 = vst [vmem:[%s245 + $0x1fc] sm:$0xf] %v6164
        %s6293 = sand.u32 %s159, 1
        %s6294 = scalar_lea.sflag [#allocation3], %s6293
        %s6295 = sand.u32 %s159, 1
        %s6296 = smul.addr %s6295, 512
        %s6297 = scalar_lea.vmem [#allocation2], %s6296
        // Predicated region
        $region45: #{tpu_custom_call.1} parent=43 // pred_check
          %p6298 = pneg %p169
        $region46: #{tpu_custom_call.1} parent=43 // pred_check_branch
          %6300 = sbr.rel (%p6298) target = $region48
        $region47: #{tpu_custom_call.1} parent=43 // pred_region
          %s6301 = smul.u32 128, %s20
          %6303 = vsyncadd %s6294, 0
          %s6304 = smul.addr %s6301, 4
          %s6305 = scalar_lea.hbm %s6, %s6304
          %s6306 = sshll.u32 %s6297, 4
          %s6307 = int_to_ptr.vmem [resolvable:$true] %s6306
          %s6308 = sshll.u32 %s6305, 4
          %s6309 = int_to_ptr.hbm [resolvable:$true] %s6308
          %6314 = dma.vmem_to_hbm [thread:$0]  %s6307, 8192, %s6309, %s6294, 64, 64, 4
        $region48: #{tpu_custom_call.1} parent=43 // pred_fallthru
          _
      $region44: #{tpu_custom_call.1} parent=5 // pred_fallthru
        _
      %p6315 = scmp.le.s32.totalorder 2, %s15
      // Predicated region
      $region49: #{tpu_custom_call.1} parent=5 // pred_check
        %p6316 = pneg %p6315
      $region50: #{tpu_custom_call.1} parent=5 // pred_check_branch
        %6318 = sbr.rel (%p6316) target = $region52
      $region51: #{tpu_custom_call.1} parent=5 // pred_region
        %s6319 = ssub.s32 %s15, 2
        // Predicated region
        $region53: #{tpu_custom_call.1} parent=51 // pred_check
          %p6320 = pneg %p175
        $region54: #{tpu_custom_call.1} parent=51 // pred_check_branch
          %6322 = sbr.rel (%p6320) target = $region56
        $region55: #{tpu_custom_call.1} parent=51 // pred_region
          %s6323 = sand.u32 %s160, 1
          %s6324 = scalar_lea.sflag [#allocation3], %s6323
          %s6325 = sand.u32 %s160, 1
          %s6326 = smul.addr %s6325, 512
          %s6327 = scalar_lea.vmem [#allocation2], %s6326
          %6329 = dma.done %s6324, 8192
        $region56: #{tpu_custom_call.1} parent=51 // pred_fallthru
          _
      $region52: #{tpu_custom_call.1} parent=5 // pred_fallthru
        _
    $region6: #{tpu_custom_call.1} parent=1 // loop_footer
      %s19 = sadd.s32 1, %s15
    $region7: #{tpu_custom_call.1} parent=1 // loop_footer_branch
      %14 = sbr.rel target = $region3
    $region8: #{tpu_custom_call.1} parent=1 // loop_exit
      _
    %6330 = vsyncpa [#allocation3], 1
    %s6331 = scalar_lea.sflag [#allocation3], 1
    %6332 = vsyncpa %s6331, 1

</llo_original>
